<compile_context>
chip_gen: v7x
topology: tpu7x:2x2x1
jax: 0.10.0
libtpu: 0.0.40
codegen_flags: <defaults>
</compile_context>

<pallas_src>
import functools

import jax
import jax.numpy as jnp
from jax import lax
from jax.experimental import pallas as pl
from jax.experimental.pallas import tpu as pltpu

EPS = 1e-5
NEG_SLOPE = 0.2
LANE = 128
SUBLANE = 8


def _round_up(x, m):
    return (x + m - 1) // m * m


# ------------------------------ Pallas kernels ------------------------------ #

def _make_conv_bn_stats_kernel(kh, kw, wp, mrow):
    """Conv (as 16 resident-weight matmuls over in-VMEM phase slices) fused
    with the per-tile BatchNorm statistics for one batch element."""

    def kernel(x_ref, w_ref, mask_ref, y_ref, sum_ref, sumsq_ref):
        cout_pad = y_ref.shape[-1]
        acc = jnp.zeros((mrow, cout_pad), jnp.float32)
        # Unrolled static taps: each is a unit-stride, statically-offset slice
        # of the resident phase slab (no strided loads, no HBM refetch).
        for ki in range(kh):
            for kj in range(kw):
                p = (ki % 2) * 2 + (kj % 2)          # stride-2 phase
                off = (ki // 2) * wp + (kj // 2)     # row offset inside phase
                a = x_ref[0, p, pl.ds(off, mrow), :]             # (mrow, cin_pad) bf16
                acc = acc + jnp.dot(a, w_ref[ki, kj],
                                    preferred_element_type=jnp.float32)
        # Zero the junk rows (the Wp=Wout+1 helper column + sublane padding) so
        # they neither pollute the BN statistics nor produce NaNs downstream.
        acc = acc * mask_ref[...]
        y_ref[0] = acc.astype(y_ref.dtype)           # bf16 intermediate
        s = jnp.sum(acc, axis=0, keepdims=True)                  # (1, C)
        sq = jnp.sum(acc * acc, axis=0, keepdims=True)           # (1, C)
        # (8, C) sublane-aligned partial-stat blocks; the consumer divides by 8.
        sum_ref[...] = jnp.broadcast_to(s, sum_ref.shape)
        sumsq_ref[...] = jnp.broadcast_to(sq, sumsq_ref.shape)

    return kernel


def _make_bn_lrelu_kernel(inv_count):
    """Finish BatchNorm (reduce the partial sums, rsqrt, scale/shift) and apply
    LeakyReLU(0.2) to one batch element's bf16 conv output."""

    def kernel(y_ref, sum_ref, sumsq_ref, gamma_ref, beta_ref, o_ref):
        mean = jnp.sum(sum_ref[...], axis=0, keepdims=True) * inv_count
        ex2 = jnp.sum(sumsq_ref[...], axis=0, keepdims=True) * inv_count
        # TODO(synk): E[x^2]-E[x]^2 in f32 can cancel for huge batches; a
        # mean-shifted (Welford) combine would be safer for production sizes.
        var = jnp.maximum(ex2 - mean * mean, 0.0)
        inv_std = lax.rsqrt(var + EPS)
        scale = gamma_ref[...] * inv_std                         # (1, C)
        shift = beta_ref[...] - mean * scale                     # (1, C)
        z = y_ref[0].astype(jnp.float32) * scale + shift
        o_ref[0] = jnp.where(z >= 0, z, NEG_SLOPE * z)

    return kernel


# ------------------------------- host wrapper ------------------------------- #

@functools.partial(jax.jit, static_argnames=("stride", "kernel_size"))
def dcgan_conv_forward(x_nchw, conv_w_oihw, bn_gamma, bn_beta,
                       stride=2, kernel_size=4):
    """Forward pass of dcgan_conv.  Input/output layout: NCHW (PyTorch)."""
    if stride != 2 or kernel_size != 4:
        raise NotImplementedError("specialized to k=4, s=2, p=1 (module defaults)")
    n, cin, h, w = x_nchw.shape
    cout = conv_w_oihw.shape[0]
    assert h % 2 == 0 and w % 2 == 0, (h, w)
    kh = kw = kernel_size
    hout, wout = h // 2, w // 2
    hp, wp = hout + 1, wout + 1                    # phase-slab spatial extents

    cin_pad = _round_up(cin, SUBLANE)
    cout_pad = _round_up(cout, LANE)               # lane-dense output channels
    mrow = _round_up(hout * wp, SUBLANE)           # rows per tile (incl. junk col)
    flat = hp * wp
    flatp = _round_up(max(flat, wp + 1 + mrow), SUBLANE)

    # ---- host prep: pad + space-to-depth phase split (one XLA pass, bf16) ---- #
    x_nhwc = jnp.transpose(x_nchw, (0, 2, 3, 1)).astype(jnp.bfloat16)
    xp = jnp.pad(x_nhwc, ((0, 0), (1, 1), (1, 1), (0, cin_pad - cin)))
    # xp[n, 2*r+pr, 2*c+pc, :] -> xph[n, 2*pr+pc, r*wp+c, :]
    xph = xp.reshape(n, hp, 2, wp, 2, cin_pad).transpose(0, 2, 4, 1, 3, 5)
    xph = xph.reshape(n, 4, flat, cin_pad)
    xph = jnp.pad(xph, ((0, 0), (0, 0), (0, flatp - flat), (0, 0)))

    # Weights as (kh, kw, cin_pad, cout_pad) bf16, fully resident in VMEM.
    wt = jnp.transpose(conv_w_oihw, (2, 3, 1, 0)).astype(jnp.bfloat16)
    wt = jnp.pad(wt, ((0, 0), (0, 0), (0, cin_pad - cin), (0, cout_pad - cout)))

    # Validity mask over the mrow tile rows: row k = r*wp + c is a real output
    # position iff c < wout and r < hout.
    ridx = jnp.arange(mrow)
    mask = (((ridx % wp) < wout) & (ridx < hout * wp)).astype(jnp.float32)
    mask = mask.reshape(mrow, 1)

    gamma2d = jnp.pad(bn_gamma.astype(jnp.float32),
                      (0, cout_pad - cout)).reshape(1, cout_pad)
    beta2d = jnp.pad(bn_beta.astype(jnp.float32),
                     (0, cout_pad - cout)).reshape(1, cout_pad)

    conv_flops = 2 * n * kh * kw * mrow * cin_pad * cout_pad
    conv_bytes = (xph.size * 2 + wt.size * 2 + mask.size * 4
                  + n * mrow * cout_pad * 2 + 2 * n * SUBLANE * cout_pad * 4)

    y, psum, psumsq = pl.pallas_call(
        _make_conv_bn_stats_kernel(kh, kw, wp, mrow),
        out_shape=(
            jax.ShapeDtypeStruct((n, mrow, cout_pad), jnp.bfloat16),
            jax.ShapeDtypeStruct((n * SUBLANE, cout_pad), jnp.float32),
            jax.ShapeDtypeStruct((n * SUBLANE, cout_pad), jnp.float32),
        ),
        grid_spec=pltpu.PrefetchScalarGridSpec(
            num_scalar_prefetch=0,
            grid=(n,),
            in_specs=[
                pl.BlockSpec((1, 4, flatp, cin_pad), lambda b: (b, 0, 0, 0)),
                pl.BlockSpec((kh, kw, cin_pad, cout_pad), lambda b: (0, 0, 0, 0)),
                pl.BlockSpec((mrow, 1), lambda b: (0, 0)),
            ],
            out_specs=(
                pl.BlockSpec((1, mrow, cout_pad), lambda b: (b, 0, 0)),
                pl.BlockSpec((SUBLANE, cout_pad), lambda b: (b, 0)),
                pl.BlockSpec((SUBLANE, cout_pad), lambda b: (b, 0)),
            ),
        ),
        compiler_params=pltpu.CompilerParams(
            dimension_semantics=("parallel",)),
        cost_estimate=pl.CostEstimate(
            flops=conv_flops, transcendentals=0, bytes_accessed=conv_bytes),
    )(xph, wt, mask)

    # Valid positions = n*hout*wout; each partial-stat block repeats its row 8x.
    inv_count = 1.0 / (float(SUBLANE) * n * hout * wout)

    out_full = pl.pallas_call(
        _make_bn_lrelu_kernel(inv_count),
        out_shape=jax.ShapeDtypeStruct((n, mrow, cout_pad), jnp.float32),
        grid_spec=pltpu.PrefetchScalarGridSpec(
            num_scalar_prefetch=0,
            grid=(n,),
            in_specs=[
                pl.BlockSpec((1, mrow, cout_pad), lambda b: (b, 0, 0)),
                pl.BlockSpec((n * SUBLANE, cout_pad), lambda b: (0, 0)),
                pl.BlockSpec((n * SUBLANE, cout_pad), lambda b: (0, 0)),
                pl.BlockSpec((1, cout_pad), lambda b: (0, 0)),
                pl.BlockSpec((1, cout_pad), lambda b: (0, 0)),
            ],
            out_specs=pl.BlockSpec((1, mrow, cout_pad), lambda b: (b, 0, 0)),
        ),
        compiler_params=pltpu.CompilerParams(
            dimension_semantics=("parallel",)),
        cost_estimate=pl.CostEstimate(
            flops=6 * n * mrow * cout_pad, transcendentals=cout_pad,
            bytes_accessed=n * mrow * cout_pad * 6),
    )(y, psum, psumsq, gamma2d, beta2d)

    # Drop padded channels, junk rows and the helper column; back to NCHW.
    out = out_full[:, : hout * wp, :cout].reshape(n, hout, wp, cout)[:, :, :wout, :]
    return jnp.transpose(out, (0, 3, 1, 2))


# ------------------------------ reference (XLA) ------------------------------ #

def _reference(x_nchw, conv_w_oihw, gamma, beta, stride, kernel_size,
               quantize_bf16=False):
    x = x_nchw.astype(jnp.float32)
    w = conv_w_oihw.astype(jnp.float32)
    if quantize_bf16:
        x = x.astype(jnp.bfloat16).astype(jnp.float32)
        w = w.astype(jnp.bfloat16).astype(jnp.float32)
    conv = lax.conv_general_dilated(
        x, w, window_strides=(stride, stride), padding=((1, 1), (1, 1)),
        dimension_numbers=("NCHW", "OIHW", "NCHW"))
    mean = jnp.mean(conv, axis=(0, 2, 3), keepdims=True)
    var = jnp.mean((conv - mean) ** 2, axis=(0, 2, 3), keepdims=True)
    xn = (conv - mean) * lax.rsqrt(var + EPS)
    z = xn * gamma.reshape(1, -1, 1, 1) + beta.reshape(1, -1, 1, 1)
    return jnp.where(z >= 0, z, NEG_SLOPE * z)


# ----------------------------------- main ------------------------------------ #

if __name__ == "__main__":
    key = jax.random.PRNGKey(0)
    k_x, k_w, k_g = jax.random.split(key, 3)

    # Small shapes consistent with the module: nin=4 -> nout=8, 16x16 spatial.
    N, NIN, NOUT, H, W = 2, 4, 8, 16, 16
    KS, STRIDE = 4, 2

    x = jax.random.normal(k_x, (N, NIN, H, W), dtype=jnp.float32)

    # Deterministic init mirroring dcgan_conv.init_weights:
    #   Conv2d.weight ~ N(0, 0.02), BN.weight ~ N(1, 0.02), BN.bias = 0
    conv_w = 0.02 * jax.random.normal(k_w, (NOUT, NIN, KS, KS), dtype=jnp.float32)
    bn_gamma = 1.0 + 0.02 * jax.random.normal(k_g, (NOUT,), dtype=jnp.float32)
    bn_beta = jnp.zeros((NOUT,), dtype=jnp.float32)

    out = dcgan_conv_forward(x, conv_w, bn_gamma, bn_beta,
                             stride=STRIDE, kernel_size=KS)
    out = jax.block_until_ready(out)
    assert out.shape == (N, NOUT, H // 2, W // 2), out.shape

    # Check vs a reference with identically bf16-quantized conv inputs
    # (the kernel additionally keeps the conv intermediate in bf16).
    ref_bf16 = _reference(x, conv_w, bn_gamma, bn_beta, STRIDE, KS,
                          quantize_bf16=True)
    assert jnp.allclose(out, ref_bf16, rtol=1e-2, atol=1e-2), (
        float(jnp.max(jnp.abs(out - ref_bf16))))

    # Loose check vs the pure-f32 reference (bounds total bf16 precision loss).
    ref_f32 = _reference(x, conv_w, bn_gamma, bn_beta, STRIDE, KS)
    assert jnp.allclose(out, ref_f32, rtol=5e-2, atol=5e-2), (
        float(jnp.max(jnp.abs(out - ref_f32))))

    print("KERNEL_OK")
</pallas_src>

<mosaic_0001>
module attributes {stable_mosaic.version = 11 : i64} {
  func.func @kernel(%arg0: i32, %arg1: memref<1x4x88x8xbf16, #tpu.memory_space<vmem>>, %arg2: memref<4x4x8x128xbf16, #tpu.memory_space<vmem>>, %arg3: memref<72x1xf32, #tpu.memory_space<vmem>>, %arg4: memref<1x72x128xbf16, #tpu.memory_space<vmem>>, %arg5: memref<8x128xf32, #tpu.memory_space<vmem>>, %arg6: memref<8x128xf32, #tpu.memory_space<vmem>>) attributes {dimension_semantics = [#tpu.dimension_semantics<parallel>], iteration_bounds = array<i64: 2>, scalar_prefetch = 0 : i64, scratch_operands = 0 : i64, tpu.core_type = #tpu.core_type<tc>, window_params = [{transform_indices = @transform_0, window_bounds = array<i64: 1, 4, 88, 8>}, {pipeline_mode = #tpu.pipeline_mode<synchronous>, transform_indices = @transform_1, window_bounds = array<i64: 4, 4, 8, 128>}, {pipeline_mode = #tpu.pipeline_mode<synchronous>, transform_indices = @transform_2, window_bounds = array<i64: 72, 1>}, {transform_indices = @transform_3, window_bounds = array<i64: 1, 72, 128>}, {transform_indices = @transform_4, window_bounds = array<i64: 8, 128>}, {transform_indices = @transform_5, window_bounds = array<i64: 8, 128>}]} {
    %cst = arith.constant 0.000000e+00 : f32
    %0 = vector.broadcast %cst : f32 to vector<72x128xf32>
    %c0 = arith.constant 0 : index
    %c0_0 = arith.constant 0 : index
    %c0_1 = arith.constant 0 : index
    %c0_2 = arith.constant 0 : index
    %1 = vector.load %arg1[%c0, %c0_0, %c0_1, %c0_2] : memref<1x4x88x8xbf16, #tpu.memory_space<vmem>>, vector<1x1x72x8xbf16>
    %2 = vector.shape_cast %1 : vector<1x1x72x8xbf16> to vector<72x8xbf16>
    %c0_3 = arith.constant 0 : index
    %c0_4 = arith.constant 0 : index
    %c0_5 = arith.constant 0 : index
    %c0_6 = arith.constant 0 : index
    %3 = vector.load %arg2[%c0_3, %c0_4, %c0_5, %c0_6] : memref<4x4x8x128xbf16, #tpu.memory_space<vmem>>, vector<1x1x8x128xbf16>
    %4 = vector.shape_cast %3 : vector<1x1x8x128xbf16> to vector<8x128xbf16>
    %cst_7 = arith.constant dense<0.000000e+00> : vector<72x128xf32>
    %5 = tpu.matmul %2, %4, %cst_7 {dimension_numbers = #tpu.dot_dimension_numbers<[1], [0], [0], [1], [0, 0, 1, 1], [], []>} : vector<72x8xbf16>, vector<8x128xbf16>, vector<72x128xf32> -> vector<72x128xf32>
    %6 = arith.addf %0, %5 : vector<72x128xf32>
    %c0_8 = arith.constant 0 : index
    %c1 = arith.constant 1 : index
    %c0_9 = arith.constant 0 : index
    %c0_10 = arith.constant 0 : index
    %7 = vector.load %arg1[%c0_8, %c1, %c0_9, %c0_10] : memref<1x4x88x8xbf16, #tpu.memory_space<vmem>>, vector<1x1x72x8xbf16>
    %8 = vector.shape_cast %7 : vector<1x1x72x8xbf16> to vector<72x8xbf16>
    %c0_11 = arith.constant 0 : index
    %c1_12 = arith.constant 1 : index
    %c0_13 = arith.constant 0 : index
    %c0_14 = arith.constant 0 : index
    %9 = vector.load %arg2[%c0_11, %c1_12, %c0_13, %c0_14] : memref<4x4x8x128xbf16, #tpu.memory_space<vmem>>, vector<1x1x8x128xbf16>
    %10 = vector.shape_cast %9 : vector<1x1x8x128xbf16> to vector<8x128xbf16>
    %cst_15 = arith.constant dense<0.000000e+00> : vector<72x128xf32>
    %11 = tpu.matmul %8, %10, %cst_15 {dimension_numbers = #tpu.dot_dimension_numbers<[1], [0], [0], [1], [0, 0, 1, 1], [], []>} : vector<72x8xbf16>, vector<8x128xbf16>, vector<72x128xf32> -> vector<72x128xf32>
    %12 = arith.addf %6, %11 : vector<72x128xf32>
    %c0_16 = arith.constant 0 : index
    %c0_17 = arith.constant 0 : index
    %c1_18 = arith.constant 1 : index
    %c0_19 = arith.constant 0 : index
    %13 = vector.load %arg1[%c0_16, %c0_17, %c1_18, %c0_19] : memref<1x4x88x8xbf16, #tpu.memory_space<vmem>>, vector<1x1x72x8xbf16>
    %14 = vector.shape_cast %13 : vector<1x1x72x8xbf16> to vector<72x8xbf16>
    %c0_20 = arith.constant 0 : index
    %c2 = arith.constant 2 : index
    %c0_21 = arith.constant 0 : index
    %c0_22 = arith.constant 0 : index
    %15 = vector.load %arg2[%c0_20, %c2, %c0_21, %c0_22] : memref<4x4x8x128xbf16, #tpu.memory_space<vmem>>, vector<1x1x8x128xbf16>
    %16 = vector.shape_cast %15 : vector<1x1x8x128xbf16> to vector<8x128xbf16>
    %cst_23 = arith.constant dense<0.000000e+00> : vector<72x128xf32>
    %17 = tpu.matmul %14, %16, %cst_23 {dimension_numbers = #tpu.dot_dimension_numbers<[1], [0], [0], [1], [0, 0, 1, 1], [], []>} : vector<72x8xbf16>, vector<8x128xbf16>, vector<72x128xf32> -> vector<72x128xf32>
    %18 = arith.addf %12, %17 : vector<72x128xf32>
    %c0_24 = arith.constant 0 : index
    %c1_25 = arith.constant 1 : index
    %c1_26 = arith.constant 1 : index
    %c0_27 = arith.constant 0 : index
    %19 = vector.load %arg1[%c0_24, %c1_25, %c1_26, %c0_27] : memref<1x4x88x8xbf16, #tpu.memory_space<vmem>>, vector<1x1x72x8xbf16>
    %20 = vector.shape_cast %19 : vector<1x1x72x8xbf16> to vector<72x8xbf16>
    %c0_28 = arith.constant 0 : index
    %c3 = arith.constant 3 : index
    %c0_29 = arith.constant 0 : index
    %c0_30 = arith.constant 0 : index
    %21 = vector.load %arg2[%c0_28, %c3, %c0_29, %c0_30] : memref<4x4x8x128xbf16, #tpu.memory_space<vmem>>, vector<1x1x8x128xbf16>
    %22 = vector.shape_cast %21 : vector<1x1x8x128xbf16> to vector<8x128xbf16>
    %cst_31 = arith.constant dense<0.000000e+00> : vector<72x128xf32>
    %23 = tpu.matmul %20, %22, %cst_31 {dimension_numbers = #tpu.dot_dimension_numbers<[1], [0], [0], [1], [0, 0, 1, 1], [], []>} : vector<72x8xbf16>, vector<8x128xbf16>, vector<72x128xf32> -> vector<72x128xf32>
    %24 = arith.addf %18, %23 : vector<72x128xf32>
    %c0_32 = arith.constant 0 : index
    %c2_33 = arith.constant 2 : index
    %c0_34 = arith.constant 0 : index
    %c0_35 = arith.constant 0 : index
    %25 = vector.load %arg1[%c0_32, %c2_33, %c0_34, %c0_35] : memref<1x4x88x8xbf16, #tpu.memory_space<vmem>>, vector<1x1x72x8xbf16>
    %26 = vector.shape_cast %25 : vector<1x1x72x8xbf16> to vector<72x8xbf16>
    %c1_36 = arith.constant 1 : index
    %c0_37 = arith.constant 0 : index
    %c0_38 = arith.constant 0 : index
    %c0_39 = arith.constant 0 : index
    %27 = vector.load %arg2[%c1_36, %c0_37, %c0_38, %c0_39] : memref<4x4x8x128xbf16, #tpu.memory_space<vmem>>, vector<1x1x8x128xbf16>
    %28 = vector.shape_cast %27 : vector<1x1x8x128xbf16> to vector<8x128xbf16>
    %cst_40 = arith.constant dense<0.000000e+00> : vector<72x128xf32>
    %29 = tpu.matmul %26, %28, %cst_40 {dimension_numbers = #tpu.dot_dimension_numbers<[1], [0], [0], [1], [0, 0, 1, 1], [], []>} : vector<72x8xbf16>, vector<8x128xbf16>, vector<72x128xf32> -> vector<72x128xf32>
    %30 = arith.addf %24, %29 : vector<72x128xf32>
    %c0_41 = arith.constant 0 : index
    %c3_42 = arith.constant 3 : index
    %c0_43 = arith.constant 0 : index
    %c0_44 = arith.constant 0 : index
    %31 = vector.load %arg1[%c0_41, %c3_42, %c0_43, %c0_44] : memref<1x4x88x8xbf16, #tpu.memory_space<vmem>>, vector<1x1x72x8xbf16>
    %32 = vector.shape_cast %31 : vector<1x1x72x8xbf16> to vector<72x8xbf16>
    %c1_45 = arith.constant 1 : index
    %c1_46 = arith.constant 1 : index
    %c0_47 = arith.constant 0 : index
    %c0_48 = arith.constant 0 : index
    %33 = vector.load %arg2[%c1_45, %c1_46, %c0_47, %c0_48] : memref<4x4x8x128xbf16, #tpu.memory_space<vmem>>, vector<1x1x8x128xbf16>
    %34 = vector.shape_cast %33 : vector<1x1x8x128xbf16> to vector<8x128xbf16>
    %cst_49 = arith.constant dense<0.000000e+00> : vector<72x128xf32>
    %35 = tpu.matmul %32, %34, %cst_49 {dimension_numbers = #tpu.dot_dimension_numbers<[1], [0], [0], [1], [0, 0, 1, 1], [], []>} : vector<72x8xbf16>, vector<8x128xbf16>, vector<72x128xf32> -> vector<72x128xf32>
    %36 = arith.addf %30, %35 : vector<72x128xf32>
    %c0_50 = arith.constant 0 : index
    %c2_51 = arith.constant 2 : index
    %c1_52 = arith.constant 1 : index
    %c0_53 = arith.constant 0 : index
    %37 = vector.load %arg1[%c0_50, %c2_51, %c1_52, %c0_53] : memref<1x4x88x8xbf16, #tpu.memory_space<vmem>>, vector<1x1x72x8xbf16>
    %38 = vector.shape_cast %37 : vector<1x1x72x8xbf16> to vector<72x8xbf16>
    %c1_54 = arith.constant 1 : index
    %c2_55 = arith.constant 2 : index
    %c0_56 = arith.constant 0 : index
    %c0_57 = arith.constant 0 : index
    %39 = vector.load %arg2[%c1_54, %c2_55, %c0_56, %c0_57] : memref<4x4x8x128xbf16, #tpu.memory_space<vmem>>, vector<1x1x8x128xbf16>
    %40 = vector.shape_cast %39 : vector<1x1x8x128xbf16> to vector<8x128xbf16>
    %cst_58 = arith.constant dense<0.000000e+00> : vector<72x128xf32>
    %41 = tpu.matmul %38, %40, %cst_58 {dimension_numbers = #tpu.dot_dimension_numbers<[1], [0], [0], [1], [0, 0, 1, 1], [], []>} : vector<72x8xbf16>, vector<8x128xbf16>, vector<72x128xf32> -> vector<72x128xf32>
    %42 = arith.addf %36, %41 : vector<72x128xf32>
    %c0_59 = arith.constant 0 : index
    %c3_60 = arith.constant 3 : index
    %c1_61 = arith.constant 1 : index
    %c0_62 = arith.constant 0 : index
    %43 = vector.load %arg1[%c0_59, %c3_60, %c1_61, %c0_62] : memref<1x4x88x8xbf16, #tpu.memory_space<vmem>>, vector<1x1x72x8xbf16>
    %44 = vector.shape_cast %43 : vector<1x1x72x8xbf16> to vector<72x8xbf16>
    %c1_63 = arith.constant 1 : index
    %c3_64 = arith.constant 3 : index
    %c0_65 = arith.constant 0 : index
    %c0_66 = arith.constant 0 : index
    %45 = vector.load %arg2[%c1_63, %c3_64, %c0_65, %c0_66] : memref<4x4x8x128xbf16, #tpu.memory_space<vmem>>, vector<1x1x8x128xbf16>
    %46 = vector.shape_cast %45 : vector<1x1x8x128xbf16> to vector<8x128xbf16>
    %cst_67 = arith.constant dense<0.000000e+00> : vector<72x128xf32>
    %47 = tpu.matmul %44, %46, %cst_67 {dimension_numbers = #tpu.dot_dimension_numbers<[1], [0], [0], [1], [0, 0, 1, 1], [], []>} : vector<72x8xbf16>, vector<8x128xbf16>, vector<72x128xf32> -> vector<72x128xf32>
    %48 = arith.addf %42, %47 : vector<72x128xf32>
    %c0_68 = arith.constant 0 : index
    %c0_69 = arith.constant 0 : index
    %c9 = arith.constant 9 : index
    %c0_70 = arith.constant 0 : index
    %49 = vector.load %arg1[%c0_68, %c0_69, %c9, %c0_70] : memref<1x4x88x8xbf16, #tpu.memory_space<vmem>>, vector<1x1x72x8xbf16>
    %50 = vector.shape_cast %49 : vector<1x1x72x8xbf16> to vector<72x8xbf16>
    %c2_71 = arith.constant 2 : index
    %c0_72 = arith.constant 0 : index
    %c0_73 = arith.constant 0 : index
    %c0_74 = arith.constant 0 : index
    %51 = vector.load %arg2[%c2_71, %c0_72, %c0_73, %c0_74] : memref<4x4x8x128xbf16, #tpu.memory_space<vmem>>, vector<1x1x8x128xbf16>
    %52 = vector.shape_cast %51 : vector<1x1x8x128xbf16> to vector<8x128xbf16>
    %cst_75 = arith.constant dense<0.000000e+00> : vector<72x128xf32>
    %53 = tpu.matmul %50, %52, %cst_75 {dimension_numbers = #tpu.dot_dimension_numbers<[1], [0], [0], [1], [0, 0, 1, 1], [], []>} : vector<72x8xbf16>, vector<8x128xbf16>, vector<72x128xf32> -> vector<72x128xf32>
    %54 = arith.addf %48, %53 : vector<72x128xf32>
    %c0_76 = arith.constant 0 : index
    %c1_77 = arith.constant 1 : index
    %c9_78 = arith.constant 9 : index
    %c0_79 = arith.constant 0 : index
    %55 = vector.load %arg1[%c0_76, %c1_77, %c9_78, %c0_79] : memref<1x4x88x8xbf16, #tpu.memory_space<vmem>>, vector<1x1x72x8xbf16>
    %56 = vector.shape_cast %55 : vector<1x1x72x8xbf16> to vector<72x8xbf16>
    %c2_80 = arith.constant 2 : index
    %c1_81 = arith.constant 1 : index
    %c0_82 = arith.constant 0 : index
    %c0_83 = arith.constant 0 : index
    %57 = vector.load %arg2[%c2_80, %c1_81, %c0_82, %c0_83] : memref<4x4x8x128xbf16, #tpu.memory_space<vmem>>, vector<1x1x8x128xbf16>
    %58 = vector.shape_cast %57 : vector<1x1x8x128xbf16> to vector<8x128xbf16>
    %cst_84 = arith.constant dense<0.000000e+00> : vector<72x128xf32>
    %59 = tpu.matmul %56, %58, %cst_84 {dimension_numbers = #tpu.dot_dimension_numbers<[1], [0], [0], [1], [0, 0, 1, 1], [], []>} : vector<72x8xbf16>, vector<8x128xbf16>, vector<72x128xf32> -> vector<72x128xf32>
    %60 = arith.addf %54, %59 : vector<72x128xf32>
    %c0_85 = arith.constant 0 : index
    %c0_86 = arith.constant 0 : index
    %c10 = arith.constant 10 : index
    %c0_87 = arith.constant 0 : index
    %61 = vector.load %arg1[%c0_85, %c0_86, %c10, %c0_87] : memref<1x4x88x8xbf16, #tpu.memory_space<vmem>>, vector<1x1x72x8xbf16>
    %62 = vector.shape_cast %61 : vector<1x1x72x8xbf16> to vector<72x8xbf16>
    %c2_88 = arith.constant 2 : index
    %c2_89 = arith.constant 2 : index
    %c0_90 = arith.constant 0 : index
    %c0_91 = arith.constant 0 : index
    %63 = vector.load %arg2[%c2_88, %c2_89, %c0_90, %c0_91] : memref<4x4x8x128xbf16, #tpu.memory_space<vmem>>, vector<1x1x8x128xbf16>
    %64 = vector.shape_cast %63 : vector<1x1x8x128xbf16> to vector<8x128xbf16>
    %cst_92 = arith.constant dense<0.000000e+00> : vector<72x128xf32>
    %65 = tpu.matmul %62, %64, %cst_92 {dimension_numbers = #tpu.dot_dimension_numbers<[1], [0], [0], [1], [0, 0, 1, 1], [], []>} : vector<72x8xbf16>, vector<8x128xbf16>, vector<72x128xf32> -> vector<72x128xf32>
    %66 = arith.addf %60, %65 : vector<72x128xf32>
    %c0_93 = arith.constant 0 : index
    %c1_94 = arith.constant 1 : index
    %c10_95 = arith.constant 10 : index
    %c0_96 = arith.constant 0 : index
    %67 = vector.load %arg1[%c0_93, %c1_94, %c10_95, %c0_96] : memref<1x4x88x8xbf16, #tpu.memory_space<vmem>>, vector<1x1x72x8xbf16>
    %68 = vector.shape_cast %67 : vector<1x1x72x8xbf16> to vector<72x8xbf16>
    %c2_97 = arith.constant 2 : index
    %c3_98 = arith.constant 3 : index
    %c0_99 = arith.constant 0 : index
    %c0_100 = arith.constant 0 : index
    %69 = vector.load %arg2[%c2_97, %c3_98, %c0_99, %c0_100] : memref<4x4x8x128xbf16, #tpu.memory_space<vmem>>, vector<1x1x8x128xbf16>
    %70 = vector.shape_cast %69 : vector<1x1x8x128xbf16> to vector<8x128xbf16>
    %cst_101 = arith.constant dense<0.000000e+00> : vector<72x128xf32>
    %71 = tpu.matmul %68, %70, %cst_101 {dimension_numbers = #tpu.dot_dimension_numbers<[1], [0], [0], [1], [0, 0, 1, 1], [], []>} : vector<72x8xbf16>, vector<8x128xbf16>, vector<72x128xf32> -> vector<72x128xf32>
    %72 = arith.addf %66, %71 : vector<72x128xf32>
    %c0_102 = arith.constant 0 : index
    %c2_103 = arith.constant 2 : index
    %c9_104 = arith.constant 9 : index
    %c0_105 = arith.constant 0 : index
    %73 = vector.load %arg1[%c0_102, %c2_103, %c9_104, %c0_105] : memref<1x4x88x8xbf16, #tpu.memory_space<vmem>>, vector<1x1x72x8xbf16>
    %74 = vector.shape_cast %73 : vector<1x1x72x8xbf16> to vector<72x8xbf16>
    %c3_106 = arith.constant 3 : index
    %c0_107 = arith.constant 0 : index
    %c0_108 = arith.constant 0 : index
    %c0_109 = arith.constant 0 : index
    %75 = vector.load %arg2[%c3_106, %c0_107, %c0_108, %c0_109] : memref<4x4x8x128xbf16, #tpu.memory_space<vmem>>, vector<1x1x8x128xbf16>
    %76 = vector.shape_cast %75 : vector<1x1x8x128xbf16> to vector<8x128xbf16>
    %cst_110 = arith.constant dense<0.000000e+00> : vector<72x128xf32>
    %77 = tpu.matmul %74, %76, %cst_110 {dimension_numbers = #tpu.dot_dimension_numbers<[1], [0], [0], [1], [0, 0, 1, 1], [], []>} : vector<72x8xbf16>, vector<8x128xbf16>, vector<72x128xf32> -> vector<72x128xf32>
    %78 = arith.addf %72, %77 : vector<72x128xf32>
    %c0_111 = arith.constant 0 : index
    %c3_112 = arith.constant 3 : index
    %c9_113 = arith.constant 9 : index
    %c0_114 = arith.constant 0 : index
    %79 = vector.load %arg1[%c0_111, %c3_112, %c9_113, %c0_114] : memref<1x4x88x8xbf16, #tpu.memory_space<vmem>>, vector<1x1x72x8xbf16>
    %80 = vector.shape_cast %79 : vector<1x1x72x8xbf16> to vector<72x8xbf16>
    %c3_115 = arith.constant 3 : index
    %c1_116 = arith.constant 1 : index
    %c0_117 = arith.constant 0 : index
    %c0_118 = arith.constant 0 : index
    %81 = vector.load %arg2[%c3_115, %c1_116, %c0_117, %c0_118] : memref<4x4x8x128xbf16, #tpu.memory_space<vmem>>, vector<1x1x8x128xbf16>
    %82 = vector.shape_cast %81 : vector<1x1x8x128xbf16> to vector<8x128xbf16>
    %cst_119 = arith.constant dense<0.000000e+00> : vector<72x128xf32>
    %83 = tpu.matmul %80, %82, %cst_119 {dimension_numbers = #tpu.dot_dimension_numbers<[1], [0], [0], [1], [0, 0, 1, 1], [], []>} : vector<72x8xbf16>, vector<8x128xbf16>, vector<72x128xf32> -> vector<72x128xf32>
    %84 = arith.addf %78, %83 : vector<72x128xf32>
    %c0_120 = arith.constant 0 : index
    %c2_121 = arith.constant 2 : index
    %c10_122 = arith.constant 10 : index
    %c0_123 = arith.constant 0 : index
    %85 = vector.load %arg1[%c0_120, %c2_121, %c10_122, %c0_123] : memref<1x4x88x8xbf16, #tpu.memory_space<vmem>>, vector<1x1x72x8xbf16>
    %86 = vector.shape_cast %85 : vector<1x1x72x8xbf16> to vector<72x8xbf16>
    %c3_124 = arith.constant 3 : index
    %c2_125 = arith.constant 2 : index
    %c0_126 = arith.constant 0 : index
    %c0_127 = arith.constant 0 : index
    %87 = vector.load %arg2[%c3_124, %c2_125, %c0_126, %c0_127] : memref<4x4x8x128xbf16, #tpu.memory_space<vmem>>, vector<1x1x8x128xbf16>
    %88 = vector.shape_cast %87 : vector<1x1x8x128xbf16> to vector<8x128xbf16>
    %cst_128 = arith.constant dense<0.000000e+00> : vector<72x128xf32>
    %89 = tpu.matmul %86, %88, %cst_128 {dimension_numbers = #tpu.dot_dimension_numbers<[1], [0], [0], [1], [0, 0, 1, 1], [], []>} : vector<72x8xbf16>, vector<8x128xbf16>, vector<72x128xf32> -> vector<72x128xf32>
    %90 = arith.addf %84, %89 : vector<72x128xf32>
    %c0_129 = arith.constant 0 : index
    %c3_130 = arith.constant 3 : index
    %c10_131 = arith.constant 10 : index
    %c0_132 = arith.constant 0 : index
    %91 = vector.load %arg1[%c0_129, %c3_130, %c10_131, %c0_132] : memref<1x4x88x8xbf16, #tpu.memory_space<vmem>>, vector<1x1x72x8xbf16>
    %92 = vector.shape_cast %91 : vector<1x1x72x8xbf16> to vector<72x8xbf16>
    %c3_133 = arith.constant 3 : index
    %c3_134 = arith.constant 3 : index
    %c0_135 = arith.constant 0 : index
    %c0_136 = arith.constant 0 : index
    %93 = vector.load %arg2[%c3_133, %c3_134, %c0_135, %c0_136] : memref<4x4x8x128xbf16, #tpu.memory_space<vmem>>, vector<1x1x8x128xbf16>
    %94 = vector.shape_cast %93 : vector<1x1x8x128xbf16> to vector<8x128xbf16>
    %cst_137 = arith.constant dense<0.000000e+00> : vector<72x128xf32>
    %95 = tpu.matmul %92, %94, %cst_137 {dimension_numbers = #tpu.dot_dimension_numbers<[1], [0], [0], [1], [0, 0, 1, 1], [], []>} : vector<72x8xbf16>, vector<8x128xbf16>, vector<72x128xf32> -> vector<72x128xf32>
    %96 = arith.addf %90, %95 : vector<72x128xf32>
    %c0_138 = arith.constant 0 : index
    %c0_139 = arith.constant 0 : index
    %97 = vector.load %arg3[%c0_138, %c0_139] : memref<72x1xf32, #tpu.memory_space<vmem>>, vector<72x1xf32>
    %98 = vector.broadcast %97 : vector<72x1xf32> to vector<72x128xf32>
    %99 = arith.mulf %96, %98 : vector<72x128xf32>
    %100 = arith.truncf %99 : vector<72x128xf32> to vector<72x128xbf16>
    %c0_140 = arith.constant 0 : index
    %c0_141 = arith.constant 0 : index
    %c0_142 = arith.constant 0 : index
    %101 = vector.load %arg4[%c0_140, %c0_141, %c0_142] : memref<1x72x128xbf16, #tpu.memory_space<vmem>>, vector<1x72x128xbf16>
    %102 = vector.shape_cast %101 : vector<1x72x128xbf16> to vector<72x128xbf16>
    %103 = vector.shape_cast %100 : vector<72x128xbf16> to vector<1x72x128xbf16>
    tpu.vector_store %arg4[%c0_140, %c0_141, %c0_142], %103 {strides = array<i32>} : memref<1x72x128xbf16, #tpu.memory_space<vmem>>, vector<1x72x128xbf16>,
    %cst_143 = arith.constant dense<0.000000e+00> : vector<128xf32>
    %104 = vector.multi_reduction <add>, %99, %cst_143 [0] : vector<72x128xf32> to vector<128xf32>
    %105 = vector.shape_cast %104 : vector<128xf32> to vector<1x128xf32>
    %106 = arith.mulf %99, %99 : vector<72x128xf32>
    %cst_144 = arith.constant dense<0.000000e+00> : vector<128xf32>
    %107 = vector.multi_reduction <add>, %106, %cst_144 [0] : vector<72x128xf32> to vector<128xf32>
    %108 = vector.shape_cast %107 : vector<128xf32> to vector<1x128xf32>
    %109 = vector.shape_cast %105 : vector<1x128xf32> to vector<1x128xf32>
    %110 = vector.broadcast %109 : vector<1x128xf32> to vector<8x128xf32>
    %c0_145 = arith.constant 0 : index
    %c0_146 = arith.constant 0 : index
    %111 = vector.load %arg5[%c0_145, %c0_146] : memref<8x128xf32, #tpu.memory_space<vmem>>, vector<8x128xf32>
    tpu.vector_store %arg5[%c0_145, %c0_146], %110 {strides = array<i32>} : memref<8x128xf32, #tpu.memory_space<vmem>>, vector<8x128xf32>,
    %112 = vector.shape_cast %108 : vector<1x128xf32> to vector<1x128xf32>
    %113 = vector.broadcast %112 : vector<1x128xf32> to vector<8x128xf32>
    %c0_147 = arith.constant 0 : index
    %c0_148 = arith.constant 0 : index
    %114 = vector.load %arg6[%c0_147, %c0_148] : memref<8x128xf32, #tpu.memory_space<vmem>>, vector<8x128xf32>
    tpu.vector_store %arg6[%c0_147, %c0_148], %113 {strides = array<i32>} : memref<8x128xf32, #tpu.memory_space<vmem>>, vector<8x128xf32>,
    return
  }
  func.func @transform_0(%arg0: i32) -> (i32, i32, i32, i32) {
    %c0_i32 = arith.constant 0 : i32
    %c0_i32_0 = arith.constant 0 : i32
    %c0_i32_1 = arith.constant 0 : i32
    %c0_i32_2 = arith.constant 0 : i32
    return %arg0, %c0_i32, %c0_i32_0, %c0_i32_1 : i32, i32, i32, i32
  }
  func.func @transform_1(%arg0: i32) -> (i32, i32, i32, i32) {
    %c0_i32 = arith.constant 0 : i32
    %c0_i32_0 = arith.constant 0 : i32
    %c0_i32_1 = arith.constant 0 : i32
    %c0_i32_2 = arith.constant 0 : i32
    %c0_i32_3 = arith.constant 0 : i32
    return %c0_i32, %c0_i32_0, %c0_i32_1, %c0_i32_2 : i32, i32, i32, i32
  }
  func.func @transform_2(%arg0: i32) -> (i32, i32) {
    %c0_i32 = arith.constant 0 : i32
    %c0_i32_0 = arith.constant 0 : i32
    %c0_i32_1 = arith.constant 0 : i32
    return %c0_i32, %c0_i32_0 : i32, i32
  }
  func.func @transform_3(%arg0: i32) -> (i32, i32, i32) {
    %c0_i32 = arith.constant 0 : i32
    %c0_i32_0 = arith.constant 0 : i32
    %c0_i32_1 = arith.constant 0 : i32
    return %arg0, %c0_i32, %c0_i32_0 : i32, i32, i32
  }
  func.func @transform_4(%arg0: i32) -> (i32, i32) {
    %c0_i32 = arith.constant 0 : i32
    %c0_i32_0 = arith.constant 0 : i32
    return %arg0, %c0_i32 : i32, i32
  }
  func.func @transform_5(%arg0: i32) -> (i32, i32) {
    %c0_i32 = arith.constant 0 : i32
    %c0_i32_0 = arith.constant 0 : i32
    return %arg0, %c0_i32 : i32, i32
  }
}

module attributes {stable_mosaic.version = 11 : i64} {
  func.func @kernel(%arg0: i32, %arg1: memref<1x72x128xbf16, #tpu.memory_space<vmem>>, %arg2: memref<16x128xf32, #tpu.memory_space<vmem>>, %arg3: memref<16x128xf32, #tpu.memory_space<vmem>>, %arg4: memref<1x128xf32, #tpu.memory_space<vmem>>, %arg5: memref<1x128xf32, #tpu.memory_space<vmem>>, %arg6: memref<1x72x128xf32, #tpu.memory_space<vmem>>) attributes {dimension_semantics = [#tpu.dimension_semantics<parallel>], iteration_bounds = array<i64: 2>, scalar_prefetch = 0 : i64, scratch_operands = 0 : i64, tpu.core_type = #tpu.core_type<tc>, window_params = [{transform_indices = @transform_0, window_bounds = array<i64: 1, 72, 128>}, {pipeline_mode = #tpu.pipeline_mode<synchronous>, transform_indices = @transform_1, window_bounds = array<i64: 16, 128>}, {pipeline_mode = #tpu.pipeline_mode<synchronous>, transform_indices = @transform_2, window_bounds = array<i64: 16, 128>}, {pipeline_mode = #tpu.pipeline_mode<synchronous>, transform_indices = @transform_3, window_bounds = array<i64: 1, 128>}, {pipeline_mode = #tpu.pipeline_mode<synchronous>, transform_indices = @transform_4, window_bounds = array<i64: 1, 128>}, {transform_indices = @transform_5, window_bounds = array<i64: 1, 72, 128>}]} {
    %c0 = arith.constant 0 : index
    %c0_0 = arith.constant 0 : index
    %0 = vector.load %arg2[%c0, %c0_0] : memref<16x128xf32, #tpu.memory_space<vmem>>, vector<16x128xf32>
    %cst = arith.constant dense<0.000000e+00> : vector<128xf32>
    %1 = vector.multi_reduction <add>, %0, %cst [0] : vector<16x128xf32> to vector<128xf32>
    %2 = vector.shape_cast %1 : vector<128xf32> to vector<1x128xf32>
    %cst_1 = arith.constant 9.765625E-4 : f32
    %3 = vector.broadcast %cst_1 : f32 to vector<1x128xf32>
    %4 = arith.mulf %2, %3 : vector<1x128xf32>
    %c0_2 = arith.constant 0 : index
    %c0_3 = arith.constant 0 : index
    %5 = vector.load %arg3[%c0_2, %c0_3] : memref<16x128xf32, #tpu.memory_space<vmem>>, vector<16x128xf32>
    %cst_4 = arith.constant dense<0.000000e+00> : vector<128xf32>
    %6 = vector.multi_reduction <add>, %5, %cst_4 [0] : vector<16x128xf32> to vector<128xf32>
    %7 = vector.shape_cast %6 : vector<128xf32> to vector<1x128xf32>
    %cst_5 = arith.constant 9.765625E-4 : f32
    %8 = vector.broadcast %cst_5 : f32 to vector<1x128xf32>
    %9 = arith.mulf %7, %8 : vector<1x128xf32>
    %10 = arith.mulf %4, %4 : vector<1x128xf32>
    %11 = arith.subf %9, %10 : vector<1x128xf32>
    %cst_6 = arith.constant 0.000000e+00 : f32
    %12 = vector.broadcast %cst_6 : f32 to vector<1x128xf32>
    %13 = arith.maximumf %11, %12 : vector<1x128xf32>
    %cst_7 = arith.constant 9.99999974E-6 : f32
    %14 = vector.broadcast %cst_7 : f32 to vector<1x128xf32>
    %15 = arith.addf %13, %14 : vector<1x128xf32>
    %16 = math.rsqrt %15 : vector<1x128xf32>
    %c0_8 = arith.constant 0 : index
    %c0_9 = arith.constant 0 : index
    %17 = vector.load %arg4[%c0_8, %c0_9] : memref<1x128xf32, #tpu.memory_space<vmem>>, vector<1x128xf32>
    %18 = arith.mulf %17, %16 : vector<1x128xf32>
    %c0_10 = arith.constant 0 : index
    %c0_11 = arith.constant 0 : index
    %19 = vector.load %arg5[%c0_10, %c0_11] : memref<1x128xf32, #tpu.memory_space<vmem>>, vector<1x128xf32>
    %20 = arith.mulf %4, %18 : vector<1x128xf32>
    %21 = arith.subf %19, %20 : vector<1x128xf32>
    %c0_12 = arith.constant 0 : index
    %c0_13 = arith.constant 0 : index
    %c0_14 = arith.constant 0 : index
    %22 = vector.load %arg1[%c0_12, %c0_13, %c0_14] : memref<1x72x128xbf16, #tpu.memory_space<vmem>>, vector<1x72x128xbf16>
    %23 = vector.shape_cast %22 : vector<1x72x128xbf16> to vector<72x128xbf16>
    %24 = arith.extf %23 : vector<72x128xbf16> to vector<72x128xf32>
    %25 = vector.broadcast %18 : vector<1x128xf32> to vector<72x128xf32>
    %26 = arith.mulf %24, %25 : vector<72x128xf32>
    %27 = vector.broadcast %21 : vector<1x128xf32> to vector<72x128xf32>
    %28 = arith.addf %26, %27 : vector<72x128xf32>
    %cst_15 = arith.constant 0.000000e+00 : f32
    %29 = vector.broadcast %cst_15 : f32 to vector<72x128xf32>
    %30 = arith.cmpf oge, %28, %29 : vector<72x128xf32>
    %cst_16 = arith.constant 2.000000e-01 : f32
    %31 = vector.broadcast %cst_16 : f32 to vector<72x128xf32>
    %32 = arith.mulf %31, %28 : vector<72x128xf32>
    %33 = arith.select %30, %28, %32 : vector<72x128xi1>, vector<72x128xf32>
    %c0_17 = arith.constant 0 : index
    %c0_18 = arith.constant 0 : index
    %c0_19 = arith.constant 0 : index
    %34 = vector.load %arg6[%c0_17, %c0_18, %c0_19] : memref<1x72x128xf32, #tpu.memory_space<vmem>>, vector<1x72x128xf32>
    %35 = vector.shape_cast %34 : vector<1x72x128xf32> to vector<72x128xf32>
    %36 = vector.shape_cast %33 : vector<72x128xf32> to vector<1x72x128xf32>
    tpu.vector_store %arg6[%c0_17, %c0_18, %c0_19], %36 {strides = array<i32>} : memref<1x72x128xf32, #tpu.memory_space<vmem>>, vector<1x72x128xf32>,
    return
  }
  func.func @transform_0(%arg0: i32) -> (i32, i32, i32) {
    %c0_i32 = arith.constant 0 : i32
    %c0_i32_0 = arith.constant 0 : i32
    %c0_i32_1 = arith.constant 0 : i32
    return %arg0, %c0_i32, %c0_i32_0 : i32, i32, i32
  }
  func.func @transform_1(%arg0: i32) -> (i32, i32) {
    %c0_i32 = arith.constant 0 : i32
    %c0_i32_0 = arith.constant 0 : i32
    %c0_i32_1 = arith.constant 0 : i32
    return %c0_i32, %c0_i32_0 : i32, i32
  }
  func.func @transform_2(%arg0: i32) -> (i32, i32) {
    %c0_i32 = arith.constant 0 : i32
    %c0_i32_0 = arith.constant 0 : i32
    %c0_i32_1 = arith.constant 0 : i32
    return %c0_i32, %c0_i32_0 : i32, i32
  }
  func.func @transform_3(%arg0: i32) -> (i32, i32) {
    %c0_i32 = arith.constant 0 : i32
    %c0_i32_0 = arith.constant 0 : i32
    %c0_i32_1 = arith.constant 0 : i32
    return %c0_i32, %c0_i32_0 : i32, i32
  }
  func.func @transform_4(%arg0: i32) -> (i32, i32) {
    %c0_i32 = arith.constant 0 : i32
    %c0_i32_0 = arith.constant 0 : i32
    %c0_i32_1 = arith.constant 0 : i32
    return %c0_i32, %c0_i32_0 : i32, i32
  }
  func.func @transform_5(%arg0: i32) -> (i32, i32, i32) {
    %c0_i32 = arith.constant 0 : i32
    %c0_i32_0 = arith.constant 0 : i32
    %c0_i32_1 = arith.constant 0 : i32
    return %arg0, %c0_i32, %c0_i32_0 : i32, i32, i32
  }
}

</mosaic_0001>

<llo_original>
// kernel: dcgan_conv_forward.3
$region0: #{dcgan_conv_forward.3}
  #allocation0 [shape = 'u32[]', space=smem, size = 0x4, offset = 0x4, fixed_abs, tag = 'smem constant byte address 0x4 - core index']
  #allocation1 [shape = 'u32[144,128]{1,0:T(1,128)}', space=vmem, size = 0x12000, scoped, tag = 'internal scratch']
  %s0 = inlined_call_operand.vmem [shape: bf16[2,72,128], index: 0, kind: input, shape index: {}]
  %s1 = inlined_call_operand.vmem [shape: f32[16,128], index: 1, kind: input, shape index: {}]
  %s2 = inlined_call_operand.vmem [shape: f32[16,128], index: 2, kind: input, shape index: {}]
  %s3 = inlined_call_operand.vmem [shape: f32[1,128], index: 3, kind: input, shape index: {}]
  %s4 = inlined_call_operand.vmem [shape: f32[1,128], index: 4, kind: input, shape index: {}]
  %s5 = inlined_call_operand.vmem [shape: f32[2,72,128], index: 5, kind: output, shape index: {}]
  %s6 = sld [smem:[#allocation0]]
  $region53: #{dcgan_conv_forward.3} parent=0
    _
  %s8 = ssub.s32 1, %s6
  %s9 = scalar_select 0, %s8, %s6
  loop: start=0, step=1, limit=4
  $region2: #{dcgan_conv_forward.3} parent=0 // loop_pre_header
    _
  $region3: #{dcgan_conv_forward.3} parent=0 // loop_header
    %s11 = sphi 0, %s15
    %p12 = scmp.ge.s32.totalorder %s11, 4
    %s21 = sphi 0, %s23
    %s24 = sphi 0, %s21
    %s25 = sphi 0, %s24
    %s41 = sphi 0, %s25
    %s45 = sphi 0, %s45
    %s47 = sphi 0, %s45
    %s48 = sphi 0, %s47
    %s62 = sphi 0, %s48
    %s66 = sphi 0, %s66
    %s68 = sphi 0, %s66
    %s69 = sphi 0, %s68
    %s83 = sphi 0, %s69
    %s87 = sphi 0, %s87
    %s89 = sphi 0, %s87
    %s90 = sphi 0, %s89
    %s104 = sphi 0, %s90
    %s108 = sphi 0, %s108
    %s110 = sphi 0, %s108
    %s111 = sphi 0, %s110
    %s125 = sphi 0, %s111
    %s131 = sphi 0, %s133
    %s134 = sphi 0, %s131
    %s135 = sphi 0, %s134
    %s151 = sphi 0, %s135
  $region4: #{dcgan_conv_forward.3} parent=0 // loop_header_branch
    %14 = sbr.rel (%p12) target = $region8
  $region5: #{dcgan_conv_forward.3} parent=0 // loop_body
    %s16 = ssub.s32 %s11, 1
    %s17 = ssub.s32 %s11, 2
    %s18 = sadd.s32 %s11, 1
    %s19 = ssub.s32 %s11, %s18
    %p20 = scmp.eq.s32.totalorder %s19, 0
    %s22 = sadd.s32 %s21, 1
    %s23 = scalar_select %p20, %s21, %s22
    %p26 = pneg %p20
    %p27 = scmp.eq.s32.totalorder %s11, 1
    %p28 = por %p26, %p27
    %p29 = scmp.ne.s32.totalorder %s21, %s24
    %p30 = scmp.eq.s32.totalorder %s11, 0
    %p31 = por %p29, %p30
    %p32 = scmp.ne.s32.totalorder %s21, %s24
    %p33 = scmp.eq.s32.totalorder %s16, 1
    %p34 = por %p32, %p33
    %p35 = scmp.ne.s32.totalorder %s24, %s25
    %p36 = scmp.eq.s32.totalorder %s16, 0
    %p37 = por %p35, %p36
    %p38 = scmp.ne.s32.totalorder %s24, %s25
    %p39 = scmp.eq.s32.totalorder %s17, 1
    %p40 = por %p38, %p39
    %p42 = scmp.ne.s32.totalorder %s25, %s41
    %p43 = scmp.eq.s32.totalorder %s17, 0
    %p44 = por %p42, %p43
    %s46 = sadd.s32 %s45, 1
    %p49 = scmp.eq.s32.totalorder %s11, 1
    %p50 = scmp.ne.s32.totalorder %s45, %s47
    %p51 = scmp.eq.s32.totalorder %s11, 0
    %p52 = por %p50, %p51
    %p53 = scmp.ne.s32.totalorder %s45, %s47
    %p54 = scmp.eq.s32.totalorder %s16, 1
    %p55 = por %p53, %p54
    %p56 = scmp.ne.s32.totalorder %s47, %s48
    %p57 = scmp.eq.s32.totalorder %s16, 0
    %p58 = por %p56, %p57
    %p59 = scmp.ne.s32.totalorder %s47, %s48
    %p60 = scmp.eq.s32.totalorder %s17, 1
    %p61 = por %p59, %p60
    %p63 = scmp.ne.s32.totalorder %s48, %s62
    %p64 = scmp.eq.s32.totalorder %s17, 0
    %p65 = por %p63, %p64
    %s67 = sadd.s32 %s66, 1
    %p70 = scmp.eq.s32.totalorder %s11, 1
    %p71 = scmp.ne.s32.totalorder %s66, %s68
    %p72 = scmp.eq.s32.totalorder %s11, 0
    %p73 = por %p71, %p72
    %p74 = scmp.ne.s32.totalorder %s66, %s68
    %p75 = scmp.eq.s32.totalorder %s16, 1
    %p76 = por %p74, %p75
    %p77 = scmp.ne.s32.totalorder %s68, %s69
    %p78 = scmp.eq.s32.totalorder %s16, 0
    %p79 = por %p77, %p78
    %p80 = scmp.ne.s32.totalorder %s68, %s69
    %p81 = scmp.eq.s32.totalorder %s17, 1
    %p82 = por %p80, %p81
    %p84 = scmp.ne.s32.totalorder %s69, %s83
    %p85 = scmp.eq.s32.totalorder %s17, 0
    %p86 = por %p84, %p85
    %s88 = sadd.s32 %s87, 1
    %p91 = scmp.eq.s32.totalorder %s11, 1
    %p92 = scmp.ne.s32.totalorder %s87, %s89
    %p93 = scmp.eq.s32.totalorder %s11, 0
    %p94 = por %p92, %p93
    %p95 = scmp.ne.s32.totalorder %s87, %s89
    %p96 = scmp.eq.s32.totalorder %s16, 1
    %p97 = por %p95, %p96
    %p98 = scmp.ne.s32.totalorder %s89, %s90
    %p99 = scmp.eq.s32.totalorder %s16, 0
    %p100 = por %p98, %p99
    %p101 = scmp.ne.s32.totalorder %s89, %s90
    %p102 = scmp.eq.s32.totalorder %s17, 1
    %p103 = por %p101, %p102
    %p105 = scmp.ne.s32.totalorder %s90, %s104
    %p106 = scmp.eq.s32.totalorder %s17, 0
    %p107 = por %p105, %p106
    %s109 = sadd.s32 %s108, 1
    %p112 = scmp.eq.s32.totalorder %s11, 1
    %p113 = scmp.ne.s32.totalorder %s108, %s110
    %p114 = scmp.eq.s32.totalorder %s11, 0
    %p115 = por %p113, %p114
    %p116 = scmp.ne.s32.totalorder %s108, %s110
    %p117 = scmp.eq.s32.totalorder %s16, 1
    %p118 = por %p116, %p117
    %p119 = scmp.ne.s32.totalorder %s110, %s111
    %p120 = scmp.eq.s32.totalorder %s16, 0
    %p121 = por %p119, %p120
    %p122 = scmp.ne.s32.totalorder %s110, %s111
    %p123 = scmp.eq.s32.totalorder %s17, 1
    %p124 = por %p122, %p123
    %p126 = scmp.ne.s32.totalorder %s111, %s125
    %p127 = scmp.eq.s32.totalorder %s17, 0
    %p128 = por %p126, %p127
    %s129 = ssub.s32 %s11, %s18
    %p130 = scmp.eq.s32.totalorder %s129, 0
    %s132 = sadd.s32 %s131, 1
    %s133 = scalar_select %p130, %s131, %s132
    %p136 = pneg %p130
    %p137 = scmp.eq.s32.totalorder %s11, 1
    %p138 = por %p136, %p137
    %p139 = scmp.ne.s32.totalorder %s131, %s134
    %p140 = scmp.eq.s32.totalorder %s11, 0
    %p141 = por %p139, %p140
    %p142 = scmp.ne.s32.totalorder %s131, %s134
    %p143 = scmp.eq.s32.totalorder %s16, 1
    %p144 = por %p142, %p143
    %p145 = scmp.ne.s32.totalorder %s134, %s135
    %p146 = scmp.eq.s32.totalorder %s16, 0
    %p147 = por %p145, %p146
    %p148 = scmp.ne.s32.totalorder %s134, %s135
    %p149 = scmp.eq.s32.totalorder %s17, 1
    %p150 = por %p148, %p149
    %p152 = scmp.ne.s32.totalorder %s135, %s151
    %p153 = scmp.eq.s32.totalorder %s17, 0
    %p154 = por %p152, %p153
    %p155 = scmp.le.s32.totalorder 1, %s11
    %p156 = scmp.lt.s32.totalorder %s11, 3
    %p157 = pnand %p155, %p156
    %p158 = pneg %p157
    // Predicated region
    $region9: #{dcgan_conv_forward.3} parent=5 // pred_check
      _
    $region10: #{dcgan_conv_forward.3} parent=5 // pred_check_branch
      %160 = sbr.rel (%p157) target = $region12
    $region11: #{dcgan_conv_forward.3} parent=5 // pred_region
      %s161 = ssub.s32 %s11, 1
      // Predicated region
      $region13: #{dcgan_conv_forward.3} parent=11 // pred_check
        %p162 = pneg %p58
      $region14: #{dcgan_conv_forward.3} parent=11 // pred_check_branch
        %164 = sbr.rel (%p162) target = $region16
      $region15: #{dcgan_conv_forward.3} parent=11 // pred_region
        _
      $region16: #{dcgan_conv_forward.3} parent=11 // pred_fallthru
        _
      // Predicated region
      $region17: #{dcgan_conv_forward.3} parent=11 // pred_check
        %p165 = pneg %p79
      $region18: #{dcgan_conv_forward.3} parent=11 // pred_check_branch
        %167 = sbr.rel (%p165) target = $region20
      $region19: #{dcgan_conv_forward.3} parent=11 // pred_region
        _
      $region20: #{dcgan_conv_forward.3} parent=11 // pred_fallthru
        _
      // Predicated region
      $region21: #{dcgan_conv_forward.3} parent=11 // pred_check
        %p168 = pneg %p100
      $region22: #{dcgan_conv_forward.3} parent=11 // pred_check_branch
        %170 = sbr.rel (%p168) target = $region24
      $region23: #{dcgan_conv_forward.3} parent=11 // pred_region
        _
      $region24: #{dcgan_conv_forward.3} parent=11 // pred_fallthru
        _
      // Predicated region
      $region25: #{dcgan_conv_forward.3} parent=11 // pred_check
        %p171 = pneg %p121
      $region26: #{dcgan_conv_forward.3} parent=11 // pred_check_branch
        %173 = sbr.rel (%p171) target = $region28
      $region27: #{dcgan_conv_forward.3} parent=11 // pred_region
        _
      $region28: #{dcgan_conv_forward.3} parent=11 // pred_fallthru
        _
    $region12: #{dcgan_conv_forward.3} parent=5 // pred_fallthru
      _
    %p174 = scmp.lt.s32.totalorder %s11, 2
    // Predicated region
    $region29: #{dcgan_conv_forward.3} parent=5 // pred_check
      %p175 = pneg %p174
    $region30: #{dcgan_conv_forward.3} parent=5 // pred_check_branch
      %177 = sbr.rel (%p175) target = $region32
    $region31: #{dcgan_conv_forward.3} parent=5 // pred_region
      // Predicated region
      $region33: #{dcgan_conv_forward.3} parent=31 // pred_check
        %p178 = pneg %p31
      $region34: #{dcgan_conv_forward.3} parent=31 // pred_check_branch
        %180 = sbr.rel (%p178) target = $region36
      $region35: #{dcgan_conv_forward.3} parent=31 // pred_region
        %p181 = scmp.lt.s32.totalorder %s11, 1
        %s182 = scalar_select %p181, %s11, 1
        %s183 = smul.addr %s182, 9
        %s184 = smul.addr %s183, 4
        %s185 = scalar_lea.vmem %s0, %s184
      $region36: #{dcgan_conv_forward.3} parent=31 // pred_fallthru
        _
    $region32: #{dcgan_conv_forward.3} parent=5 // pred_fallthru
      _
    %p186 = scmp.le.s32.totalorder 1, %s11
    %p187 = scmp.lt.s32.totalorder %s11, 3
    %p188 = pnand %p186, %p187
    %p189 = pneg %p188
    // Predicated region
    $region37: #{dcgan_conv_forward.3} parent=5 // pred_check
      _
    $region38: #{dcgan_conv_forward.3} parent=5 // pred_check_branch
      %191 = sbr.rel (%p188) target = $region40
    $region39: #{dcgan_conv_forward.3} parent=5 // pred_region
      %s192 = ssub.s32 %s11, 1
      %p193 = scmp.lt.s32.totalorder %s16, 1
      %s194 = scalar_select %p193, %s16, 1
      %s195 = smul.addr %s194, 9
      %s196 = smul.addr %s195, 4
      %s197 = scalar_lea.vmem %s0, %s196
      %p198 = pneg %p37
      %p199 = pneg %p34
      %p200 = pneg %p58
      %p201 = pneg %p55
      %p202 = pneg %p79
      %p203 = pneg %p76
      %p204 = pneg %p100
      %p205 = pneg %p97
      %p206 = pneg %p121
      %p207 = pneg %p118
      %p208 = pneg %p147
      %p209 = pneg %p144
      %p210 = scmp.lt.s32.totalorder %s16, 1
      %s211 = scalar_select %p210, %s16, 1
      %s212 = smul.addr %s211, 9
      %s213 = smul.addr %s212, 8
      %s214 = scalar_lea.vmem %s5, %s213
      %p215 = scmp.lt.s32.totalorder %s16, 1
      %s216 = scalar_select %p215, %s16, 1
      %s217 = smul.addr %s216, 9
      %s218 = smul.addr %s217, 4
      %s219 = scalar_lea.vmem %s0, %s218
      %p220 = scmp.lt.s32.totalorder %s16, 1
      %s221 = scalar_select %p220, %s16, 1
      %s222 = smul.addr %s221, 9
      %s223 = smul.addr %s222, 8
      %s224 = scalar_lea.vmem %s5, %s223
      %v225 = vld [vmem:[%s1] sm:$0xff]
      %v226 = vld [vmem:[%s1 + $0x8] sm:$0xff]
      %v227 = vadd.f32 %v225, %v226
      %v228 = vrot.slane %v227, 4
      %v229 = vadd.f32 %v227, %v228
      %v230 = vrot.slane %v229, 2
      %v231 = vadd.f32 %v229, %v230
      %v232 = vrot.slane %v231, 1
      %v233 = vadd.f32 %v231, %v232
      %v234 = vmul.f32 %v233, 0.0009765625
      %v235 = vld [vmem:[%s2] sm:$0xff]
      %v236 = vld [vmem:[%s2 + $0x8] sm:$0xff]
      %v237 = vadd.f32 %v235, %v236
      %v238 = vrot.slane %v237, 4
      %v239 = vadd.f32 %v237, %v238
      %v240 = vrot.slane %v239, 2
      %v241 = vadd.f32 %v239, %v240
      %v242 = vrot.slane %v241, 1
      %v243 = vadd.f32 %v241, %v242
      %v244 = vmul.f32 %v243, 0.0009765625
      %v245 = vmul.f32 %v234, %v234
      %v246 = vsub.f32 %v244, %v245
      %v247 = vmax.f32 %v246, 0.0
      %v248 = vadd.f32 %v247, 1e-05
      %v249 = vrsqrt.pop %v248
      %v250 = vld [vmem:[%s3] sm:$0x1]
      %v251 = vmul.f32 %v250, %v249
      %v252 = vld [vmem:[%s4] sm:$0x1]
      %v253 = vmul.f32 %v234, %v251
      %v254 = vsub.f32 %v252, %v253
      %v255 = vld [vmem:[%s219] sm:$0xf]
      %v256 = vld [vmem:[%s219 + $0x4] sm:$0xf]
      %v257 = vld [vmem:[%s219 + $0x8] sm:$0xf]
      %v258 = vld [vmem:[%s219 + $0xc] sm:$0xf]
      %v259 = vld [vmem:[%s219 + $0x10] sm:$0xf]
      %v260 = vld [vmem:[%s219 + $0x14] sm:$0xf]
      %v261 = vld [vmem:[%s219 + $0x18] sm:$0xf]
      %v262 = vld [vmem:[%s219 + $0x1c] sm:$0xf]
      %v263 = vld [vmem:[%s219 + $0x20] sm:$0xf]
      %v264 = vunpack.c.l.bf16 %v255
      %v265 = vunpack.c.l.bf16 %v256
      %v266 = vunpack.c.l.bf16 %v257
      %v267 = vunpack.c.l.bf16 %v258
      %v268 = vunpack.c.l.bf16 %v259
      %v269 = vunpack.c.l.bf16 %v260
      %v270 = vunpack.c.l.bf16 %v261
      %v271 = vunpack.c.l.bf16 %v262
      %v272 = vunpack.c.l.bf16 %v263
      %v274 = vlaneseq
      %v275 = vshrl.u32 %v274, 7
      %v276 = vsub.s32 0, %v275
      %v277 = vrot.slane %v251, %v276
      %v279 = vmul.f32 %v264, %v277
      %v280 = vmul.f32 %v265, %v277
      %v281 = vmul.f32 %v266, %v277
      %v282 = vmul.f32 %v267, %v277
      %v283 = vmul.f32 %v268, %v277
      %v284 = vmul.f32 %v269, %v277
      %v285 = vmul.f32 %v270, %v277
      %v286 = vmul.f32 %v271, %v277
      %v287 = vmul.f32 %v272, %v277
      %v289 = vlaneseq
      %v290 = vshrl.u32 %v289, 7
      %v291 = vsub.s32 0, %v290
      %v292 = vrot.slane %v254, %v291
      %v294 = vadd.f32 %v279, %v292
      %v295 = vadd.f32 %v280, %v292
      %v296 = vadd.f32 %v281, %v292
      %v297 = vadd.f32 %v282, %v292
      %v298 = vadd.f32 %v283, %v292
      %v299 = vadd.f32 %v284, %v292
      %v300 = vadd.f32 %v285, %v292
      %v301 = vadd.f32 %v286, %v292
      %v302 = vadd.f32 %v287, %v292
      %vm303 = vcmp.ge.f32.partialorder %v294, 0.0
      %vm304 = vcmp.ge.f32.partialorder %v295, 0.0
      %vm305 = vcmp.ge.f32.partialorder %v296, 0.0
      %vm306 = vcmp.ge.f32.partialorder %v297, 0.0
      %vm307 = vcmp.ge.f32.partialorder %v298, 0.0
      %vm308 = vcmp.ge.f32.partialorder %v299, 0.0
      %vm309 = vcmp.ge.f32.partialorder %v300, 0.0
      %vm310 = vcmp.ge.f32.partialorder %v301, 0.0
      %vm311 = vcmp.ge.f32.partialorder %v302, 0.0
      %v312 = vmul.f32 %v294, 0.2
      %v313 = vmul.f32 %v295, 0.2
      %v314 = vmul.f32 %v296, 0.2
      %v315 = vmul.f32 %v297, 0.2
      %v316 = vmul.f32 %v298, 0.2
      %v317 = vmul.f32 %v299, 0.2
      %v318 = vmul.f32 %v300, 0.2
      %v319 = vmul.f32 %v301, 0.2
      %v320 = vmul.f32 %v302, 0.2
      %v321 = vsel %vm303, %v294, %v312
      %v322 = vsel %vm304, %v295, %v313
      %v323 = vsel %vm305, %v296, %v314
      %v324 = vsel %vm306, %v297, %v315
      %v325 = vsel %vm307, %v298, %v316
      %v326 = vsel %vm308, %v299, %v317
      %v327 = vsel %vm309, %v300, %v318
      %v328 = vsel %vm310, %v301, %v319
      %v329 = vsel %vm311, %v302, %v320
      %330 = vst [vmem:[%s224] sm:$0xff] %v321
      %331 = vst [vmem:[%s224 + $0x8] sm:$0xff] %v322
      %332 = vst [vmem:[%s224 + $0x10] sm:$0xff] %v323
      %333 = vst [vmem:[%s224 + $0x18] sm:$0xff] %v324
      %334 = vst [vmem:[%s224 + $0x20] sm:$0xff] %v325
      %335 = vst [vmem:[%s224 + $0x28] sm:$0xff] %v326
      %336 = vst [vmem:[%s224 + $0x30] sm:$0xff] %v327
      %337 = vst [vmem:[%s224 + $0x38] sm:$0xff] %v328
      %338 = vst [vmem:[%s224 + $0x40] sm:$0xff] %v329
      %p339 = scmp.lt.s32.totalorder %s16, 1
      %s340 = scalar_select %p339, %s16, 1
      %s341 = smul.addr %s340, 9
      %s342 = smul.addr %s341, 8
      %s343 = scalar_lea.vmem %s5, %s342
      // Predicated region
      $region41: #{dcgan_conv_forward.3} parent=39 // pred_check
        %p344 = pneg %p144
      $region42: #{dcgan_conv_forward.3} parent=39 // pred_check_branch
        %346 = sbr.rel (%p344) target = $region44
      $region43: #{dcgan_conv_forward.3} parent=39 // pred_region
        _
      $region44: #{dcgan_conv_forward.3} parent=39 // pred_fallthru
        _
    $region40: #{dcgan_conv_forward.3} parent=5 // pred_fallthru
      _
    %p347 = scmp.le.s32.totalorder 2, %s11
    // Predicated region
    $region45: #{dcgan_conv_forward.3} parent=5 // pred_check
      %p348 = pneg %p347
    $region46: #{dcgan_conv_forward.3} parent=5 // pred_check_branch
      %350 = sbr.rel (%p348) target = $region48
    $region47: #{dcgan_conv_forward.3} parent=5 // pred_region
      %s351 = ssub.s32 %s11, 2
      // Predicated region
      $region49: #{dcgan_conv_forward.3} parent=47 // pred_check
        %p352 = pneg %p150
      $region50: #{dcgan_conv_forward.3} parent=47 // pred_check_branch
        %354 = sbr.rel (%p352) target = $region52
      $region51: #{dcgan_conv_forward.3} parent=47 // pred_region
        %p355 = scmp.lt.s32.totalorder %s17, 1
        %s356 = scalar_select %p355, %s17, 1
        %s357 = smul.addr %s356, 9
        %s358 = smul.addr %s357, 8
        %s359 = scalar_lea.vmem %s5, %s358
      $region52: #{dcgan_conv_forward.3} parent=47 // pred_fallthru
        _
    $region48: #{dcgan_conv_forward.3} parent=5 // pred_fallthru
      _
  $region6: #{dcgan_conv_forward.3} parent=0 // loop_footer
    %s15 = sadd.s32 1, %s11
  $region7: #{dcgan_conv_forward.3} parent=0 // loop_footer_branch
    %10 = sbr.rel target = $region3
  $region8: #{dcgan_conv_forward.3} parent=0 // loop_exit
    _

// kernel: dcgan_conv_forward.2
$region0: #{dcgan_conv_forward.2}
  #allocation0 [shape = 'u32[]', space=smem, size = 0x4, offset = 0x4, fixed_abs, tag = 'smem constant byte address 0x4 - core index']
  #allocation1 [shape = 'u32[144,128]{1,0:T(1,128)}', space=vmem, size = 0x12000, scoped, tag = 'internal scratch']
  %s0 = inlined_call_operand.vmem [shape: bf16[2,4,88,8], index: 0, kind: input, shape index: {}]
  %s1 = inlined_call_operand.vmem [shape: bf16[4,4,8,128], index: 1, kind: input, shape index: {}]
  %s2 = inlined_call_operand.vmem [shape: f32[72,1], index: 2, kind: input, shape index: {}]
  %s3 = inlined_call_operand.vmem [shape: bf16[2,72,128], index: 3, kind: output, shape index: {0}]
  %s4 = inlined_call_operand.vmem [shape: f32[16,128], index: 4, kind: output, shape index: {1}]
  %s5 = inlined_call_operand.vmem [shape: f32[16,128], index: 5, kind: output, shape index: {2}]
  %6 = xla_tuple %s3, %s4, %s5
  %s7 = sld [smem:[#allocation0]]
  $region61: #{dcgan_conv_forward.2} parent=0
    _
  %s9 = ssub.s32 1, %s7
  %s10 = scalar_select 0, %s9, %s7
  loop: start=0, step=1, limit=4
  $region2: #{dcgan_conv_forward.2} parent=0 // loop_pre_header
    _
  $region3: #{dcgan_conv_forward.2} parent=0 // loop_header
    %s12 = sphi 0, %s16
    %p13 = scmp.ge.s32.totalorder %s12, 4
    %s22 = sphi 0, %s24
    %s25 = sphi 0, %s22
    %s26 = sphi 0, %s25
    %s42 = sphi 0, %s26
    %s46 = sphi 0, %s46
    %s48 = sphi 0, %s46
    %s49 = sphi 0, %s48
    %s63 = sphi 0, %s49
    %s67 = sphi 0, %s67
    %s69 = sphi 0, %s67
    %s70 = sphi 0, %s69
    %s84 = sphi 0, %s70
    %s90 = sphi 0, %s92
    %s93 = sphi 0, %s90
    %s94 = sphi 0, %s93
    %s110 = sphi 0, %s94
    %s116 = sphi 0, %s118
    %s119 = sphi 0, %s116
    %s120 = sphi 0, %s119
    %s136 = sphi 0, %s120
    %s142 = sphi 0, %s144
    %s145 = sphi 0, %s142
    %s146 = sphi 0, %s145
    %s162 = sphi 0, %s146
  $region4: #{dcgan_conv_forward.2} parent=0 // loop_header_branch
    %15 = sbr.rel (%p13) target = $region8
  $region5: #{dcgan_conv_forward.2} parent=0 // loop_body
    %s17 = ssub.s32 %s12, 1
    %s18 = ssub.s32 %s12, 2
    %s19 = sadd.s32 %s12, 1
    %s20 = ssub.s32 %s12, %s19
    %p21 = scmp.eq.s32.totalorder %s20, 0
    %s23 = sadd.s32 %s22, 1
    %s24 = scalar_select %p21, %s22, %s23
    %p27 = pneg %p21
    %p28 = scmp.eq.s32.totalorder %s12, 1
    %p29 = por %p27, %p28
    %p30 = scmp.ne.s32.totalorder %s22, %s25
    %p31 = scmp.eq.s32.totalorder %s12, 0
    %p32 = por %p30, %p31
    %p33 = scmp.ne.s32.totalorder %s22, %s25
    %p34 = scmp.eq.s32.totalorder %s17, 1
    %p35 = por %p33, %p34
    %p36 = scmp.ne.s32.totalorder %s25, %s26
    %p37 = scmp.eq.s32.totalorder %s17, 0
    %p38 = por %p36, %p37
    %p39 = scmp.ne.s32.totalorder %s25, %s26
    %p40 = scmp.eq.s32.totalorder %s18, 1
    %p41 = por %p39, %p40
    %p43 = scmp.ne.s32.totalorder %s26, %s42
    %p44 = scmp.eq.s32.totalorder %s18, 0
    %p45 = por %p43, %p44
    %s47 = sadd.s32 %s46, 1
    %p50 = scmp.eq.s32.totalorder %s12, 1
    %p51 = scmp.ne.s32.totalorder %s46, %s48
    %p52 = scmp.eq.s32.totalorder %s12, 0
    %p53 = por %p51, %p52
    %p54 = scmp.ne.s32.totalorder %s46, %s48
    %p55 = scmp.eq.s32.totalorder %s17, 1
    %p56 = por %p54, %p55
    %p57 = scmp.ne.s32.totalorder %s48, %s49
    %p58 = scmp.eq.s32.totalorder %s17, 0
    %p59 = por %p57, %p58
    %p60 = scmp.ne.s32.totalorder %s48, %s49
    %p61 = scmp.eq.s32.totalorder %s18, 1
    %p62 = por %p60, %p61
    %p64 = scmp.ne.s32.totalorder %s49, %s63
    %p65 = scmp.eq.s32.totalorder %s18, 0
    %p66 = por %p64, %p65
    %s68 = sadd.s32 %s67, 1
    %p71 = scmp.eq.s32.totalorder %s12, 1
    %p72 = scmp.ne.s32.totalorder %s67, %s69
    %p73 = scmp.eq.s32.totalorder %s12, 0
    %p74 = por %p72, %p73
    %p75 = scmp.ne.s32.totalorder %s67, %s69
    %p76 = scmp.eq.s32.totalorder %s17, 1
    %p77 = por %p75, %p76
    %p78 = scmp.ne.s32.totalorder %s69, %s70
    %p79 = scmp.eq.s32.totalorder %s17, 0
    %p80 = por %p78, %p79
    %p81 = scmp.ne.s32.totalorder %s69, %s70
    %p82 = scmp.eq.s32.totalorder %s18, 1
    %p83 = por %p81, %p82
    %p85 = scmp.ne.s32.totalorder %s70, %s84
    %p86 = scmp.eq.s32.totalorder %s18, 0
    %p87 = por %p85, %p86
    %s88 = ssub.s32 %s12, %s19
    %p89 = scmp.eq.s32.totalorder %s88, 0
    %s91 = sadd.s32 %s90, 1
    %s92 = scalar_select %p89, %s90, %s91
    %p95 = pneg %p89
    %p96 = scmp.eq.s32.totalorder %s12, 1
    %p97 = por %p95, %p96
    %p98 = scmp.ne.s32.totalorder %s90, %s93
    %p99 = scmp.eq.s32.totalorder %s12, 0
    %p100 = por %p98, %p99
    %p101 = scmp.ne.s32.totalorder %s90, %s93
    %p102 = scmp.eq.s32.totalorder %s17, 1
    %p103 = por %p101, %p102
    %p104 = scmp.ne.s32.totalorder %s93, %s94
    %p105 = scmp.eq.s32.totalorder %s17, 0
    %p106 = por %p104, %p105
    %p107 = scmp.ne.s32.totalorder %s93, %s94
    %p108 = scmp.eq.s32.totalorder %s18, 1
    %p109 = por %p107, %p108
    %p111 = scmp.ne.s32.totalorder %s94, %s110
    %p112 = scmp.eq.s32.totalorder %s18, 0
    %p113 = por %p111, %p112
    %s114 = ssub.s32 %s12, %s19
    %p115 = scmp.eq.s32.totalorder %s114, 0
    %s117 = sadd.s32 %s116, 1
    %s118 = scalar_select %p115, %s116, %s117
    %p121 = pneg %p115
    %p122 = scmp.eq.s32.totalorder %s12, 1
    %p123 = por %p121, %p122
    %p124 = scmp.ne.s32.totalorder %s116, %s119
    %p125 = scmp.eq.s32.totalorder %s12, 0
    %p126 = por %p124, %p125
    %p127 = scmp.ne.s32.totalorder %s116, %s119
    %p128 = scmp.eq.s32.totalorder %s17, 1
    %p129 = por %p127, %p128
    %p130 = scmp.ne.s32.totalorder %s119, %s120
    %p131 = scmp.eq.s32.totalorder %s17, 0
    %p132 = por %p130, %p131
    %p133 = scmp.ne.s32.totalorder %s119, %s120
    %p134 = scmp.eq.s32.totalorder %s18, 1
    %p135 = por %p133, %p134
    %p137 = scmp.ne.s32.totalorder %s120, %s136
    %p138 = scmp.eq.s32.totalorder %s18, 0
    %p139 = por %p137, %p138
    %s140 = ssub.s32 %s12, %s19
    %p141 = scmp.eq.s32.totalorder %s140, 0
    %s143 = sadd.s32 %s142, 1
    %s144 = scalar_select %p141, %s142, %s143
    %p147 = pneg %p141
    %p148 = scmp.eq.s32.totalorder %s12, 1
    %p149 = por %p147, %p148
    %p150 = scmp.ne.s32.totalorder %s142, %s145
    %p151 = scmp.eq.s32.totalorder %s12, 0
    %p152 = por %p150, %p151
    %p153 = scmp.ne.s32.totalorder %s142, %s145
    %p154 = scmp.eq.s32.totalorder %s17, 1
    %p155 = por %p153, %p154
    %p156 = scmp.ne.s32.totalorder %s145, %s146
    %p157 = scmp.eq.s32.totalorder %s17, 0
    %p158 = por %p156, %p157
    %p159 = scmp.ne.s32.totalorder %s145, %s146
    %p160 = scmp.eq.s32.totalorder %s18, 1
    %p161 = por %p159, %p160
    %p163 = scmp.ne.s32.totalorder %s146, %s162
    %p164 = scmp.eq.s32.totalorder %s18, 0
    %p165 = por %p163, %p164
    %p166 = scmp.le.s32.totalorder 1, %s12
    %p167 = scmp.lt.s32.totalorder %s12, 3
    %p168 = pnand %p166, %p167
    %p169 = pneg %p168
    // Predicated region
    $region9: #{dcgan_conv_forward.2} parent=5 // pred_check
      _
    $region10: #{dcgan_conv_forward.2} parent=5 // pred_check_branch
      %171 = sbr.rel (%p168) target = $region12
    $region11: #{dcgan_conv_forward.2} parent=5 // pred_region
      %s172 = ssub.s32 %s12, 1
      // Predicated region
      $region13: #{dcgan_conv_forward.2} parent=11 // pred_check
        %p173 = pneg %p59
      $region14: #{dcgan_conv_forward.2} parent=11 // pred_check_branch
        %175 = sbr.rel (%p173) target = $region16
      $region15: #{dcgan_conv_forward.2} parent=11 // pred_region
        _
      $region16: #{dcgan_conv_forward.2} parent=11 // pred_fallthru
        _
      // Predicated region
      $region17: #{dcgan_conv_forward.2} parent=11 // pred_check
        %p176 = pneg %p80
      $region18: #{dcgan_conv_forward.2} parent=11 // pred_check_branch
        %178 = sbr.rel (%p176) target = $region20
      $region19: #{dcgan_conv_forward.2} parent=11 // pred_region
        _
      $region20: #{dcgan_conv_forward.2} parent=11 // pred_fallthru
        _
    $region12: #{dcgan_conv_forward.2} parent=5 // pred_fallthru
      _
    %p179 = scmp.lt.s32.totalorder %s12, 2
    // Predicated region
    $region21: #{dcgan_conv_forward.2} parent=5 // pred_check
      %p180 = pneg %p179
    $region22: #{dcgan_conv_forward.2} parent=5 // pred_check_branch
      %182 = sbr.rel (%p180) target = $region24
    $region23: #{dcgan_conv_forward.2} parent=5 // pred_region
      // Predicated region
      $region25: #{dcgan_conv_forward.2} parent=23 // pred_check
        %p183 = pneg %p32
      $region26: #{dcgan_conv_forward.2} parent=23 // pred_check_branch
        %185 = sbr.rel (%p183) target = $region28
      $region27: #{dcgan_conv_forward.2} parent=23 // pred_region
        %p186 = scmp.lt.s32.totalorder %s12, 1
        %s187 = scalar_select %p186, %s12, 1
        %s188 = smul.addr %s187, 44
        %s189 = smul.addr %s188, 4
        %s190 = scalar_lea.vmem %s0, %s189
      $region28: #{dcgan_conv_forward.2} parent=23 // pred_fallthru
        _
    $region24: #{dcgan_conv_forward.2} parent=5 // pred_fallthru
      _
    %p191 = scmp.le.s32.totalorder 1, %s12
    %p192 = scmp.lt.s32.totalorder %s12, 3
    %p193 = pnand %p191, %p192
    %p194 = pneg %p193
    // Predicated region
    $region29: #{dcgan_conv_forward.2} parent=5 // pred_check
      _
    $region30: #{dcgan_conv_forward.2} parent=5 // pred_check_branch
      %196 = sbr.rel (%p193) target = $region32
    $region31: #{dcgan_conv_forward.2} parent=5 // pred_region
      %s197 = ssub.s32 %s12, 1
      %p198 = scmp.lt.s32.totalorder %s17, 1
      %s199 = scalar_select %p198, %s17, 1
      %s200 = smul.addr %s199, 44
      %s201 = smul.addr %s200, 4
      %s202 = scalar_lea.vmem %s0, %s201
      %p203 = pneg %p38
      %p204 = pneg %p35
      %p205 = pneg %p59
      %p206 = pneg %p56
      %p207 = pneg %p80
      %p208 = pneg %p77
      %p209 = pneg %p106
      %p210 = pneg %p103
      %p211 = scmp.lt.s32.totalorder %s17, 1
      %s212 = scalar_select %p211, %s17, 1
      %s213 = smul.addr %s212, 9
      %s214 = smul.addr %s213, 4
      %s215 = scalar_lea.vmem %s3, %s214
      %p216 = pneg %p132
      %p217 = pneg %p129
      %p218 = scmp.lt.s32.totalorder %s17, 1
      %s219 = scalar_select %p218, %s17, 1
      %s220 = smul.addr %s219, 8
      %s221 = scalar_lea.vmem %s4, %s220
      %p222 = pneg %p158
      %p223 = pneg %p155
      %p224 = scmp.lt.s32.totalorder %s17, 1
      %s225 = scalar_select %p224, %s17, 1
      %s226 = smul.addr %s225, 8
      %s227 = scalar_lea.vmem %s5, %s226
      %p228 = scmp.lt.s32.totalorder %s17, 1
      %s229 = scalar_select %p228, %s17, 1
      %s230 = smul.addr %s229, 44
      %s231 = smul.addr %s230, 4
      %s232 = scalar_lea.vmem %s0, %s231
      %p233 = scmp.lt.s32.totalorder %s17, 1
      %s234 = scalar_select %p233, %s17, 1
      %s235 = smul.addr %s234, 9
      %s236 = smul.addr %s235, 4
      %s237 = scalar_lea.vmem %s3, %s236
      %p238 = scmp.lt.s32.totalorder %s17, 1
      %s239 = scalar_select %p238, %s17, 1
      %s240 = smul.addr %s239, 8
      %s241 = scalar_lea.vmem %s4, %s240
      %p242 = scmp.lt.s32.totalorder %s17, 1
      %s243 = scalar_select %p242, %s17, 1
      %s244 = smul.addr %s243, 8
      %s245 = scalar_lea.vmem %s5, %s244
      %v247 = vld [vmem:[%s232] sm:$0xf]
      %v248 = vld [vmem:[%s232 + $0x4] sm:$0xf]
      %v249 = vld [vmem:[%s232 + $0x8] sm:$0xf]
      %v250 = vld [vmem:[%s232 + $0xc] sm:$0xf]
      %v251 = vld [vmem:[%s232 + $0x10] sm:$0xf]
      %v252 = vld [vmem:[%s232 + $0x14] sm:$0xf]
      %v253 = vld [vmem:[%s232 + $0x18] sm:$0xf]
      %v254 = vld [vmem:[%s232 + $0x1c] sm:$0xf]
      %v255 = vld [vmem:[%s232 + $0x20] sm:$0xf]
      %v256 = vld [vmem:[%s1] sm:$0xf]
      %s257 = scalar_lea.vmem %s232, 44
      %v258 = vld [vmem:[%s257] sm:$0xf]
      %v259 = vld [vmem:[%s257 + $0x4] sm:$0xf]
      %v260 = vld [vmem:[%s257 + $0x8] sm:$0xf]
      %v261 = vld [vmem:[%s257 + $0xc] sm:$0xf]
      %v262 = vld [vmem:[%s257 + $0x10] sm:$0xf]
      %v263 = vld [vmem:[%s257 + $0x14] sm:$0xf]
      %v264 = vld [vmem:[%s257 + $0x18] sm:$0xf]
      %v265 = vld [vmem:[%s257 + $0x1c] sm:$0xf]
      %v266 = vld [vmem:[%s257 + $0x20] sm:$0xf]
      %s267 = scalar_lea.vmem %s1, 4
      %v268 = vld [vmem:[%s267] sm:$0xf]
      %v278 = vunpack.c.l.b16 %v258
      %v279 = vunpack.c.l.b16 %v259
      %v280 = vunpack.c.l.b16 %v260
      %v281 = vunpack.c.l.b16 %v261
      %v282 = vunpack.c.l.b16 %v262
      %v283 = vunpack.c.l.b16 %v263
      %v284 = vunpack.c.l.b16 %v264
      %v285 = vunpack.c.l.b16 %v265
      %v286 = vunpack.c.l.b16 %v266
      %v287 = vpack.c.b16 %v279, %v278
      %v288 = vpack.c.b16 %v281, %v280
      %v289 = vpack.c.b16 %v283, %v282
      %v290 = vpack.c.b16 %v285, %v284
      %v291 = vpack.c.b16 %v286, %v286
      %vm292 = vcmask 64512
      %v294 = vsel %vm292, %v287, 0
      %v297 = vsel %vm292, %v288, 0
      %v300 = vsel %vm292, %v289, 0
      %v303 = vsel %vm292, %v290, 0
      %v306 = vsel %vm292, %v291, 0
      %vm308 = vcmask 1043456
      %v310 = vsel %vm308, %v268, 0
      %312 = vmatprep.subr.bf16.mxu0 0
      %313 = vmatpush1.bf16.msra.mxu0 %v310
      %314 = vmatprep.subr.bf16.mxu0 0
      %315 = vmatpush1.bf16.msra.mxu0 0
      %316 = vmatprep.subr.bf16.mxu0 0
      %317 = vmatpush1.bf16.msra.mxu0 0
      %318 = vmatprep.subr.bf16.mxu0 0
      %319 = vmatpush1.bf16.msra.mxu0 0
      %320 = vmatprep.subr.bf16.mxu0 0
      %321 = vmatpush1.bf16.msra.mxu0 0
      %322 = vmatprep.subr.bf16.mxu0 0
      %323 = vmatpush1.bf16.msra.mxu0 0
      %324 = vmatprep.subr.bf16.mxu0 0
      %325 = vmatpush1.bf16.msra.mxu0 0
      %326 = vmatprep.subr.bf16.mxu0 0
      %327 = vmatpush1.bf16.msra.mxu0 0
      %328 = vmatprep.subr.bf16.mxu0 0
      %329 = vmatpush1.bf16.msra.mxu0 0
      %330 = vmatprep.subr.bf16.mxu0 0
      %331 = vmatpush1.bf16.msra.mxu0 0
      %332 = vmatprep.subr.bf16.mxu0 0
      %333 = vmatpush1.bf16.msra.mxu0 0
      %334 = vmatprep.subr.bf16.mxu0 0
      %335 = vmatpush1.bf16.msra.mxu0 0
      %336 = vmatprep.subr.bf16.mxu0 0
      %337 = vmatpush1.bf16.msra.mxu0 0
      %338 = vmatprep.subr.bf16.mxu0 0
      %339 = vmatpush1.bf16.msra.mxu0 0
      %340 = vmatprep.subr.bf16.mxu0 0
      %341 = vmatpush1.bf16.msra.mxu0 0
      %342 = vmatprep.subr.bf16.mxu0 0
      %343 = vmatpush1.bf16.msra.mxu0 0
      %344 = vmatprep.mubr.bf16.mxu0 0
      %345 = vmatmul.mubr.bf16.gmra.mrb[0].mxu0 %v294
      %v346 = vpop.f32.mrb[0].mxu0
      %v347 = vadd.f32 0.0, %v346
      %v348 = vpop.f32.mrb[0].mxu0
      %v349 = vpop.f32.mrb[0].mxu0
      %v350 = vadd.f32 0.0, %v349
      %v351 = vpop.f32.mrb[0].mxu0
      %352 = vmatprep.mubr.bf16.mxu0 0
      %353 = vmatmul.mubr.bf16.gmra.mrb[0].mxu0 %v297
      %v354 = vpop.f32.mrb[0].mxu0
      %v355 = vadd.f32 0.0, %v354
      %v356 = vpop.f32.mrb[0].mxu0
      %v357 = vpop.f32.mrb[0].mxu0
      %v358 = vadd.f32 0.0, %v357
      %v359 = vpop.f32.mrb[0].mxu0
      %360 = vmatprep.mubr.bf16.mxu0 0
      %361 = vmatmul.mubr.bf16.gmra.mrb[0].mxu0 %v300
      %v362 = vpop.f32.mrb[0].mxu0
      %v363 = vadd.f32 0.0, %v362
      %v364 = vpop.f32.mrb[0].mxu0
      %v365 = vpop.f32.mrb[0].mxu0
      %v366 = vadd.f32 0.0, %v365
      %v367 = vpop.f32.mrb[0].mxu0
      %368 = vmatprep.mubr.bf16.mxu0 0
      %369 = vmatmul.mubr.bf16.gmra.mrb[0].mxu0 %v303
      %v370 = vpop.f32.mrb[0].mxu0
      %v371 = vadd.f32 0.0, %v370
      %v372 = vpop.f32.mrb[0].mxu0
      %v373 = vpop.f32.mrb[0].mxu0
      %v374 = vadd.f32 0.0, %v373
      %v375 = vpop.f32.mrb[0].mxu0
      %376 = vmatprep.mubr.bf16.mxu0 0
      %377 = vmatmul.mubr.bf16.gmra.mrb[0].mxu0 %v306
      %v378 = vpop.f32.mrb[0].mxu0
      %v379 = vadd.f32 0.0, %v378
      %v380 = vpop.f32.mrb[0].mxu0
      %v381 = vpop.f32.mrb[0].mxu0
      %v382 = vpop.f32.mrb[0].mxu0
      %383 = vdwg.mxu0
      %v393 = vunpack.c.l.b16 %v247
      %v394 = vunpack.c.l.b16 %v248
      %v395 = vunpack.c.l.b16 %v249
      %v396 = vunpack.c.l.b16 %v250
      %v397 = vunpack.c.l.b16 %v251
      %v398 = vunpack.c.l.b16 %v252
      %v399 = vunpack.c.l.b16 %v253
      %v400 = vunpack.c.l.b16 %v254
      %v401 = vunpack.c.l.b16 %v255
      %v402 = vpack.c.b16 %v394, %v393
      %v403 = vpack.c.b16 %v396, %v395
      %v404 = vpack.c.b16 %v398, %v397
      %v405 = vpack.c.b16 %v400, %v399
      %v406 = vpack.c.b16 %v401, %v401
      %v408 = vsel %vm292, %v402, 0
      %v411 = vsel %vm292, %v403, 0
      %v414 = vsel %vm292, %v404, 0
      %v417 = vsel %vm292, %v405, 0
      %v420 = vsel %vm292, %v406, 0
      %v423 = vsel %vm308, %v256, 0
      %425 = vmatprep.subr.bf16.mxu0 0
      %426 = vmatpush1.bf16.msra.mxu0 %v423
      %427 = vmatprep.subr.bf16.mxu0 0
      %428 = vmatpush1.bf16.msra.mxu0 0
      %429 = vmatprep.subr.bf16.mxu0 0
      %430 = vmatpush1.bf16.msra.mxu0 0
      %431 = vmatprep.subr.bf16.mxu0 0
      %432 = vmatpush1.bf16.msra.mxu0 0
      %433 = vmatprep.subr.bf16.mxu0 0
      %434 = vmatpush1.bf16.msra.mxu0 0
      %435 = vmatprep.subr.bf16.mxu0 0
      %436 = vmatpush1.bf16.msra.mxu0 0
      %437 = vmatprep.subr.bf16.mxu0 0
      %438 = vmatpush1.bf16.msra.mxu0 0
      %439 = vmatprep.subr.bf16.mxu0 0
      %440 = vmatpush1.bf16.msra.mxu0 0
      %441 = vmatprep.subr.bf16.mxu0 0
      %442 = vmatpush1.bf16.msra.mxu0 0
      %443 = vmatprep.subr.bf16.mxu0 0
      %444 = vmatpush1.bf16.msra.mxu0 0
      %445 = vmatprep.subr.bf16.mxu0 0
      %446 = vmatpush1.bf16.msra.mxu0 0
      %447 = vmatprep.subr.bf16.mxu0 0
      %448 = vmatpush1.bf16.msra.mxu0 0
      %449 = vmatprep.subr.bf16.mxu0 0
      %450 = vmatpush1.bf16.msra.mxu0 0
      %451 = vmatprep.subr.bf16.mxu0 0
      %452 = vmatpush1.bf16.msra.mxu0 0
      %453 = vmatprep.subr.bf16.mxu0 0
      %454 = vmatpush1.bf16.msra.mxu0 0
      %455 = vmatprep.subr.bf16.mxu0 0
      %456 = vmatpush1.bf16.msra.mxu0 0
      %457 = vmatprep.mubr.bf16.mxu0 0
      %458 = vmatmul.mubr.bf16.gmra.mrb[0].mxu0 %v408
      %v459 = vpop.f32.mrb[0].mxu0
      %v460 = vadd.f32 %v347, %v459
      %v461 = vpop.f32.mrb[0].mxu0
      %v462 = vpop.f32.mrb[0].mxu0
      %v463 = vadd.f32 %v350, %v462
      %v464 = vpop.f32.mrb[0].mxu0
      %465 = vmatprep.mubr.bf16.mxu0 0
      %466 = vmatmul.mubr.bf16.gmra.mrb[0].mxu0 %v411
      %v467 = vpop.f32.mrb[0].mxu0
      %v468 = vadd.f32 %v355, %v467
      %v469 = vpop.f32.mrb[0].mxu0
      %v470 = vpop.f32.mrb[0].mxu0
      %v471 = vadd.f32 %v358, %v470
      %v472 = vpop.f32.mrb[0].mxu0
      %473 = vmatprep.mubr.bf16.mxu0 0
      %474 = vmatmul.mubr.bf16.gmra.mrb[0].mxu0 %v414
      %v475 = vpop.f32.mrb[0].mxu0
      %v476 = vadd.f32 %v363, %v475
      %v477 = vpop.f32.mrb[0].mxu0
      %v478 = vpop.f32.mrb[0].mxu0
      %v479 = vadd.f32 %v366, %v478
      %v480 = vpop.f32.mrb[0].mxu0
      %481 = vmatprep.mubr.bf16.mxu0 0
      %482 = vmatmul.mubr.bf16.gmra.mrb[0].mxu0 %v417
      %v483 = vpop.f32.mrb[0].mxu0
      %v484 = vadd.f32 %v371, %v483
      %v485 = vpop.f32.mrb[0].mxu0
      %v486 = vpop.f32.mrb[0].mxu0
      %v487 = vadd.f32 %v374, %v486
      %v488 = vpop.f32.mrb[0].mxu0
      %489 = vmatprep.mubr.bf16.mxu0 0
      %490 = vmatmul.mubr.bf16.gmra.mrb[0].mxu0 %v420
      %v491 = vpop.f32.mrb[0].mxu0
      %v492 = vadd.f32 %v379, %v491
      %v493 = vpop.f32.mrb[0].mxu0
      %v494 = vpop.f32.mrb[0].mxu0
      %v495 = vpop.f32.mrb[0].mxu0
      %496 = vdwg.mxu0
      %v497 = vld [vmem:[%s232] sm:$0xf]
      %v498 = vld [vmem:[%s232 + $0x4] sm:$0xf]
      %v499 = vld [vmem:[%s232 + $0x8] sm:$0xf]
      %v500 = vld [vmem:[%s232 + $0xc] sm:$0xf]
      %v501 = vld [vmem:[%s232 + $0x10] sm:$0xf]
      %v502 = vld [vmem:[%s232 + $0x14] sm:$0xf]
      %v503 = vld [vmem:[%s232 + $0x18] sm:$0xf]
      %v504 = vld [vmem:[%s232 + $0x1c] sm:$0xf]
      %v505 = vld [vmem:[%s232 + $0x20] sm:$0xf]
      %v506 = vld [vmem:[%s232 + $0x24] sm:$0x1]
      %s507 = scalar_lea.vmem %s1, 8
      %v508 = vld [vmem:[%s507] sm:$0xf]
      %v519 = vunpack.c.l.b16 %v497
      %v520 = vunpack.c.l.b16 %v498
      %v521 = vunpack.c.l.b16 %v499
      %v522 = vunpack.c.l.b16 %v500
      %v523 = vunpack.c.l.b16 %v501
      %v524 = vunpack.c.l.b16 %v502
      %v525 = vunpack.c.l.b16 %v503
      %v526 = vunpack.c.l.b16 %v504
      %v527 = vunpack.c.l.b16 %v505
      %v528 = vunpack.c.l.b16 %v506
      %v529 = vpack.c.b16 %v520, %v519
      %v530 = vpack.c.b16 %v522, %v521
      %v531 = vpack.c.b16 %v524, %v523
      %v532 = vpack.c.b16 %v526, %v525
      %v533 = vpack.c.b16 %v528, %v527
      %vm534 = vsmask.f32 7424
      %v536 = vshrl.u32 %v529, 16
      %v538 = vshll.u32 %v529, 16
      %v540 = vrot.slane %v538, 1
      %v541 = vor.u32 %v536, %v540
      %v543 = vshll.u32 %v530, 16
      %v545 = vrot.slane %v543, 1
      %v546 = vsel %vm534, %v541, %v545
      %v547 = vshrl.u32 %v530, 16
      %v549 = vor.u32 %v547, %v545
      %v551 = vshll.u32 %v531, 16
      %v553 = vrot.slane %v551, 1
      %v554 = vsel %vm534, %v549, %v553
      %v555 = vshrl.u32 %v531, 16
      %v557 = vor.u32 %v555, %v553
      %v559 = vshll.u32 %v532, 16
      %v561 = vrot.slane %v559, 1
      %v562 = vsel %vm534, %v557, %v561
      %v563 = vshrl.u32 %v532, 16
      %v565 = vor.u32 %v563, %v561
      %v567 = vshll.u32 %v533, 16
      %v569 = vrot.slane %v567, 1
      %v570 = vsel %vm534, %v565, %v569
      %v571 = vshrl.u32 %v533, 16
      %v573 = vor.u32 %v571, %v569
      %v575 = vsel %vm292, %v546, 0
      %v578 = vsel %vm292, %v554, 0
      %v581 = vsel %vm292, %v562, 0
      %v584 = vsel %vm292, %v570, 0
      %v587 = vsel %vm292, %v573, 0
      %v590 = vsel %vm308, %v508, 0
      %592 = vmatprep.subr.bf16.mxu0 0
      %593 = vmatpush1.bf16.msra.mxu0 %v590
      %594 = vmatprep.subr.bf16.mxu0 0
      %595 = vmatpush1.bf16.msra.mxu0 0
      %596 = vmatprep.subr.bf16.mxu0 0
      %597 = vmatpush1.bf16.msra.mxu0 0
      %598 = vmatprep.subr.bf16.mxu0 0
      %599 = vmatpush1.bf16.msra.mxu0 0
      %600 = vmatprep.subr.bf16.mxu0 0
      %601 = vmatpush1.bf16.msra.mxu0 0
      %602 = vmatprep.subr.bf16.mxu0 0
      %603 = vmatpush1.bf16.msra.mxu0 0
      %604 = vmatprep.subr.bf16.mxu0 0
      %605 = vmatpush1.bf16.msra.mxu0 0
      %606 = vmatprep.subr.bf16.mxu0 0
      %607 = vmatpush1.bf16.msra.mxu0 0
      %608 = vmatprep.subr.bf16.mxu0 0
      %609 = vmatpush1.bf16.msra.mxu0 0
      %610 = vmatprep.subr.bf16.mxu0 0
      %611 = vmatpush1.bf16.msra.mxu0 0
      %612 = vmatprep.subr.bf16.mxu0 0
      %613 = vmatpush1.bf16.msra.mxu0 0
      %614 = vmatprep.subr.bf16.mxu0 0
      %615 = vmatpush1.bf16.msra.mxu0 0
      %616 = vmatprep.subr.bf16.mxu0 0
      %617 = vmatpush1.bf16.msra.mxu0 0
      %618 = vmatprep.subr.bf16.mxu0 0
      %619 = vmatpush1.bf16.msra.mxu0 0
      %620 = vmatprep.subr.bf16.mxu0 0
      %621 = vmatpush1.bf16.msra.mxu0 0
      %622 = vmatprep.subr.bf16.mxu0 0
      %623 = vmatpush1.bf16.msra.mxu0 0
      %624 = vmatprep.mubr.bf16.mxu0 0
      %625 = vmatmul.mubr.bf16.gmra.mrb[0].mxu0 %v575
      %v626 = vpop.f32.mrb[0].mxu0
      %v627 = vadd.f32 0.0, %v626
      %v628 = vpop.f32.mrb[0].mxu0
      %v629 = vpop.f32.mrb[0].mxu0
      %v630 = vadd.f32 0.0, %v629
      %v631 = vpop.f32.mrb[0].mxu0
      %632 = vmatprep.mubr.bf16.mxu0 0
      %633 = vmatmul.mubr.bf16.gmra.mrb[0].mxu0 %v578
      %v634 = vpop.f32.mrb[0].mxu0
      %v635 = vadd.f32 0.0, %v634
      %v636 = vpop.f32.mrb[0].mxu0
      %v637 = vpop.f32.mrb[0].mxu0
      %v638 = vadd.f32 0.0, %v637
      %v639 = vpop.f32.mrb[0].mxu0
      %640 = vmatprep.mubr.bf16.mxu0 0
      %641 = vmatmul.mubr.bf16.gmra.mrb[0].mxu0 %v581
      %v642 = vpop.f32.mrb[0].mxu0
      %v643 = vadd.f32 0.0, %v642
      %v644 = vpop.f32.mrb[0].mxu0
      %v645 = vpop.f32.mrb[0].mxu0
      %v646 = vadd.f32 0.0, %v645
      %v647 = vpop.f32.mrb[0].mxu0
      %648 = vmatprep.mubr.bf16.mxu0 0
      %649 = vmatmul.mubr.bf16.gmra.mrb[0].mxu0 %v584
      %v650 = vpop.f32.mrb[0].mxu0
      %v651 = vadd.f32 0.0, %v650
      %v652 = vpop.f32.mrb[0].mxu0
      %v653 = vpop.f32.mrb[0].mxu0
      %v654 = vadd.f32 0.0, %v653
      %v655 = vpop.f32.mrb[0].mxu0
      %656 = vmatprep.mubr.bf16.mxu0 0
      %657 = vmatmul.mubr.bf16.gmra.mrb[0].mxu0 %v587
      %v658 = vpop.f32.mrb[0].mxu0
      %v659 = vadd.f32 0.0, %v658
      %v660 = vpop.f32.mrb[0].mxu0
      %v661 = vpop.f32.mrb[0].mxu0
      %v662 = vpop.f32.mrb[0].mxu0
      %663 = vdwg.mxu0
      %v664 = vadd.f32 %v460, %v627
      %v665 = vadd.f32 %v463, %v630
      %v666 = vadd.f32 %v468, %v635
      %v667 = vadd.f32 %v471, %v638
      %v668 = vadd.f32 %v476, %v643
      %v669 = vadd.f32 %v479, %v646
      %v670 = vadd.f32 %v484, %v651
      %v671 = vadd.f32 %v487, %v654
      %v672 = vadd.f32 %v492, %v659
      %v673 = vld [vmem:[%s257] sm:$0xf]
      %v674 = vld [vmem:[%s257 + $0x4] sm:$0xf]
      %v675 = vld [vmem:[%s257 + $0x8] sm:$0xf]
      %v676 = vld [vmem:[%s257 + $0xc] sm:$0xf]
      %v677 = vld [vmem:[%s257 + $0x10] sm:$0xf]
      %v678 = vld [vmem:[%s257 + $0x14] sm:$0xf]
      %v679 = vld [vmem:[%s257 + $0x18] sm:$0xf]
      %v680 = vld [vmem:[%s257 + $0x1c] sm:$0xf]
      %v681 = vld [vmem:[%s257 + $0x20] sm:$0xf]
      %v682 = vld [vmem:[%s257 + $0x24] sm:$0x1]
      %s683 = scalar_lea.vmem %s1, 12
      %v684 = vld [vmem:[%s683] sm:$0xf]
      %v695 = vunpack.c.l.b16 %v673
      %v696 = vunpack.c.l.b16 %v674
      %v697 = vunpack.c.l.b16 %v675
      %v698 = vunpack.c.l.b16 %v676
      %v699 = vunpack.c.l.b16 %v677
      %v700 = vunpack.c.l.b16 %v678
      %v701 = vunpack.c.l.b16 %v679
      %v702 = vunpack.c.l.b16 %v680
      %v703 = vunpack.c.l.b16 %v681
      %v704 = vunpack.c.l.b16 %v682
      %v705 = vpack.c.b16 %v696, %v695
      %v706 = vpack.c.b16 %v698, %v697
      %v707 = vpack.c.b16 %v700, %v699
      %v708 = vpack.c.b16 %v702, %v701
      %v709 = vpack.c.b16 %v704, %v703
      %v711 = vshrl.u32 %v705, 16
      %v713 = vshll.u32 %v705, 16
      %v715 = vrot.slane %v713, 1
      %v716 = vor.u32 %v711, %v715
      %v718 = vshll.u32 %v706, 16
      %v720 = vrot.slane %v718, 1
      %v721 = vsel %vm534, %v716, %v720
      %v722 = vshrl.u32 %v706, 16
      %v724 = vor.u32 %v722, %v720
      %v726 = vshll.u32 %v707, 16
      %v728 = vrot.slane %v726, 1
      %v729 = vsel %vm534, %v724, %v728
      %v730 = vshrl.u32 %v707, 16
      %v732 = vor.u32 %v730, %v728
      %v734 = vshll.u32 %v708, 16
      %v736 = vrot.slane %v734, 1
      %v737 = vsel %vm534, %v732, %v736
      %v738 = vshrl.u32 %v708, 16
      %v740 = vor.u32 %v738, %v736
      %v742 = vshll.u32 %v709, 16
      %v744 = vrot.slane %v742, 1
      %v745 = vsel %vm534, %v740, %v744
      %v746 = vshrl.u32 %v709, 16
      %v748 = vor.u32 %v746, %v744
      %v750 = vsel %vm292, %v721, 0
      %v753 = vsel %vm292, %v729, 0
      %v756 = vsel %vm292, %v737, 0
      %v759 = vsel %vm292, %v745, 0
      %v762 = vsel %vm292, %v748, 0
      %v765 = vsel %vm308, %v684, 0
      %767 = vmatprep.subr.bf16.mxu0 0
      %768 = vmatpush1.bf16.msra.mxu0 %v765
      %769 = vmatprep.subr.bf16.mxu0 0
      %770 = vmatpush1.bf16.msra.mxu0 0
      %771 = vmatprep.subr.bf16.mxu0 0
      %772 = vmatpush1.bf16.msra.mxu0 0
      %773 = vmatprep.subr.bf16.mxu0 0
      %774 = vmatpush1.bf16.msra.mxu0 0
      %775 = vmatprep.subr.bf16.mxu0 0
      %776 = vmatpush1.bf16.msra.mxu0 0
      %777 = vmatprep.subr.bf16.mxu0 0
      %778 = vmatpush1.bf16.msra.mxu0 0
      %779 = vmatprep.subr.bf16.mxu0 0
      %780 = vmatpush1.bf16.msra.mxu0 0
      %781 = vmatprep.subr.bf16.mxu0 0
      %782 = vmatpush1.bf16.msra.mxu0 0
      %783 = vmatprep.subr.bf16.mxu0 0
      %784 = vmatpush1.bf16.msra.mxu0 0
      %785 = vmatprep.subr.bf16.mxu0 0
      %786 = vmatpush1.bf16.msra.mxu0 0
      %787 = vmatprep.subr.bf16.mxu0 0
      %788 = vmatpush1.bf16.msra.mxu0 0
      %789 = vmatprep.subr.bf16.mxu0 0
      %790 = vmatpush1.bf16.msra.mxu0 0
      %791 = vmatprep.subr.bf16.mxu0 0
      %792 = vmatpush1.bf16.msra.mxu0 0
      %793 = vmatprep.subr.bf16.mxu0 0
      %794 = vmatpush1.bf16.msra.mxu0 0
      %795 = vmatprep.subr.bf16.mxu0 0
      %796 = vmatpush1.bf16.msra.mxu0 0
      %797 = vmatprep.subr.bf16.mxu0 0
      %798 = vmatpush1.bf16.msra.mxu0 0
      %799 = vmatprep.mubr.bf16.mxu0 0
      %800 = vmatmul.mubr.bf16.gmra.mrb[0].mxu0 %v750
      %v801 = vpop.f32.mrb[0].mxu0
      %v802 = vadd.f32 0.0, %v801
      %v803 = vpop.f32.mrb[0].mxu0
      %v804 = vpop.f32.mrb[0].mxu0
      %v805 = vadd.f32 0.0, %v804
      %v806 = vpop.f32.mrb[0].mxu0
      %807 = vmatprep.mubr.bf16.mxu0 0
      %808 = vmatmul.mubr.bf16.gmra.mrb[0].mxu0 %v753
      %v809 = vpop.f32.mrb[0].mxu0
      %v810 = vadd.f32 0.0, %v809
      %v811 = vpop.f32.mrb[0].mxu0
      %v812 = vpop.f32.mrb[0].mxu0
      %v813 = vadd.f32 0.0, %v812
      %v814 = vpop.f32.mrb[0].mxu0
      %815 = vmatprep.mubr.bf16.mxu0 0
      %816 = vmatmul.mubr.bf16.gmra.mrb[0].mxu0 %v756
      %v817 = vpop.f32.mrb[0].mxu0
      %v818 = vadd.f32 0.0, %v817
      %v819 = vpop.f32.mrb[0].mxu0
      %v820 = vpop.f32.mrb[0].mxu0
      %v821 = vadd.f32 0.0, %v820
      %v822 = vpop.f32.mrb[0].mxu0
      %823 = vmatprep.mubr.bf16.mxu0 0
      %824 = vmatmul.mubr.bf16.gmra.mrb[0].mxu0 %v759
      %v825 = vpop.f32.mrb[0].mxu0
      %v826 = vadd.f32 0.0, %v825
      %v827 = vpop.f32.mrb[0].mxu0
      %v828 = vpop.f32.mrb[0].mxu0
      %v829 = vadd.f32 0.0, %v828
      %v830 = vpop.f32.mrb[0].mxu0
      %831 = vmatprep.mubr.bf16.mxu0 0
      %832 = vmatmul.mubr.bf16.gmra.mrb[0].mxu0 %v762
      %v833 = vpop.f32.mrb[0].mxu0
      %v834 = vadd.f32 0.0, %v833
      %v835 = vpop.f32.mrb[0].mxu0
      %v836 = vpop.f32.mrb[0].mxu0
      %v837 = vpop.f32.mrb[0].mxu0
      %838 = vdwg.mxu0
      %v839 = vadd.f32 %v664, %v802
      %v840 = vadd.f32 %v665, %v805
      %v841 = vadd.f32 %v666, %v810
      %v842 = vadd.f32 %v667, %v813
      %v843 = vadd.f32 %v668, %v818
      %v844 = vadd.f32 %v669, %v821
      %v845 = vadd.f32 %v670, %v826
      %v846 = vadd.f32 %v671, %v829
      %v847 = vadd.f32 %v672, %v834
      %s848 = scalar_lea.vmem %s232, 88
      %v849 = vld [vmem:[%s848] sm:$0xf]
      %v850 = vld [vmem:[%s848 + $0x4] sm:$0xf]
      %v851 = vld [vmem:[%s848 + $0x8] sm:$0xf]
      %v852 = vld [vmem:[%s848 + $0xc] sm:$0xf]
      %v853 = vld [vmem:[%s848 + $0x10] sm:$0xf]
      %v854 = vld [vmem:[%s848 + $0x14] sm:$0xf]
      %v855 = vld [vmem:[%s848 + $0x18] sm:$0xf]
      %v856 = vld [vmem:[%s848 + $0x1c] sm:$0xf]
      %v857 = vld [vmem:[%s848 + $0x20] sm:$0xf]
      %s858 = scalar_lea.vmem %s1, 16
      %v859 = vld [vmem:[%s858] sm:$0xf]
      %v869 = vunpack.c.l.b16 %v849
      %v870 = vunpack.c.l.b16 %v850
      %v871 = vunpack.c.l.b16 %v851
      %v872 = vunpack.c.l.b16 %v852
      %v873 = vunpack.c.l.b16 %v853
      %v874 = vunpack.c.l.b16 %v854
      %v875 = vunpack.c.l.b16 %v855
      %v876 = vunpack.c.l.b16 %v856
      %v877 = vunpack.c.l.b16 %v857
      %v878 = vpack.c.b16 %v870, %v869
      %v879 = vpack.c.b16 %v872, %v871
      %v880 = vpack.c.b16 %v874, %v873
      %v881 = vpack.c.b16 %v876, %v875
      %v882 = vpack.c.b16 %v877, %v877
      %v884 = vsel %vm292, %v878, 0
      %v887 = vsel %vm292, %v879, 0
      %v890 = vsel %vm292, %v880, 0
      %v893 = vsel %vm292, %v881, 0
      %v896 = vsel %vm292, %v882, 0
      %v899 = vsel %vm308, %v859, 0
      %901 = vmatprep.subr.bf16.mxu0 0
      %902 = vmatpush1.bf16.msra.mxu0 %v899
      %903 = vmatprep.subr.bf16.mxu0 0
      %904 = vmatpush1.bf16.msra.mxu0 0
      %905 = vmatprep.subr.bf16.mxu0 0
      %906 = vmatpush1.bf16.msra.mxu0 0
      %907 = vmatprep.subr.bf16.mxu0 0
      %908 = vmatpush1.bf16.msra.mxu0 0
      %909 = vmatprep.subr.bf16.mxu0 0
      %910 = vmatpush1.bf16.msra.mxu0 0
      %911 = vmatprep.subr.bf16.mxu0 0
      %912 = vmatpush1.bf16.msra.mxu0 0
      %913 = vmatprep.subr.bf16.mxu0 0
      %914 = vmatpush1.bf16.msra.mxu0 0
      %915 = vmatprep.subr.bf16.mxu0 0
      %916 = vmatpush1.bf16.msra.mxu0 0
      %917 = vmatprep.subr.bf16.mxu0 0
      %918 = vmatpush1.bf16.msra.mxu0 0
      %919 = vmatprep.subr.bf16.mxu0 0
      %920 = vmatpush1.bf16.msra.mxu0 0
      %921 = vmatprep.subr.bf16.mxu0 0
      %922 = vmatpush1.bf16.msra.mxu0 0
      %923 = vmatprep.subr.bf16.mxu0 0
      %924 = vmatpush1.bf16.msra.mxu0 0
      %925 = vmatprep.subr.bf16.mxu0 0
      %926 = vmatpush1.bf16.msra.mxu0 0
      %927 = vmatprep.subr.bf16.mxu0 0
      %928 = vmatpush1.bf16.msra.mxu0 0
      %929 = vmatprep.subr.bf16.mxu0 0
      %930 = vmatpush1.bf16.msra.mxu0 0
      %931 = vmatprep.subr.bf16.mxu0 0
      %932 = vmatpush1.bf16.msra.mxu0 0
      %933 = vmatprep.mubr.bf16.mxu0 0
      %934 = vmatmul.mubr.bf16.gmra.mrb[0].mxu0 %v884
      %v935 = vpop.f32.mrb[0].mxu0
      %v936 = vadd.f32 0.0, %v935
      %v937 = vpop.f32.mrb[0].mxu0
      %v938 = vpop.f32.mrb[0].mxu0
      %v939 = vadd.f32 0.0, %v938
      %v940 = vpop.f32.mrb[0].mxu0
      %941 = vmatprep.mubr.bf16.mxu0 0
      %942 = vmatmul.mubr.bf16.gmra.mrb[0].mxu0 %v887
      %v943 = vpop.f32.mrb[0].mxu0
      %v944 = vadd.f32 0.0, %v943
      %v945 = vpop.f32.mrb[0].mxu0
      %v946 = vpop.f32.mrb[0].mxu0
      %v947 = vadd.f32 0.0, %v946
      %v948 = vpop.f32.mrb[0].mxu0
      %949 = vmatprep.mubr.bf16.mxu0 0
      %950 = vmatmul.mubr.bf16.gmra.mrb[0].mxu0 %v890
      %v951 = vpop.f32.mrb[0].mxu0
      %v952 = vadd.f32 0.0, %v951
      %v953 = vpop.f32.mrb[0].mxu0
      %v954 = vpop.f32.mrb[0].mxu0
      %v955 = vadd.f32 0.0, %v954
      %v956 = vpop.f32.mrb[0].mxu0
      %957 = vmatprep.mubr.bf16.mxu0 0
      %958 = vmatmul.mubr.bf16.gmra.mrb[0].mxu0 %v893
      %v959 = vpop.f32.mrb[0].mxu0
      %v960 = vadd.f32 0.0, %v959
      %v961 = vpop.f32.mrb[0].mxu0
      %v962 = vpop.f32.mrb[0].mxu0
      %v963 = vadd.f32 0.0, %v962
      %v964 = vpop.f32.mrb[0].mxu0
      %965 = vmatprep.mubr.bf16.mxu0 0
      %966 = vmatmul.mubr.bf16.gmra.mrb[0].mxu0 %v896
      %v967 = vpop.f32.mrb[0].mxu0
      %v968 = vadd.f32 0.0, %v967
      %v969 = vpop.f32.mrb[0].mxu0
      %v970 = vpop.f32.mrb[0].mxu0
      %v971 = vpop.f32.mrb[0].mxu0
      %972 = vdwg.mxu0
      %v973 = vadd.f32 %v839, %v936
      %v974 = vadd.f32 %v840, %v939
      %v975 = vadd.f32 %v841, %v944
      %v976 = vadd.f32 %v842, %v947
      %v977 = vadd.f32 %v843, %v952
      %v978 = vadd.f32 %v844, %v955
      %v979 = vadd.f32 %v845, %v960
      %v980 = vadd.f32 %v846, %v963
      %v981 = vadd.f32 %v847, %v968
      %s982 = scalar_lea.vmem %s232, 132
      %v983 = vld [vmem:[%s982] sm:$0xf]
      %v984 = vld [vmem:[%s982 + $0x4] sm:$0xf]
      %v985 = vld [vmem:[%s982 + $0x8] sm:$0xf]
      %v986 = vld [vmem:[%s982 + $0xc] sm:$0xf]
      %v987 = vld [vmem:[%s982 + $0x10] sm:$0xf]
      %v988 = vld [vmem:[%s982 + $0x14] sm:$0xf]
      %v989 = vld [vmem:[%s982 + $0x18] sm:$0xf]
      %v990 = vld [vmem:[%s982 + $0x1c] sm:$0xf]
      %v991 = vld [vmem:[%s982 + $0x20] sm:$0xf]
      %s992 = scalar_lea.vmem %s1, 20
      %v993 = vld [vmem:[%s992] sm:$0xf]
      %v1003 = vunpack.c.l.b16 %v983
      %v1004 = vunpack.c.l.b16 %v984
      %v1005 = vunpack.c.l.b16 %v985
      %v1006 = vunpack.c.l.b16 %v986
      %v1007 = vunpack.c.l.b16 %v987
      %v1008 = vunpack.c.l.b16 %v988
      %v1009 = vunpack.c.l.b16 %v989
      %v1010 = vunpack.c.l.b16 %v990
      %v1011 = vunpack.c.l.b16 %v991
      %v1012 = vpack.c.b16 %v1004, %v1003
      %v1013 = vpack.c.b16 %v1006, %v1005
      %v1014 = vpack.c.b16 %v1008, %v1007
      %v1015 = vpack.c.b16 %v1010, %v1009
      %v1016 = vpack.c.b16 %v1011, %v1011
      %v1018 = vsel %vm292, %v1012, 0
      %v1021 = vsel %vm292, %v1013, 0
      %v1024 = vsel %vm292, %v1014, 0
      %v1027 = vsel %vm292, %v1015, 0
      %v1030 = vsel %vm292, %v1016, 0
      %v1033 = vsel %vm308, %v993, 0
      %1035 = vmatprep.subr.bf16.mxu0 0
      %1036 = vmatpush1.bf16.msra.mxu0 %v1033
      %1037 = vmatprep.subr.bf16.mxu0 0
      %1038 = vmatpush1.bf16.msra.mxu0 0
      %1039 = vmatprep.subr.bf16.mxu0 0
      %1040 = vmatpush1.bf16.msra.mxu0 0
      %1041 = vmatprep.subr.bf16.mxu0 0
      %1042 = vmatpush1.bf16.msra.mxu0 0
      %1043 = vmatprep.subr.bf16.mxu0 0
      %1044 = vmatpush1.bf16.msra.mxu0 0
      %1045 = vmatprep.subr.bf16.mxu0 0
      %1046 = vmatpush1.bf16.msra.mxu0 0
      %1047 = vmatprep.subr.bf16.mxu0 0
      %1048 = vmatpush1.bf16.msra.mxu0 0
      %1049 = vmatprep.subr.bf16.mxu0 0
      %1050 = vmatpush1.bf16.msra.mxu0 0
      %1051 = vmatprep.subr.bf16.mxu0 0
      %1052 = vmatpush1.bf16.msra.mxu0 0
      %1053 = vmatprep.subr.bf16.mxu0 0
      %1054 = vmatpush1.bf16.msra.mxu0 0
      %1055 = vmatprep.subr.bf16.mxu0 0
      %1056 = vmatpush1.bf16.msra.mxu0 0
      %1057 = vmatprep.subr.bf16.mxu0 0
      %1058 = vmatpush1.bf16.msra.mxu0 0
      %1059 = vmatprep.subr.bf16.mxu0 0
      %1060 = vmatpush1.bf16.msra.mxu0 0
      %1061 = vmatprep.subr.bf16.mxu0 0
      %1062 = vmatpush1.bf16.msra.mxu0 0
      %1063 = vmatprep.subr.bf16.mxu0 0
      %1064 = vmatpush1.bf16.msra.mxu0 0
      %1065 = vmatprep.subr.bf16.mxu0 0
      %1066 = vmatpush1.bf16.msra.mxu0 0
      %1067 = vmatprep.mubr.bf16.mxu0 0
      %1068 = vmatmul.mubr.bf16.gmra.mrb[0].mxu0 %v1018
      %v1069 = vpop.f32.mrb[0].mxu0
      %v1070 = vadd.f32 0.0, %v1069
      %v1071 = vpop.f32.mrb[0].mxu0
      %v1072 = vpop.f32.mrb[0].mxu0
      %v1073 = vadd.f32 0.0, %v1072
      %v1074 = vpop.f32.mrb[0].mxu0
      %1075 = vmatprep.mubr.bf16.mxu0 0
      %1076 = vmatmul.mubr.bf16.gmra.mrb[0].mxu0 %v1021
      %v1077 = vpop.f32.mrb[0].mxu0
      %v1078 = vadd.f32 0.0, %v1077
      %v1079 = vpop.f32.mrb[0].mxu0
      %v1080 = vpop.f32.mrb[0].mxu0
      %v1081 = vadd.f32 0.0, %v1080
      %v1082 = vpop.f32.mrb[0].mxu0
      %1083 = vmatprep.mubr.bf16.mxu0 0
      %1084 = vmatmul.mubr.bf16.gmra.mrb[0].mxu0 %v1024
      %v1085 = vpop.f32.mrb[0].mxu0
      %v1086 = vadd.f32 0.0, %v1085
      %v1087 = vpop.f32.mrb[0].mxu0
      %v1088 = vpop.f32.mrb[0].mxu0
      %v1089 = vadd.f32 0.0, %v1088
      %v1090 = vpop.f32.mrb[0].mxu0
      %1091 = vmatprep.mubr.bf16.mxu0 0
      %1092 = vmatmul.mubr.bf16.gmra.mrb[0].mxu0 %v1027
      %v1093 = vpop.f32.mrb[0].mxu0
      %v1094 = vadd.f32 0.0, %v1093
      %v1095 = vpop.f32.mrb[0].mxu0
      %v1096 = vpop.f32.mrb[0].mxu0
      %v1097 = vadd.f32 0.0, %v1096
      %v1098 = vpop.f32.mrb[0].mxu0
      %1099 = vmatprep.mubr.bf16.mxu0 0
      %1100 = vmatmul.mubr.bf16.gmra.mrb[0].mxu0 %v1030
      %v1101 = vpop.f32.mrb[0].mxu0
      %v1102 = vadd.f32 0.0, %v1101
      %v1103 = vpop.f32.mrb[0].mxu0
      %v1104 = vpop.f32.mrb[0].mxu0
      %v1105 = vpop.f32.mrb[0].mxu0
      %1106 = vdwg.mxu0
      %v1107 = vadd.f32 %v973, %v1070
      %v1108 = vadd.f32 %v974, %v1073
      %v1109 = vadd.f32 %v975, %v1078
      %v1110 = vadd.f32 %v976, %v1081
      %v1111 = vadd.f32 %v977, %v1086
      %v1112 = vadd.f32 %v978, %v1089
      %v1113 = vadd.f32 %v979, %v1094
      %v1114 = vadd.f32 %v980, %v1097
      %v1115 = vadd.f32 %v981, %v1102
      %v1116 = vld [vmem:[%s848] sm:$0xf]
      %v1117 = vld [vmem:[%s848 + $0x4] sm:$0xf]
      %v1118 = vld [vmem:[%s848 + $0x8] sm:$0xf]
      %v1119 = vld [vmem:[%s848 + $0xc] sm:$0xf]
      %v1120 = vld [vmem:[%s848 + $0x10] sm:$0xf]
      %v1121 = vld [vmem:[%s848 + $0x14] sm:$0xf]
      %v1122 = vld [vmem:[%s848 + $0x18] sm:$0xf]
      %v1123 = vld [vmem:[%s848 + $0x1c] sm:$0xf]
      %v1124 = vld [vmem:[%s848 + $0x20] sm:$0xf]
      %v1125 = vld [vmem:[%s848 + $0x24] sm:$0x1]
      %s1126 = scalar_lea.vmem %s1, 24
      %v1127 = vld [vmem:[%s1126] sm:$0xf]
      %v1138 = vunpack.c.l.b16 %v1116
      %v1139 = vunpack.c.l.b16 %v1117
      %v1140 = vunpack.c.l.b16 %v1118
      %v1141 = vunpack.c.l.b16 %v1119
      %v1142 = vunpack.c.l.b16 %v1120
      %v1143 = vunpack.c.l.b16 %v1121
      %v1144 = vunpack.c.l.b16 %v1122
      %v1145 = vunpack.c.l.b16 %v1123
      %v1146 = vunpack.c.l.b16 %v1124
      %v1147 = vunpack.c.l.b16 %v1125
      %v1148 = vpack.c.b16 %v1139, %v1138
      %v1149 = vpack.c.b16 %v1141, %v1140
      %v1150 = vpack.c.b16 %v1143, %v1142
      %v1151 = vpack.c.b16 %v1145, %v1144
      %v1152 = vpack.c.b16 %v1147, %v1146
      %v1154 = vshrl.u32 %v1148, 16
      %v1156 = vshll.u32 %v1148, 16
      %v1158 = vrot.slane %v1156, 1
      %v1159 = vor.u32 %v1154, %v1158
      %v1161 = vshll.u32 %v1149, 16
      %v1163 = vrot.slane %v1161, 1
      %v1164 = vsel %vm534, %v1159, %v1163
      %v1165 = vshrl.u32 %v1149, 16
      %v1167 = vor.u32 %v1165, %v1163
      %v1169 = vshll.u32 %v1150, 16
      %v1171 = vrot.slane %v1169, 1
      %v1172 = vsel %vm534, %v1167, %v1171
      %v1173 = vshrl.u32 %v1150, 16
      %v1175 = vor.u32 %v1173, %v1171
      %v1177 = vshll.u32 %v1151, 16
      %v1179 = vrot.slane %v1177, 1
      %v1180 = vsel %vm534, %v1175, %v1179
      %v1181 = vshrl.u32 %v1151, 16
      %v1183 = vor.u32 %v1181, %v1179
      %v1185 = vshll.u32 %v1152, 16
      %v1187 = vrot.slane %v1185, 1
      %v1188 = vsel %vm534, %v1183, %v1187
      %v1189 = vshrl.u32 %v1152, 16
      %v1191 = vor.u32 %v1189, %v1187
      %v1193 = vsel %vm292, %v1164, 0
      %v1196 = vsel %vm292, %v1172, 0
      %v1199 = vsel %vm292, %v1180, 0
      %v1202 = vsel %vm292, %v1188, 0
      %v1205 = vsel %vm292, %v1191, 0
      %v1208 = vsel %vm308, %v1127, 0
      %1210 = vmatprep.subr.bf16.mxu0 0
      %1211 = vmatpush1.bf16.msra.mxu0 %v1208
      %1212 = vmatprep.subr.bf16.mxu0 0
      %1213 = vmatpush1.bf16.msra.mxu0 0
      %1214 = vmatprep.subr.bf16.mxu0 0
      %1215 = vmatpush1.bf16.msra.mxu0 0
      %1216 = vmatprep.subr.bf16.mxu0 0
      %1217 = vmatpush1.bf16.msra.mxu0 0
      %1218 = vmatprep.subr.bf16.mxu0 0
      %1219 = vmatpush1.bf16.msra.mxu0 0
      %1220 = vmatprep.subr.bf16.mxu0 0
      %1221 = vmatpush1.bf16.msra.mxu0 0
      %1222 = vmatprep.subr.bf16.mxu0 0
      %1223 = vmatpush1.bf16.msra.mxu0 0
      %1224 = vmatprep.subr.bf16.mxu0 0
      %1225 = vmatpush1.bf16.msra.mxu0 0
      %1226 = vmatprep.subr.bf16.mxu0 0
      %1227 = vmatpush1.bf16.msra.mxu0 0
      %1228 = vmatprep.subr.bf16.mxu0 0
      %1229 = vmatpush1.bf16.msra.mxu0 0
      %1230 = vmatprep.subr.bf16.mxu0 0
      %1231 = vmatpush1.bf16.msra.mxu0 0
      %1232 = vmatprep.subr.bf16.mxu0 0
      %1233 = vmatpush1.bf16.msra.mxu0 0
      %1234 = vmatprep.subr.bf16.mxu0 0
      %1235 = vmatpush1.bf16.msra.mxu0 0
      %1236 = vmatprep.subr.bf16.mxu0 0
      %1237 = vmatpush1.bf16.msra.mxu0 0
      %1238 = vmatprep.subr.bf16.mxu0 0
      %1239 = vmatpush1.bf16.msra.mxu0 0
      %1240 = vmatprep.subr.bf16.mxu0 0
      %1241 = vmatpush1.bf16.msra.mxu0 0
      %1242 = vmatprep.mubr.bf16.mxu0 0
      %1243 = vmatmul.mubr.bf16.gmra.mrb[0].mxu0 %v1193
      %v1244 = vpop.f32.mrb[0].mxu0
      %v1245 = vadd.f32 0.0, %v1244
      %v1246 = vpop.f32.mrb[0].mxu0
      %v1247 = vpop.f32.mrb[0].mxu0
      %v1248 = vadd.f32 0.0, %v1247
      %v1249 = vpop.f32.mrb[0].mxu0
      %1250 = vmatprep.mubr.bf16.mxu0 0
      %1251 = vmatmul.mubr.bf16.gmra.mrb[0].mxu0 %v1196
      %v1252 = vpop.f32.mrb[0].mxu0
      %v1253 = vadd.f32 0.0, %v1252
      %v1254 = vpop.f32.mrb[0].mxu0
      %v1255 = vpop.f32.mrb[0].mxu0
      %v1256 = vadd.f32 0.0, %v1255
      %v1257 = vpop.f32.mrb[0].mxu0
      %1258 = vmatprep.mubr.bf16.mxu0 0
      %1259 = vmatmul.mubr.bf16.gmra.mrb[0].mxu0 %v1199
      %v1260 = vpop.f32.mrb[0].mxu0
      %v1261 = vadd.f32 0.0, %v1260
      %v1262 = vpop.f32.mrb[0].mxu0
      %v1263 = vpop.f32.mrb[0].mxu0
      %v1264 = vadd.f32 0.0, %v1263
      %v1265 = vpop.f32.mrb[0].mxu0
      %1266 = vmatprep.mubr.bf16.mxu0 0
      %1267 = vmatmul.mubr.bf16.gmra.mrb[0].mxu0 %v1202
      %v1268 = vpop.f32.mrb[0].mxu0
      %v1269 = vadd.f32 0.0, %v1268
      %v1270 = vpop.f32.mrb[0].mxu0
      %v1271 = vpop.f32.mrb[0].mxu0
      %v1272 = vadd.f32 0.0, %v1271
      %v1273 = vpop.f32.mrb[0].mxu0
      %1274 = vmatprep.mubr.bf16.mxu0 0
      %1275 = vmatmul.mubr.bf16.gmra.mrb[0].mxu0 %v1205
      %v1276 = vpop.f32.mrb[0].mxu0
      %v1277 = vadd.f32 0.0, %v1276
      %v1278 = vpop.f32.mrb[0].mxu0
      %v1279 = vpop.f32.mrb[0].mxu0
      %v1280 = vpop.f32.mrb[0].mxu0
      %1281 = vdwg.mxu0
      %v1282 = vadd.f32 %v1107, %v1245
      %v1283 = vadd.f32 %v1108, %v1248
      %v1284 = vadd.f32 %v1109, %v1253
      %v1285 = vadd.f32 %v1110, %v1256
      %v1286 = vadd.f32 %v1111, %v1261
      %v1287 = vadd.f32 %v1112, %v1264
      %v1288 = vadd.f32 %v1113, %v1269
      %v1289 = vadd.f32 %v1114, %v1272
      %v1290 = vadd.f32 %v1115, %v1277
      %v1291 = vld [vmem:[%s982] sm:$0xf]
      %v1292 = vld [vmem:[%s982 + $0x4] sm:$0xf]
      %v1293 = vld [vmem:[%s982 + $0x8] sm:$0xf]
      %v1294 = vld [vmem:[%s982 + $0xc] sm:$0xf]
      %v1295 = vld [vmem:[%s982 + $0x10] sm:$0xf]
      %v1296 = vld [vmem:[%s982 + $0x14] sm:$0xf]
      %v1297 = vld [vmem:[%s982 + $0x18] sm:$0xf]
      %v1298 = vld [vmem:[%s982 + $0x1c] sm:$0xf]
      %v1299 = vld [vmem:[%s982 + $0x20] sm:$0xf]
      %v1300 = vld [vmem:[%s982 + $0x24] sm:$0x1]
      %s1301 = scalar_lea.vmem %s1, 28
      %v1302 = vld [vmem:[%s1301] sm:$0xf]
      %v1313 = vunpack.c.l.b16 %v1291
      %v1314 = vunpack.c.l.b16 %v1292
      %v1315 = vunpack.c.l.b16 %v1293
      %v1316 = vunpack.c.l.b16 %v1294
      %v1317 = vunpack.c.l.b16 %v1295
      %v1318 = vunpack.c.l.b16 %v1296
      %v1319 = vunpack.c.l.b16 %v1297
      %v1320 = vunpack.c.l.b16 %v1298
      %v1321 = vunpack.c.l.b16 %v1299
      %v1322 = vunpack.c.l.b16 %v1300
      %v1323 = vpack.c.b16 %v1314, %v1313
      %v1324 = vpack.c.b16 %v1316, %v1315
      %v1325 = vpack.c.b16 %v1318, %v1317
      %v1326 = vpack.c.b16 %v1320, %v1319
      %v1327 = vpack.c.b16 %v1322, %v1321
      %v1329 = vshrl.u32 %v1323, 16
      %v1331 = vshll.u32 %v1323, 16
      %v1333 = vrot.slane %v1331, 1
      %v1334 = vor.u32 %v1329, %v1333
      %v1336 = vshll.u32 %v1324, 16
      %v1338 = vrot.slane %v1336, 1
      %v1339 = vsel %vm534, %v1334, %v1338
      %v1340 = vshrl.u32 %v1324, 16
      %v1342 = vor.u32 %v1340, %v1338
      %v1344 = vshll.u32 %v1325, 16
      %v1346 = vrot.slane %v1344, 1
      %v1347 = vsel %vm534, %v1342, %v1346
      %v1348 = vshrl.u32 %v1325, 16
      %v1350 = vor.u32 %v1348, %v1346
      %v1352 = vshll.u32 %v1326, 16
      %v1354 = vrot.slane %v1352, 1
      %v1355 = vsel %vm534, %v1350, %v1354
      %v1356 = vshrl.u32 %v1326, 16
      %v1358 = vor.u32 %v1356, %v1354
      %v1360 = vshll.u32 %v1327, 16
      %v1362 = vrot.slane %v1360, 1
      %v1363 = vsel %vm534, %v1358, %v1362
      %v1364 = vshrl.u32 %v1327, 16
      %v1366 = vor.u32 %v1364, %v1362
      %v1368 = vsel %vm292, %v1339, 0
      %v1371 = vsel %vm292, %v1347, 0
      %v1374 = vsel %vm292, %v1355, 0
      %v1377 = vsel %vm292, %v1363, 0
      %v1380 = vsel %vm292, %v1366, 0
      %v1383 = vsel %vm308, %v1302, 0
      %1385 = vmatprep.subr.bf16.mxu0 0
      %1386 = vmatpush1.bf16.msra.mxu0 %v1383
      %1387 = vmatprep.subr.bf16.mxu0 0
      %1388 = vmatpush1.bf16.msra.mxu0 0
      %1389 = vmatprep.subr.bf16.mxu0 0
      %1390 = vmatpush1.bf16.msra.mxu0 0
      %1391 = vmatprep.subr.bf16.mxu0 0
      %1392 = vmatpush1.bf16.msra.mxu0 0
      %1393 = vmatprep.subr.bf16.mxu0 0
      %1394 = vmatpush1.bf16.msra.mxu0 0
      %1395 = vmatprep.subr.bf16.mxu0 0
      %1396 = vmatpush1.bf16.msra.mxu0 0
      %1397 = vmatprep.subr.bf16.mxu0 0
      %1398 = vmatpush1.bf16.msra.mxu0 0
      %1399 = vmatprep.subr.bf16.mxu0 0
      %1400 = vmatpush1.bf16.msra.mxu0 0
      %1401 = vmatprep.subr.bf16.mxu0 0
      %1402 = vmatpush1.bf16.msra.mxu0 0
      %1403 = vmatprep.subr.bf16.mxu0 0
      %1404 = vmatpush1.bf16.msra.mxu0 0
      %1405 = vmatprep.subr.bf16.mxu0 0
      %1406 = vmatpush1.bf16.msra.mxu0 0
      %1407 = vmatprep.subr.bf16.mxu0 0
      %1408 = vmatpush1.bf16.msra.mxu0 0
      %1409 = vmatprep.subr.bf16.mxu0 0
      %1410 = vmatpush1.bf16.msra.mxu0 0
      %1411 = vmatprep.subr.bf16.mxu0 0
      %1412 = vmatpush1.bf16.msra.mxu0 0
      %1413 = vmatprep.subr.bf16.mxu0 0
      %1414 = vmatpush1.bf16.msra.mxu0 0
      %1415 = vmatprep.subr.bf16.mxu0 0
      %1416 = vmatpush1.bf16.msra.mxu0 0
      %1417 = vmatprep.mubr.bf16.mxu0 0
      %1418 = vmatmul.mubr.bf16.gmra.mrb[0].mxu0 %v1368
      %v1419 = vpop.f32.mrb[0].mxu0
      %v1420 = vadd.f32 0.0, %v1419
      %v1421 = vpop.f32.mrb[0].mxu0
      %v1422 = vpop.f32.mrb[0].mxu0
      %v1423 = vadd.f32 0.0, %v1422
      %v1424 = vpop.f32.mrb[0].mxu0
      %1425 = vmatprep.mubr.bf16.mxu0 0
      %1426 = vmatmul.mubr.bf16.gmra.mrb[0].mxu0 %v1371
      %v1427 = vpop.f32.mrb[0].mxu0
      %v1428 = vadd.f32 0.0, %v1427
      %v1429 = vpop.f32.mrb[0].mxu0
      %v1430 = vpop.f32.mrb[0].mxu0
      %v1431 = vadd.f32 0.0, %v1430
      %v1432 = vpop.f32.mrb[0].mxu0
      %1433 = vmatprep.mubr.bf16.mxu0 0
      %1434 = vmatmul.mubr.bf16.gmra.mrb[0].mxu0 %v1374
      %v1435 = vpop.f32.mrb[0].mxu0
      %v1436 = vadd.f32 0.0, %v1435
      %v1437 = vpop.f32.mrb[0].mxu0
      %v1438 = vpop.f32.mrb[0].mxu0
      %v1439 = vadd.f32 0.0, %v1438
      %v1440 = vpop.f32.mrb[0].mxu0
      %1441 = vmatprep.mubr.bf16.mxu0 0
      %1442 = vmatmul.mubr.bf16.gmra.mrb[0].mxu0 %v1377
      %v1443 = vpop.f32.mrb[0].mxu0
      %v1444 = vadd.f32 0.0, %v1443
      %v1445 = vpop.f32.mrb[0].mxu0
      %v1446 = vpop.f32.mrb[0].mxu0
      %v1447 = vadd.f32 0.0, %v1446
      %v1448 = vpop.f32.mrb[0].mxu0
      %1449 = vmatprep.mubr.bf16.mxu0 0
      %1450 = vmatmul.mubr.bf16.gmra.mrb[0].mxu0 %v1380
      %v1451 = vpop.f32.mrb[0].mxu0
      %v1452 = vadd.f32 0.0, %v1451
      %v1453 = vpop.f32.mrb[0].mxu0
      %v1454 = vpop.f32.mrb[0].mxu0
      %v1455 = vpop.f32.mrb[0].mxu0
      %1456 = vdwg.mxu0
      %v1457 = vadd.f32 %v1282, %v1420
      %v1458 = vadd.f32 %v1283, %v1423
      %v1459 = vadd.f32 %v1284, %v1428
      %v1460 = vadd.f32 %v1285, %v1431
      %v1461 = vadd.f32 %v1286, %v1436
      %v1462 = vadd.f32 %v1287, %v1439
      %v1463 = vadd.f32 %v1288, %v1444
      %v1464 = vadd.f32 %v1289, %v1447
      %v1465 = vadd.f32 %v1290, %v1452
      %v1466 = vld [vmem:[%s232 + $0x4] sm:$0xf]
      %v1467 = vld [vmem:[%s232 + $0x8] sm:$0xf]
      %v1468 = vld [vmem:[%s232 + $0xc] sm:$0xf]
      %v1469 = vld [vmem:[%s232 + $0x10] sm:$0xf]
      %v1470 = vld [vmem:[%s232 + $0x14] sm:$0xf]
      %v1471 = vld [vmem:[%s232 + $0x18] sm:$0xf]
      %v1472 = vld [vmem:[%s232 + $0x1c] sm:$0xf]
      %v1473 = vld [vmem:[%s232 + $0x20] sm:$0xf]
      %v1474 = vld [vmem:[%s232 + $0x24] sm:$0xf]
      %v1475 = vld [vmem:[%s232 + $0x28] sm:$0x1]
      %s1476 = scalar_lea.vmem %s1, 32
      %v1477 = vld [vmem:[%s1476] sm:$0xf]
      %v1488 = vunpack.c.l.b16 %v1466
      %v1489 = vunpack.c.l.b16 %v1467
      %v1490 = vunpack.c.l.b16 %v1468
      %v1491 = vunpack.c.l.b16 %v1469
      %v1492 = vunpack.c.l.b16 %v1470
      %v1493 = vunpack.c.l.b16 %v1471
      %v1494 = vunpack.c.l.b16 %v1472
      %v1495 = vunpack.c.l.b16 %v1473
      %v1496 = vunpack.c.l.b16 %v1474
      %v1497 = vunpack.c.l.b16 %v1475
      %v1498 = vpack.c.b16 %v1489, %v1488
      %v1499 = vpack.c.b16 %v1491, %v1490
      %v1500 = vpack.c.b16 %v1493, %v1492
      %v1501 = vpack.c.b16 %v1495, %v1494
      %v1502 = vpack.c.b16 %v1497, %v1496
      %v1504 = vshrl.u32 %v1498, 16
      %v1506 = vshll.u32 %v1498, 16
      %v1508 = vrot.slane %v1506, 1
      %v1509 = vor.u32 %v1504, %v1508
      %v1511 = vshll.u32 %v1499, 16
      %v1513 = vrot.slane %v1511, 1
      %v1514 = vsel %vm534, %v1509, %v1513
      %v1515 = vshrl.u32 %v1499, 16
      %v1517 = vor.u32 %v1515, %v1513
      %v1519 = vshll.u32 %v1500, 16
      %v1521 = vrot.slane %v1519, 1
      %v1522 = vsel %vm534, %v1517, %v1521
      %v1523 = vshrl.u32 %v1500, 16
      %v1525 = vor.u32 %v1523, %v1521
      %v1527 = vshll.u32 %v1501, 16
      %v1529 = vrot.slane %v1527, 1
      %v1530 = vsel %vm534, %v1525, %v1529
      %v1531 = vshrl.u32 %v1501, 16
      %v1533 = vor.u32 %v1531, %v1529
      %v1535 = vshll.u32 %v1502, 16
      %v1537 = vrot.slane %v1535, 1
      %v1538 = vsel %vm534, %v1533, %v1537
      %v1539 = vshrl.u32 %v1502, 16
      %v1541 = vor.u32 %v1539, %v1537
      %v1543 = vsel %vm292, %v1514, 0
      %v1546 = vsel %vm292, %v1522, 0
      %v1549 = vsel %vm292, %v1530, 0
      %v1552 = vsel %vm292, %v1538, 0
      %v1555 = vsel %vm292, %v1541, 0
      %v1558 = vsel %vm308, %v1477, 0
      %1560 = vmatprep.subr.bf16.mxu0 0
      %1561 = vmatpush1.bf16.msra.mxu0 %v1558
      %1562 = vmatprep.subr.bf16.mxu0 0
      %1563 = vmatpush1.bf16.msra.mxu0 0
      %1564 = vmatprep.subr.bf16.mxu0 0
      %1565 = vmatpush1.bf16.msra.mxu0 0
      %1566 = vmatprep.subr.bf16.mxu0 0
      %1567 = vmatpush1.bf16.msra.mxu0 0
      %1568 = vmatprep.subr.bf16.mxu0 0
      %1569 = vmatpush1.bf16.msra.mxu0 0
      %1570 = vmatprep.subr.bf16.mxu0 0
      %1571 = vmatpush1.bf16.msra.mxu0 0
      %1572 = vmatprep.subr.bf16.mxu0 0
      %1573 = vmatpush1.bf16.msra.mxu0 0
      %1574 = vmatprep.subr.bf16.mxu0 0
      %1575 = vmatpush1.bf16.msra.mxu0 0
      %1576 = vmatprep.subr.bf16.mxu0 0
      %1577 = vmatpush1.bf16.msra.mxu0 0
      %1578 = vmatprep.subr.bf16.mxu0 0
      %1579 = vmatpush1.bf16.msra.mxu0 0
      %1580 = vmatprep.subr.bf16.mxu0 0
      %1581 = vmatpush1.bf16.msra.mxu0 0
      %1582 = vmatprep.subr.bf16.mxu0 0
      %1583 = vmatpush1.bf16.msra.mxu0 0
      %1584 = vmatprep.subr.bf16.mxu0 0
      %1585 = vmatpush1.bf16.msra.mxu0 0
      %1586 = vmatprep.subr.bf16.mxu0 0
      %1587 = vmatpush1.bf16.msra.mxu0 0
      %1588 = vmatprep.subr.bf16.mxu0 0
      %1589 = vmatpush1.bf16.msra.mxu0 0
      %1590 = vmatprep.subr.bf16.mxu0 0
      %1591 = vmatpush1.bf16.msra.mxu0 0
      %1592 = vmatprep.mubr.bf16.mxu0 0
      %1593 = vmatmul.mubr.bf16.gmra.mrb[0].mxu0 %v1543
      %v1594 = vpop.f32.mrb[0].mxu0
      %v1595 = vadd.f32 0.0, %v1594
      %v1596 = vpop.f32.mrb[0].mxu0
      %v1597 = vpop.f32.mrb[0].mxu0
      %v1598 = vadd.f32 0.0, %v1597
      %v1599 = vpop.f32.mrb[0].mxu0
      %1600 = vmatprep.mubr.bf16.mxu0 0
      %1601 = vmatmul.mubr.bf16.gmra.mrb[0].mxu0 %v1546
      %v1602 = vpop.f32.mrb[0].mxu0
      %v1603 = vadd.f32 0.0, %v1602
      %v1604 = vpop.f32.mrb[0].mxu0
      %v1605 = vpop.f32.mrb[0].mxu0
      %v1606 = vadd.f32 0.0, %v1605
      %v1607 = vpop.f32.mrb[0].mxu0
      %1608 = vmatprep.mubr.bf16.mxu0 0
      %1609 = vmatmul.mubr.bf16.gmra.mrb[0].mxu0 %v1549
      %v1610 = vpop.f32.mrb[0].mxu0
      %v1611 = vadd.f32 0.0, %v1610
      %v1612 = vpop.f32.mrb[0].mxu0
      %v1613 = vpop.f32.mrb[0].mxu0
      %v1614 = vadd.f32 0.0, %v1613
      %v1615 = vpop.f32.mrb[0].mxu0
      %1616 = vmatprep.mubr.bf16.mxu0 0
      %1617 = vmatmul.mubr.bf16.gmra.mrb[0].mxu0 %v1552
      %v1618 = vpop.f32.mrb[0].mxu0
      %v1619 = vadd.f32 0.0, %v1618
      %v1620 = vpop.f32.mrb[0].mxu0
      %v1621 = vpop.f32.mrb[0].mxu0
      %v1622 = vadd.f32 0.0, %v1621
      %v1623 = vpop.f32.mrb[0].mxu0
      %1624 = vmatprep.mubr.bf16.mxu0 0
      %1625 = vmatmul.mubr.bf16.gmra.mrb[0].mxu0 %v1555
      %v1626 = vpop.f32.mrb[0].mxu0
      %v1627 = vadd.f32 0.0, %v1626
      %v1628 = vpop.f32.mrb[0].mxu0
      %v1629 = vpop.f32.mrb[0].mxu0
      %v1630 = vpop.f32.mrb[0].mxu0
      %1631 = vdwg.mxu0
      %v1632 = vadd.f32 %v1457, %v1595
      %v1633 = vadd.f32 %v1458, %v1598
      %v1634 = vadd.f32 %v1459, %v1603
      %v1635 = vadd.f32 %v1460, %v1606
      %v1636 = vadd.f32 %v1461, %v1611
      %v1637 = vadd.f32 %v1462, %v1614
      %v1638 = vadd.f32 %v1463, %v1619
      %v1639 = vadd.f32 %v1464, %v1622
      %v1640 = vadd.f32 %v1465, %v1627
      %v1641 = vld [vmem:[%s257 + $0x4] sm:$0xf]
      %v1642 = vld [vmem:[%s257 + $0x8] sm:$0xf]
      %v1643 = vld [vmem:[%s257 + $0xc] sm:$0xf]
      %v1644 = vld [vmem:[%s257 + $0x10] sm:$0xf]
      %v1645 = vld [vmem:[%s257 + $0x14] sm:$0xf]
      %v1646 = vld [vmem:[%s257 + $0x18] sm:$0xf]
      %v1647 = vld [vmem:[%s257 + $0x1c] sm:$0xf]
      %v1648 = vld [vmem:[%s257 + $0x20] sm:$0xf]
      %v1649 = vld [vmem:[%s257 + $0x24] sm:$0xf]
      %v1650 = vld [vmem:[%s257 + $0x28] sm:$0x1]
      %s1651 = scalar_lea.vmem %s1, 36
      %v1652 = vld [vmem:[%s1651] sm:$0xf]
      %v1663 = vunpack.c.l.b16 %v1641
      %v1664 = vunpack.c.l.b16 %v1642
      %v1665 = vunpack.c.l.b16 %v1643
      %v1666 = vunpack.c.l.b16 %v1644
      %v1667 = vunpack.c.l.b16 %v1645
      %v1668 = vunpack.c.l.b16 %v1646
      %v1669 = vunpack.c.l.b16 %v1647
      %v1670 = vunpack.c.l.b16 %v1648
      %v1671 = vunpack.c.l.b16 %v1649
      %v1672 = vunpack.c.l.b16 %v1650
      %v1673 = vpack.c.b16 %v1664, %v1663
      %v1674 = vpack.c.b16 %v1666, %v1665
      %v1675 = vpack.c.b16 %v1668, %v1667
      %v1676 = vpack.c.b16 %v1670, %v1669
      %v1677 = vpack.c.b16 %v1672, %v1671
      %v1679 = vshrl.u32 %v1673, 16
      %v1681 = vshll.u32 %v1673, 16
      %v1683 = vrot.slane %v1681, 1
      %v1684 = vor.u32 %v1679, %v1683
      %v1686 = vshll.u32 %v1674, 16
      %v1688 = vrot.slane %v1686, 1
      %v1689 = vsel %vm534, %v1684, %v1688
      %v1690 = vshrl.u32 %v1674, 16
      %v1692 = vor.u32 %v1690, %v1688
      %v1694 = vshll.u32 %v1675, 16
      %v1696 = vrot.slane %v1694, 1
      %v1697 = vsel %vm534, %v1692, %v1696
      %v1698 = vshrl.u32 %v1675, 16
      %v1700 = vor.u32 %v1698, %v1696
      %v1702 = vshll.u32 %v1676, 16
      %v1704 = vrot.slane %v1702, 1
      %v1705 = vsel %vm534, %v1700, %v1704
      %v1706 = vshrl.u32 %v1676, 16
      %v1708 = vor.u32 %v1706, %v1704
      %v1710 = vshll.u32 %v1677, 16
      %v1712 = vrot.slane %v1710, 1
      %v1713 = vsel %vm534, %v1708, %v1712
      %v1714 = vshrl.u32 %v1677, 16
      %v1716 = vor.u32 %v1714, %v1712
      %v1718 = vsel %vm292, %v1689, 0
      %v1721 = vsel %vm292, %v1697, 0
      %v1724 = vsel %vm292, %v1705, 0
      %v1727 = vsel %vm292, %v1713, 0
      %v1730 = vsel %vm292, %v1716, 0
      %v1733 = vsel %vm308, %v1652, 0
      %1735 = vmatprep.subr.bf16.mxu0 0
      %1736 = vmatpush1.bf16.msra.mxu0 %v1733
      %1737 = vmatprep.subr.bf16.mxu0 0
      %1738 = vmatpush1.bf16.msra.mxu0 0
      %1739 = vmatprep.subr.bf16.mxu0 0
      %1740 = vmatpush1.bf16.msra.mxu0 0
      %1741 = vmatprep.subr.bf16.mxu0 0
      %1742 = vmatpush1.bf16.msra.mxu0 0
      %1743 = vmatprep.subr.bf16.mxu0 0
      %1744 = vmatpush1.bf16.msra.mxu0 0
      %1745 = vmatprep.subr.bf16.mxu0 0
      %1746 = vmatpush1.bf16.msra.mxu0 0
      %1747 = vmatprep.subr.bf16.mxu0 0
      %1748 = vmatpush1.bf16.msra.mxu0 0
      %1749 = vmatprep.subr.bf16.mxu0 0
      %1750 = vmatpush1.bf16.msra.mxu0 0
      %1751 = vmatprep.subr.bf16.mxu0 0
      %1752 = vmatpush1.bf16.msra.mxu0 0
      %1753 = vmatprep.subr.bf16.mxu0 0
      %1754 = vmatpush1.bf16.msra.mxu0 0
      %1755 = vmatprep.subr.bf16.mxu0 0
      %1756 = vmatpush1.bf16.msra.mxu0 0
      %1757 = vmatprep.subr.bf16.mxu0 0
      %1758 = vmatpush1.bf16.msra.mxu0 0
      %1759 = vmatprep.subr.bf16.mxu0 0
      %1760 = vmatpush1.bf16.msra.mxu0 0
      %1761 = vmatprep.subr.bf16.mxu0 0
      %1762 = vmatpush1.bf16.msra.mxu0 0
      %1763 = vmatprep.subr.bf16.mxu0 0
      %1764 = vmatpush1.bf16.msra.mxu0 0
      %1765 = vmatprep.subr.bf16.mxu0 0
      %1766 = vmatpush1.bf16.msra.mxu0 0
      %1767 = vmatprep.mubr.bf16.mxu0 0
      %1768 = vmatmul.mubr.bf16.gmra.mrb[0].mxu0 %v1718
      %v1769 = vpop.f32.mrb[0].mxu0
      %v1770 = vadd.f32 0.0, %v1769
      %v1771 = vpop.f32.mrb[0].mxu0
      %v1772 = vpop.f32.mrb[0].mxu0
      %v1773 = vadd.f32 0.0, %v1772
      %v1774 = vpop.f32.mrb[0].mxu0
      %1775 = vmatprep.mubr.bf16.mxu0 0
      %1776 = vmatmul.mubr.bf16.gmra.mrb[0].mxu0 %v1721
      %v1777 = vpop.f32.mrb[0].mxu0
      %v1778 = vadd.f32 0.0, %v1777
      %v1779 = vpop.f32.mrb[0].mxu0
      %v1780 = vpop.f32.mrb[0].mxu0
      %v1781 = vadd.f32 0.0, %v1780
      %v1782 = vpop.f32.mrb[0].mxu0
      %1783 = vmatprep.mubr.bf16.mxu0 0
      %1784 = vmatmul.mubr.bf16.gmra.mrb[0].mxu0 %v1724
      %v1785 = vpop.f32.mrb[0].mxu0
      %v1786 = vadd.f32 0.0, %v1785
      %v1787 = vpop.f32.mrb[0].mxu0
      %v1788 = vpop.f32.mrb[0].mxu0
      %v1789 = vadd.f32 0.0, %v1788
      %v1790 = vpop.f32.mrb[0].mxu0
      %1791 = vmatprep.mubr.bf16.mxu0 0
      %1792 = vmatmul.mubr.bf16.gmra.mrb[0].mxu0 %v1727
      %v1793 = vpop.f32.mrb[0].mxu0
      %v1794 = vadd.f32 0.0, %v1793
      %v1795 = vpop.f32.mrb[0].mxu0
      %v1796 = vpop.f32.mrb[0].mxu0
      %v1797 = vadd.f32 0.0, %v1796
      %v1798 = vpop.f32.mrb[0].mxu0
      %1799 = vmatprep.mubr.bf16.mxu0 0
      %1800 = vmatmul.mubr.bf16.gmra.mrb[0].mxu0 %v1730
      %v1801 = vpop.f32.mrb[0].mxu0
      %v1802 = vadd.f32 0.0, %v1801
      %v1803 = vpop.f32.mrb[0].mxu0
      %v1804 = vpop.f32.mrb[0].mxu0
      %v1805 = vpop.f32.mrb[0].mxu0
      %1806 = vdwg.mxu0
      %v1807 = vadd.f32 %v1632, %v1770
      %v1808 = vadd.f32 %v1633, %v1773
      %v1809 = vadd.f32 %v1634, %v1778
      %v1810 = vadd.f32 %v1635, %v1781
      %v1811 = vadd.f32 %v1636, %v1786
      %v1812 = vadd.f32 %v1637, %v1789
      %v1813 = vadd.f32 %v1638, %v1794
      %v1814 = vadd.f32 %v1639, %v1797
      %v1815 = vadd.f32 %v1640, %v1802
      %v1816 = vld [vmem:[%s232 + $0x4] sm:$0xe]
      %s1817 = scalar_lea.vmem %s1, 40
      %v1818 = vld [vmem:[%s1817] sm:$0xf]
      %v1820 = vunpack.c.l.b16 %v1816
      %v1821 = vpack.c.b16 %v1489, %v1820
      %vm1822 = vcmask 1046528
      %v1823 = vrot.slane %v1821, 1
      %v1824 = vrot.slane %v1499, 1
      %v1825 = vsel %vm1822, %v1823, %v1824
      %v1826 = vrot.slane %v1500, 1
      %v1827 = vsel %vm1822, %v1824, %v1826
      %v1828 = vrot.slane %v1501, 1
      %v1829 = vsel %vm1822, %v1826, %v1828
      %v1830 = vrot.slane %v1502, 1
      %v1831 = vsel %vm1822, %v1828, %v1830
      %v1833 = vsel %vm292, %v1825, 0
      %v1836 = vsel %vm292, %v1827, 0
      %v1839 = vsel %vm292, %v1829, 0
      %v1842 = vsel %vm292, %v1831, 0
      %v1845 = vsel %vm292, %v1830, 0
      %v1848 = vsel %vm308, %v1818, 0
      %1850 = vmatprep.subr.bf16.mxu0 0
      %1851 = vmatpush1.bf16.msra.mxu0 %v1848
      %1852 = vmatprep.subr.bf16.mxu0 0
      %1853 = vmatpush1.bf16.msra.mxu0 0
      %1854 = vmatprep.subr.bf16.mxu0 0
      %1855 = vmatpush1.bf16.msra.mxu0 0
      %1856 = vmatprep.subr.bf16.mxu0 0
      %1857 = vmatpush1.bf16.msra.mxu0 0
      %1858 = vmatprep.subr.bf16.mxu0 0
      %1859 = vmatpush1.bf16.msra.mxu0 0
      %1860 = vmatprep.subr.bf16.mxu0 0
      %1861 = vmatpush1.bf16.msra.mxu0 0
      %1862 = vmatprep.subr.bf16.mxu0 0
      %1863 = vmatpush1.bf16.msra.mxu0 0
      %1864 = vmatprep.subr.bf16.mxu0 0
      %1865 = vmatpush1.bf16.msra.mxu0 0
      %1866 = vmatprep.subr.bf16.mxu0 0
      %1867 = vmatpush1.bf16.msra.mxu0 0
      %1868 = vmatprep.subr.bf16.mxu0 0
      %1869 = vmatpush1.bf16.msra.mxu0 0
      %1870 = vmatprep.subr.bf16.mxu0 0
      %1871 = vmatpush1.bf16.msra.mxu0 0
      %1872 = vmatprep.subr.bf16.mxu0 0
      %1873 = vmatpush1.bf16.msra.mxu0 0
      %1874 = vmatprep.subr.bf16.mxu0 0
      %1875 = vmatpush1.bf16.msra.mxu0 0
      %1876 = vmatprep.subr.bf16.mxu0 0
      %1877 = vmatpush1.bf16.msra.mxu0 0
      %1878 = vmatprep.subr.bf16.mxu0 0
      %1879 = vmatpush1.bf16.msra.mxu0 0
      %1880 = vmatprep.subr.bf16.mxu0 0
      %1881 = vmatpush1.bf16.msra.mxu0 0
      %1882 = vmatprep.mubr.bf16.mxu0 0
      %1883 = vmatmul.mubr.bf16.gmra.mrb[0].mxu0 %v1833
      %v1884 = vpop.f32.mrb[0].mxu0
      %v1885 = vadd.f32 0.0, %v1884
      %v1886 = vpop.f32.mrb[0].mxu0
      %v1887 = vpop.f32.mrb[0].mxu0
      %v1888 = vadd.f32 0.0, %v1887
      %v1889 = vpop.f32.mrb[0].mxu0
      %1890 = vmatprep.mubr.bf16.mxu0 0
      %1891 = vmatmul.mubr.bf16.gmra.mrb[0].mxu0 %v1836
      %v1892 = vpop.f32.mrb[0].mxu0
      %v1893 = vadd.f32 0.0, %v1892
      %v1894 = vpop.f32.mrb[0].mxu0
      %v1895 = vpop.f32.mrb[0].mxu0
      %v1896 = vadd.f32 0.0, %v1895
      %v1897 = vpop.f32.mrb[0].mxu0
      %1898 = vmatprep.mubr.bf16.mxu0 0
      %1899 = vmatmul.mubr.bf16.gmra.mrb[0].mxu0 %v1839
      %v1900 = vpop.f32.mrb[0].mxu0
      %v1901 = vadd.f32 0.0, %v1900
      %v1902 = vpop.f32.mrb[0].mxu0
      %v1903 = vpop.f32.mrb[0].mxu0
      %v1904 = vadd.f32 0.0, %v1903
      %v1905 = vpop.f32.mrb[0].mxu0
      %1906 = vmatprep.mubr.bf16.mxu0 0
      %1907 = vmatmul.mubr.bf16.gmra.mrb[0].mxu0 %v1842
      %v1908 = vpop.f32.mrb[0].mxu0
      %v1909 = vadd.f32 0.0, %v1908
      %v1910 = vpop.f32.mrb[0].mxu0
      %v1911 = vpop.f32.mrb[0].mxu0
      %v1912 = vadd.f32 0.0, %v1911
      %v1913 = vpop.f32.mrb[0].mxu0
      %1914 = vmatprep.mubr.bf16.mxu0 0
      %1915 = vmatmul.mubr.bf16.gmra.mrb[0].mxu0 %v1845
      %v1916 = vpop.f32.mrb[0].mxu0
      %v1917 = vadd.f32 0.0, %v1916
      %v1918 = vpop.f32.mrb[0].mxu0
      %v1919 = vpop.f32.mrb[0].mxu0
      %v1920 = vpop.f32.mrb[0].mxu0
      %1921 = vdwg.mxu0
      %v1922 = vadd.f32 %v1807, %v1885
      %v1923 = vadd.f32 %v1808, %v1888
      %v1924 = vadd.f32 %v1809, %v1893
      %v1925 = vadd.f32 %v1810, %v1896
      %v1926 = vadd.f32 %v1811, %v1901
      %v1927 = vadd.f32 %v1812, %v1904
      %v1928 = vadd.f32 %v1813, %v1909
      %v1929 = vadd.f32 %v1814, %v1912
      %v1930 = vadd.f32 %v1815, %v1917
      %v1931 = vld [vmem:[%s257 + $0x4] sm:$0xe]
      %s1932 = scalar_lea.vmem %s1, 44
      %v1933 = vld [vmem:[%s1932] sm:$0xf]
      %v1935 = vunpack.c.l.b16 %v1931
      %v1936 = vpack.c.b16 %v1664, %v1935
      %v1937 = vrot.slane %v1936, 1
      %v1938 = vrot.slane %v1674, 1
      %v1939 = vsel %vm1822, %v1937, %v1938
      %v1940 = vrot.slane %v1675, 1
      %v1941 = vsel %vm1822, %v1938, %v1940
      %v1942 = vrot.slane %v1676, 1
      %v1943 = vsel %vm1822, %v1940, %v1942
      %v1944 = vrot.slane %v1677, 1
      %v1945 = vsel %vm1822, %v1942, %v1944
      %v1947 = vsel %vm292, %v1939, 0
      %v1950 = vsel %vm292, %v1941, 0
      %v1953 = vsel %vm292, %v1943, 0
      %v1956 = vsel %vm292, %v1945, 0
      %v1959 = vsel %vm292, %v1944, 0
      %v1962 = vsel %vm308, %v1933, 0
      %1964 = vmatprep.subr.bf16.mxu0 0
      %1965 = vmatpush1.bf16.msra.mxu0 %v1962
      %1966 = vmatprep.subr.bf16.mxu0 0
      %1967 = vmatpush1.bf16.msra.mxu0 0
      %1968 = vmatprep.subr.bf16.mxu0 0
      %1969 = vmatpush1.bf16.msra.mxu0 0
      %1970 = vmatprep.subr.bf16.mxu0 0
      %1971 = vmatpush1.bf16.msra.mxu0 0
      %1972 = vmatprep.subr.bf16.mxu0 0
      %1973 = vmatpush1.bf16.msra.mxu0 0
      %1974 = vmatprep.subr.bf16.mxu0 0
      %1975 = vmatpush1.bf16.msra.mxu0 0
      %1976 = vmatprep.subr.bf16.mxu0 0
      %1977 = vmatpush1.bf16.msra.mxu0 0
      %1978 = vmatprep.subr.bf16.mxu0 0
      %1979 = vmatpush1.bf16.msra.mxu0 0
      %1980 = vmatprep.subr.bf16.mxu0 0
      %1981 = vmatpush1.bf16.msra.mxu0 0
      %1982 = vmatprep.subr.bf16.mxu0 0
      %1983 = vmatpush1.bf16.msra.mxu0 0
      %1984 = vmatprep.subr.bf16.mxu0 0
      %1985 = vmatpush1.bf16.msra.mxu0 0
      %1986 = vmatprep.subr.bf16.mxu0 0
      %1987 = vmatpush1.bf16.msra.mxu0 0
      %1988 = vmatprep.subr.bf16.mxu0 0
      %1989 = vmatpush1.bf16.msra.mxu0 0
      %1990 = vmatprep.subr.bf16.mxu0 0
      %1991 = vmatpush1.bf16.msra.mxu0 0
      %1992 = vmatprep.subr.bf16.mxu0 0
      %1993 = vmatpush1.bf16.msra.mxu0 0
      %1994 = vmatprep.subr.bf16.mxu0 0
      %1995 = vmatpush1.bf16.msra.mxu0 0
      %1996 = vmatprep.mubr.bf16.mxu0 0
      %1997 = vmatmul.mubr.bf16.gmra.mrb[0].mxu0 %v1947
      %v1998 = vpop.f32.mrb[0].mxu0
      %v1999 = vadd.f32 0.0, %v1998
      %v2000 = vpop.f32.mrb[0].mxu0
      %v2001 = vpop.f32.mrb[0].mxu0
      %v2002 = vadd.f32 0.0, %v2001
      %v2003 = vpop.f32.mrb[0].mxu0
      %2004 = vmatprep.mubr.bf16.mxu0 0
      %2005 = vmatmul.mubr.bf16.gmra.mrb[0].mxu0 %v1950
      %v2006 = vpop.f32.mrb[0].mxu0
      %v2007 = vadd.f32 0.0, %v2006
      %v2008 = vpop.f32.mrb[0].mxu0
      %v2009 = vpop.f32.mrb[0].mxu0
      %v2010 = vadd.f32 0.0, %v2009
      %v2011 = vpop.f32.mrb[0].mxu0
      %2012 = vmatprep.mubr.bf16.mxu0 0
      %2013 = vmatmul.mubr.bf16.gmra.mrb[0].mxu0 %v1953
      %v2014 = vpop.f32.mrb[0].mxu0
      %v2015 = vadd.f32 0.0, %v2014
      %v2016 = vpop.f32.mrb[0].mxu0
      %v2017 = vpop.f32.mrb[0].mxu0
      %v2018 = vadd.f32 0.0, %v2017
      %v2019 = vpop.f32.mrb[0].mxu0
      %2020 = vmatprep.mubr.bf16.mxu0 0
      %2021 = vmatmul.mubr.bf16.gmra.mrb[0].mxu0 %v1956
      %v2022 = vpop.f32.mrb[0].mxu0
      %v2023 = vadd.f32 0.0, %v2022
      %v2024 = vpop.f32.mrb[0].mxu0
      %v2025 = vpop.f32.mrb[0].mxu0
      %v2026 = vadd.f32 0.0, %v2025
      %v2027 = vpop.f32.mrb[0].mxu0
      %2028 = vmatprep.mubr.bf16.mxu0 0
      %2029 = vmatmul.mubr.bf16.gmra.mrb[0].mxu0 %v1959
      %v2030 = vpop.f32.mrb[0].mxu0
      %v2031 = vadd.f32 0.0, %v2030
      %v2032 = vpop.f32.mrb[0].mxu0
      %v2033 = vpop.f32.mrb[0].mxu0
      %v2034 = vpop.f32.mrb[0].mxu0
      %2035 = vdwg.mxu0
      %v2036 = vadd.f32 %v1922, %v1999
      %v2037 = vadd.f32 %v1923, %v2002
      %v2038 = vadd.f32 %v1924, %v2007
      %v2039 = vadd.f32 %v1925, %v2010
      %v2040 = vadd.f32 %v1926, %v2015
      %v2041 = vadd.f32 %v1927, %v2018
      %v2042 = vadd.f32 %v1928, %v2023
      %v2043 = vadd.f32 %v1929, %v2026
      %v2044 = vadd.f32 %v1930, %v2031
      %v2045 = vld [vmem:[%s848 + $0x4] sm:$0xf]
      %v2046 = vld [vmem:[%s848 + $0x8] sm:$0xf]
      %v2047 = vld [vmem:[%s848 + $0xc] sm:$0xf]
      %v2048 = vld [vmem:[%s848 + $0x10] sm:$0xf]
      %v2049 = vld [vmem:[%s848 + $0x14] sm:$0xf]
      %v2050 = vld [vmem:[%s848 + $0x18] sm:$0xf]
      %v2051 = vld [vmem:[%s848 + $0x1c] sm:$0xf]
      %v2052 = vld [vmem:[%s848 + $0x20] sm:$0xf]
      %v2053 = vld [vmem:[%s848 + $0x24] sm:$0xf]
      %v2054 = vld [vmem:[%s848 + $0x28] sm:$0x1]
      %s2055 = scalar_lea.vmem %s1, 48
      %v2056 = vld [vmem:[%s2055] sm:$0xf]
      %v2067 = vunpack.c.l.b16 %v2045
      %v2068 = vunpack.c.l.b16 %v2046
      %v2069 = vunpack.c.l.b16 %v2047
      %v2070 = vunpack.c.l.b16 %v2048
      %v2071 = vunpack.c.l.b16 %v2049
      %v2072 = vunpack.c.l.b16 %v2050
      %v2073 = vunpack.c.l.b16 %v2051
      %v2074 = vunpack.c.l.b16 %v2052
      %v2075 = vunpack.c.l.b16 %v2053
      %v2076 = vunpack.c.l.b16 %v2054
      %v2077 = vpack.c.b16 %v2068, %v2067
      %v2078 = vpack.c.b16 %v2070, %v2069
      %v2079 = vpack.c.b16 %v2072, %v2071
      %v2080 = vpack.c.b16 %v2074, %v2073
      %v2081 = vpack.c.b16 %v2076, %v2075
      %v2083 = vshrl.u32 %v2077, 16
      %v2085 = vshll.u32 %v2077, 16
      %v2087 = vrot.slane %v2085, 1
      %v2088 = vor.u32 %v2083, %v2087
      %v2090 = vshll.u32 %v2078, 16
      %v2092 = vrot.slane %v2090, 1
      %v2093 = vsel %vm534, %v2088, %v2092
      %v2094 = vshrl.u32 %v2078, 16
      %v2096 = vor.u32 %v2094, %v2092
      %v2098 = vshll.u32 %v2079, 16
      %v2100 = vrot.slane %v2098, 1
      %v2101 = vsel %vm534, %v2096, %v2100
      %v2102 = vshrl.u32 %v2079, 16
      %v2104 = vor.u32 %v2102, %v2100
      %v2106 = vshll.u32 %v2080, 16
      %v2108 = vrot.slane %v2106, 1
      %v2109 = vsel %vm534, %v2104, %v2108
      %v2110 = vshrl.u32 %v2080, 16
      %v2112 = vor.u32 %v2110, %v2108
      %v2114 = vshll.u32 %v2081, 16
      %v2116 = vrot.slane %v2114, 1
      %v2117 = vsel %vm534, %v2112, %v2116
      %v2118 = vshrl.u32 %v2081, 16
      %v2120 = vor.u32 %v2118, %v2116
      %v2122 = vsel %vm292, %v2093, 0
      %v2125 = vsel %vm292, %v2101, 0
      %v2128 = vsel %vm292, %v2109, 0
      %v2131 = vsel %vm292, %v2117, 0
      %v2134 = vsel %vm292, %v2120, 0
      %v2137 = vsel %vm308, %v2056, 0
      %2139 = vmatprep.subr.bf16.mxu0 0
      %2140 = vmatpush1.bf16.msra.mxu0 %v2137
      %2141 = vmatprep.subr.bf16.mxu0 0
      %2142 = vmatpush1.bf16.msra.mxu0 0
      %2143 = vmatprep.subr.bf16.mxu0 0
      %2144 = vmatpush1.bf16.msra.mxu0 0
      %2145 = vmatprep.subr.bf16.mxu0 0
      %2146 = vmatpush1.bf16.msra.mxu0 0
      %2147 = vmatprep.subr.bf16.mxu0 0
      %2148 = vmatpush1.bf16.msra.mxu0 0
      %2149 = vmatprep.subr.bf16.mxu0 0
      %2150 = vmatpush1.bf16.msra.mxu0 0
      %2151 = vmatprep.subr.bf16.mxu0 0
      %2152 = vmatpush1.bf16.msra.mxu0 0
      %2153 = vmatprep.subr.bf16.mxu0 0
      %2154 = vmatpush1.bf16.msra.mxu0 0
      %2155 = vmatprep.subr.bf16.mxu0 0
      %2156 = vmatpush1.bf16.msra.mxu0 0
      %2157 = vmatprep.subr.bf16.mxu0 0
      %2158 = vmatpush1.bf16.msra.mxu0 0
      %2159 = vmatprep.subr.bf16.mxu0 0
      %2160 = vmatpush1.bf16.msra.mxu0 0
      %2161 = vmatprep.subr.bf16.mxu0 0
      %2162 = vmatpush1.bf16.msra.mxu0 0
      %2163 = vmatprep.subr.bf16.mxu0 0
      %2164 = vmatpush1.bf16.msra.mxu0 0
      %2165 = vmatprep.subr.bf16.mxu0 0
      %2166 = vmatpush1.bf16.msra.mxu0 0
      %2167 = vmatprep.subr.bf16.mxu0 0
      %2168 = vmatpush1.bf16.msra.mxu0 0
      %2169 = vmatprep.subr.bf16.mxu0 0
      %2170 = vmatpush1.bf16.msra.mxu0 0
      %2171 = vmatprep.mubr.bf16.mxu0 0
      %2172 = vmatmul.mubr.bf16.gmra.mrb[0].mxu0 %v2122
      %v2173 = vpop.f32.mrb[0].mxu0
      %v2174 = vadd.f32 0.0, %v2173
      %v2175 = vpop.f32.mrb[0].mxu0
      %v2176 = vpop.f32.mrb[0].mxu0
      %v2177 = vadd.f32 0.0, %v2176
      %v2178 = vpop.f32.mrb[0].mxu0
      %2179 = vmatprep.mubr.bf16.mxu0 0
      %2180 = vmatmul.mubr.bf16.gmra.mrb[0].mxu0 %v2125
      %v2181 = vpop.f32.mrb[0].mxu0
      %v2182 = vadd.f32 0.0, %v2181
      %v2183 = vpop.f32.mrb[0].mxu0
      %v2184 = vpop.f32.mrb[0].mxu0
      %v2185 = vadd.f32 0.0, %v2184
      %v2186 = vpop.f32.mrb[0].mxu0
      %2187 = vmatprep.mubr.bf16.mxu0 0
      %2188 = vmatmul.mubr.bf16.gmra.mrb[0].mxu0 %v2128
      %v2189 = vpop.f32.mrb[0].mxu0
      %v2190 = vadd.f32 0.0, %v2189
      %v2191 = vpop.f32.mrb[0].mxu0
      %v2192 = vpop.f32.mrb[0].mxu0
      %v2193 = vadd.f32 0.0, %v2192
      %v2194 = vpop.f32.mrb[0].mxu0
      %2195 = vmatprep.mubr.bf16.mxu0 0
      %2196 = vmatmul.mubr.bf16.gmra.mrb[0].mxu0 %v2131
      %v2197 = vpop.f32.mrb[0].mxu0
      %v2198 = vadd.f32 0.0, %v2197
      %v2199 = vpop.f32.mrb[0].mxu0
      %v2200 = vpop.f32.mrb[0].mxu0
      %v2201 = vadd.f32 0.0, %v2200
      %v2202 = vpop.f32.mrb[0].mxu0
      %2203 = vmatprep.mubr.bf16.mxu0 0
      %2204 = vmatmul.mubr.bf16.gmra.mrb[0].mxu0 %v2134
      %v2205 = vpop.f32.mrb[0].mxu0
      %v2206 = vadd.f32 0.0, %v2205
      %v2207 = vpop.f32.mrb[0].mxu0
      %v2208 = vpop.f32.mrb[0].mxu0
      %v2209 = vpop.f32.mrb[0].mxu0
      %2210 = vdwg.mxu0
      %v2211 = vadd.f32 %v2036, %v2174
      %v2212 = vadd.f32 %v2037, %v2177
      %v2213 = vadd.f32 %v2038, %v2182
      %v2214 = vadd.f32 %v2039, %v2185
      %v2215 = vadd.f32 %v2040, %v2190
      %v2216 = vadd.f32 %v2041, %v2193
      %v2217 = vadd.f32 %v2042, %v2198
      %v2218 = vadd.f32 %v2043, %v2201
      %v2219 = vadd.f32 %v2044, %v2206
      %v2220 = vld [vmem:[%s982 + $0x4] sm:$0xf]
      %v2221 = vld [vmem:[%s982 + $0x8] sm:$0xf]
      %v2222 = vld [vmem:[%s982 + $0xc] sm:$0xf]
      %v2223 = vld [vmem:[%s982 + $0x10] sm:$0xf]
      %v2224 = vld [vmem:[%s982 + $0x14] sm:$0xf]
      %v2225 = vld [vmem:[%s982 + $0x18] sm:$0xf]
      %v2226 = vld [vmem:[%s982 + $0x1c] sm:$0xf]
      %v2227 = vld [vmem:[%s982 + $0x20] sm:$0xf]
      %v2228 = vld [vmem:[%s982 + $0x24] sm:$0xf]
      %v2229 = vld [vmem:[%s982 + $0x28] sm:$0x1]
      %s2230 = scalar_lea.vmem %s1, 52
      %v2231 = vld [vmem:[%s2230] sm:$0xf]
      %v2242 = vunpack.c.l.b16 %v2220
      %v2243 = vunpack.c.l.b16 %v2221
      %v2244 = vunpack.c.l.b16 %v2222
      %v2245 = vunpack.c.l.b16 %v2223
      %v2246 = vunpack.c.l.b16 %v2224
      %v2247 = vunpack.c.l.b16 %v2225
      %v2248 = vunpack.c.l.b16 %v2226
      %v2249 = vunpack.c.l.b16 %v2227
      %v2250 = vunpack.c.l.b16 %v2228
      %v2251 = vunpack.c.l.b16 %v2229
      %v2252 = vpack.c.b16 %v2243, %v2242
      %v2253 = vpack.c.b16 %v2245, %v2244
      %v2254 = vpack.c.b16 %v2247, %v2246
      %v2255 = vpack.c.b16 %v2249, %v2248
      %v2256 = vpack.c.b16 %v2251, %v2250
      %v2258 = vshrl.u32 %v2252, 16
      %v2260 = vshll.u32 %v2252, 16
      %v2262 = vrot.slane %v2260, 1
      %v2263 = vor.u32 %v2258, %v2262
      %v2265 = vshll.u32 %v2253, 16
      %v2267 = vrot.slane %v2265, 1
      %v2268 = vsel %vm534, %v2263, %v2267
      %v2269 = vshrl.u32 %v2253, 16
      %v2271 = vor.u32 %v2269, %v2267
      %v2273 = vshll.u32 %v2254, 16
      %v2275 = vrot.slane %v2273, 1
      %v2276 = vsel %vm534, %v2271, %v2275
      %v2277 = vshrl.u32 %v2254, 16
      %v2279 = vor.u32 %v2277, %v2275
      %v2281 = vshll.u32 %v2255, 16
      %v2283 = vrot.slane %v2281, 1
      %v2284 = vsel %vm534, %v2279, %v2283
      %v2285 = vshrl.u32 %v2255, 16
      %v2287 = vor.u32 %v2285, %v2283
      %v2289 = vshll.u32 %v2256, 16
      %v2291 = vrot.slane %v2289, 1
      %v2292 = vsel %vm534, %v2287, %v2291
      %v2293 = vshrl.u32 %v2256, 16
      %v2295 = vor.u32 %v2293, %v2291
      %v2297 = vsel %vm292, %v2268, 0
      %v2300 = vsel %vm292, %v2276, 0
      %v2303 = vsel %vm292, %v2284, 0
      %v2306 = vsel %vm292, %v2292, 0
      %v2309 = vsel %vm292, %v2295, 0
      %v2312 = vsel %vm308, %v2231, 0
      %2314 = vmatprep.subr.bf16.mxu0 0
      %2315 = vmatpush1.bf16.msra.mxu0 %v2312
      %2316 = vmatprep.subr.bf16.mxu0 0
      %2317 = vmatpush1.bf16.msra.mxu0 0
      %2318 = vmatprep.subr.bf16.mxu0 0
      %2319 = vmatpush1.bf16.msra.mxu0 0
      %2320 = vmatprep.subr.bf16.mxu0 0
      %2321 = vmatpush1.bf16.msra.mxu0 0
      %2322 = vmatprep.subr.bf16.mxu0 0
      %2323 = vmatpush1.bf16.msra.mxu0 0
      %2324 = vmatprep.subr.bf16.mxu0 0
      %2325 = vmatpush1.bf16.msra.mxu0 0
      %2326 = vmatprep.subr.bf16.mxu0 0
      %2327 = vmatpush1.bf16.msra.mxu0 0
      %2328 = vmatprep.subr.bf16.mxu0 0
      %2329 = vmatpush1.bf16.msra.mxu0 0
      %2330 = vmatprep.subr.bf16.mxu0 0
      %2331 = vmatpush1.bf16.msra.mxu0 0
      %2332 = vmatprep.subr.bf16.mxu0 0
      %2333 = vmatpush1.bf16.msra.mxu0 0
      %2334 = vmatprep.subr.bf16.mxu0 0
      %2335 = vmatpush1.bf16.msra.mxu0 0
      %2336 = vmatprep.subr.bf16.mxu0 0
      %2337 = vmatpush1.bf16.msra.mxu0 0
      %2338 = vmatprep.subr.bf16.mxu0 0
      %2339 = vmatpush1.bf16.msra.mxu0 0
      %2340 = vmatprep.subr.bf16.mxu0 0
      %2341 = vmatpush1.bf16.msra.mxu0 0
      %2342 = vmatprep.subr.bf16.mxu0 0
      %2343 = vmatpush1.bf16.msra.mxu0 0
      %2344 = vmatprep.subr.bf16.mxu0 0
      %2345 = vmatpush1.bf16.msra.mxu0 0
      %2346 = vmatprep.mubr.bf16.mxu0 0
      %2347 = vmatmul.mubr.bf16.gmra.mrb[0].mxu0 %v2297
      %v2348 = vpop.f32.mrb[0].mxu0
      %v2349 = vadd.f32 0.0, %v2348
      %v2350 = vpop.f32.mrb[0].mxu0
      %v2351 = vpop.f32.mrb[0].mxu0
      %v2352 = vadd.f32 0.0, %v2351
      %v2353 = vpop.f32.mrb[0].mxu0
      %2354 = vmatprep.mubr.bf16.mxu0 0
      %2355 = vmatmul.mubr.bf16.gmra.mrb[0].mxu0 %v2300
      %v2356 = vpop.f32.mrb[0].mxu0
      %v2357 = vadd.f32 0.0, %v2356
      %v2358 = vpop.f32.mrb[0].mxu0
      %v2359 = vpop.f32.mrb[0].mxu0
      %v2360 = vadd.f32 0.0, %v2359
      %v2361 = vpop.f32.mrb[0].mxu0
      %2362 = vmatprep.mubr.bf16.mxu0 0
      %2363 = vmatmul.mubr.bf16.gmra.mrb[0].mxu0 %v2303
      %v2364 = vpop.f32.mrb[0].mxu0
      %v2365 = vadd.f32 0.0, %v2364
      %v2366 = vpop.f32.mrb[0].mxu0
      %v2367 = vpop.f32.mrb[0].mxu0
      %v2368 = vadd.f32 0.0, %v2367
      %v2369 = vpop.f32.mrb[0].mxu0
      %2370 = vmatprep.mubr.bf16.mxu0 0
      %2371 = vmatmul.mubr.bf16.gmra.mrb[0].mxu0 %v2306
      %v2372 = vpop.f32.mrb[0].mxu0
      %v2373 = vadd.f32 0.0, %v2372
      %v2374 = vpop.f32.mrb[0].mxu0
      %v2375 = vpop.f32.mrb[0].mxu0
      %v2376 = vadd.f32 0.0, %v2375
      %v2377 = vpop.f32.mrb[0].mxu0
      %2378 = vmatprep.mubr.bf16.mxu0 0
      %2379 = vmatmul.mubr.bf16.gmra.mrb[0].mxu0 %v2309
      %v2380 = vpop.f32.mrb[0].mxu0
      %v2381 = vadd.f32 0.0, %v2380
      %v2382 = vpop.f32.mrb[0].mxu0
      %v2383 = vpop.f32.mrb[0].mxu0
      %v2384 = vpop.f32.mrb[0].mxu0
      %2385 = vdwg.mxu0
      %v2386 = vadd.f32 %v2211, %v2349
      %v2387 = vadd.f32 %v2212, %v2352
      %v2388 = vadd.f32 %v2213, %v2357
      %v2389 = vadd.f32 %v2214, %v2360
      %v2390 = vadd.f32 %v2215, %v2365
      %v2391 = vadd.f32 %v2216, %v2368
      %v2392 = vadd.f32 %v2217, %v2373
      %v2393 = vadd.f32 %v2218, %v2376
      %v2394 = vadd.f32 %v2219, %v2381
      %v2395 = vld [vmem:[%s848 + $0x4] sm:$0xe]
      %s2396 = scalar_lea.vmem %s1, 56
      %v2397 = vld [vmem:[%s2396] sm:$0xf]
      %v2399 = vunpack.c.l.b16 %v2395
      %v2400 = vpack.c.b16 %v2068, %v2399
      %v2401 = vrot.slane %v2400, 1
      %v2402 = vrot.slane %v2078, 1
      %v2403 = vsel %vm1822, %v2401, %v2402
      %v2404 = vrot.slane %v2079, 1
      %v2405 = vsel %vm1822, %v2402, %v2404
      %v2406 = vrot.slane %v2080, 1
      %v2407 = vsel %vm1822, %v2404, %v2406
      %v2408 = vrot.slane %v2081, 1
      %v2409 = vsel %vm1822, %v2406, %v2408
      %v2411 = vsel %vm292, %v2403, 0
      %v2414 = vsel %vm292, %v2405, 0
      %v2417 = vsel %vm292, %v2407, 0
      %v2420 = vsel %vm292, %v2409, 0
      %v2423 = vsel %vm292, %v2408, 0
      %v2426 = vsel %vm308, %v2397, 0
      %2428 = vmatprep.subr.bf16.mxu0 0
      %2429 = vmatpush1.bf16.msra.mxu0 %v2426
      %2430 = vmatprep.subr.bf16.mxu0 0
      %2431 = vmatpush1.bf16.msra.mxu0 0
      %2432 = vmatprep.subr.bf16.mxu0 0
      %2433 = vmatpush1.bf16.msra.mxu0 0
      %2434 = vmatprep.subr.bf16.mxu0 0
      %2435 = vmatpush1.bf16.msra.mxu0 0
      %2436 = vmatprep.subr.bf16.mxu0 0
      %2437 = vmatpush1.bf16.msra.mxu0 0
      %2438 = vmatprep.subr.bf16.mxu0 0
      %2439 = vmatpush1.bf16.msra.mxu0 0
      %2440 = vmatprep.subr.bf16.mxu0 0
      %2441 = vmatpush1.bf16.msra.mxu0 0
      %2442 = vmatprep.subr.bf16.mxu0 0
      %2443 = vmatpush1.bf16.msra.mxu0 0
      %2444 = vmatprep.subr.bf16.mxu0 0
      %2445 = vmatpush1.bf16.msra.mxu0 0
      %2446 = vmatprep.subr.bf16.mxu0 0
      %2447 = vmatpush1.bf16.msra.mxu0 0
      %2448 = vmatprep.subr.bf16.mxu0 0
      %2449 = vmatpush1.bf16.msra.mxu0 0
      %2450 = vmatprep.subr.bf16.mxu0 0
      %2451 = vmatpush1.bf16.msra.mxu0 0
      %2452 = vmatprep.subr.bf16.mxu0 0
      %2453 = vmatpush1.bf16.msra.mxu0 0
      %2454 = vmatprep.subr.bf16.mxu0 0
      %2455 = vmatpush1.bf16.msra.mxu0 0
      %2456 = vmatprep.subr.bf16.mxu0 0
      %2457 = vmatpush1.bf16.msra.mxu0 0
      %2458 = vmatprep.subr.bf16.mxu0 0
      %2459 = vmatpush1.bf16.msra.mxu0 0
      %2460 = vmatprep.mubr.bf16.mxu0 0
      %2461 = vmatmul.mubr.bf16.gmra.mrb[0].mxu0 %v2411
      %v2462 = vpop.f32.mrb[0].mxu0
      %v2463 = vadd.f32 0.0, %v2462
      %v2464 = vpop.f32.mrb[0].mxu0
      %v2465 = vpop.f32.mrb[0].mxu0
      %v2466 = vadd.f32 0.0, %v2465
      %v2467 = vpop.f32.mrb[0].mxu0
      %2468 = vmatprep.mubr.bf16.mxu0 0
      %2469 = vmatmul.mubr.bf16.gmra.mrb[0].mxu0 %v2414
      %v2470 = vpop.f32.mrb[0].mxu0
      %v2471 = vadd.f32 0.0, %v2470
      %v2472 = vpop.f32.mrb[0].mxu0
      %v2473 = vpop.f32.mrb[0].mxu0
      %v2474 = vadd.f32 0.0, %v2473
      %v2475 = vpop.f32.mrb[0].mxu0
      %2476 = vmatprep.mubr.bf16.mxu0 0
      %2477 = vmatmul.mubr.bf16.gmra.mrb[0].mxu0 %v2417
      %v2478 = vpop.f32.mrb[0].mxu0
      %v2479 = vadd.f32 0.0, %v2478
      %v2480 = vpop.f32.mrb[0].mxu0
      %v2481 = vpop.f32.mrb[0].mxu0
      %v2482 = vadd.f32 0.0, %v2481
      %v2483 = vpop.f32.mrb[0].mxu0
      %2484 = vmatprep.mubr.bf16.mxu0 0
      %2485 = vmatmul.mubr.bf16.gmra.mrb[0].mxu0 %v2420
      %v2486 = vpop.f32.mrb[0].mxu0
      %v2487 = vadd.f32 0.0, %v2486
      %v2488 = vpop.f32.mrb[0].mxu0
      %v2489 = vpop.f32.mrb[0].mxu0
      %v2490 = vadd.f32 0.0, %v2489
      %v2491 = vpop.f32.mrb[0].mxu0
      %2492 = vmatprep.mubr.bf16.mxu0 0
      %2493 = vmatmul.mubr.bf16.gmra.mrb[0].mxu0 %v2423
      %v2494 = vpop.f32.mrb[0].mxu0
      %v2495 = vadd.f32 0.0, %v2494
      %v2496 = vpop.f32.mrb[0].mxu0
      %v2497 = vpop.f32.mrb[0].mxu0
      %v2498 = vpop.f32.mrb[0].mxu0
      %2499 = vdwg.mxu0
      %v2500 = vadd.f32 %v2386, %v2463
      %v2501 = vadd.f32 %v2387, %v2466
      %v2502 = vadd.f32 %v2388, %v2471
      %v2503 = vadd.f32 %v2389, %v2474
      %v2504 = vadd.f32 %v2390, %v2479
      %v2505 = vadd.f32 %v2391, %v2482
      %v2506 = vadd.f32 %v2392, %v2487
      %v2507 = vadd.f32 %v2393, %v2490
      %v2508 = vadd.f32 %v2394, %v2495
      %v2509 = vld [vmem:[%s982 + $0x4] sm:$0xe]
      %s2510 = scalar_lea.vmem %s1, 60
      %v2511 = vld [vmem:[%s2510] sm:$0xf]
      %v2513 = vunpack.c.l.b16 %v2509
      %v2514 = vpack.c.b16 %v2243, %v2513
      %v2515 = vrot.slane %v2514, 1
      %v2516 = vrot.slane %v2253, 1
      %v2517 = vsel %vm1822, %v2515, %v2516
      %v2518 = vrot.slane %v2254, 1
      %v2519 = vsel %vm1822, %v2516, %v2518
      %v2520 = vrot.slane %v2255, 1
      %v2521 = vsel %vm1822, %v2518, %v2520
      %v2522 = vrot.slane %v2256, 1
      %v2523 = vsel %vm1822, %v2520, %v2522
      %v2525 = vsel %vm292, %v2517, 0
      %v2528 = vsel %vm292, %v2519, 0
      %v2531 = vsel %vm292, %v2521, 0
      %v2534 = vsel %vm292, %v2523, 0
      %v2537 = vsel %vm292, %v2522, 0
      %v2540 = vsel %vm308, %v2511, 0
      %2542 = vmatprep.subr.bf16.mxu0 0
      %2543 = vmatpush1.bf16.msra.mxu0 %v2540
      %2544 = vmatprep.subr.bf16.mxu0 0
      %2545 = vmatpush1.bf16.msra.mxu0 0
      %2546 = vmatprep.subr.bf16.mxu0 0
      %2547 = vmatpush1.bf16.msra.mxu0 0
      %2548 = vmatprep.subr.bf16.mxu0 0
      %2549 = vmatpush1.bf16.msra.mxu0 0
      %2550 = vmatprep.subr.bf16.mxu0 0
      %2551 = vmatpush1.bf16.msra.mxu0 0
      %2552 = vmatprep.subr.bf16.mxu0 0
      %2553 = vmatpush1.bf16.msra.mxu0 0
      %2554 = vmatprep.subr.bf16.mxu0 0
      %2555 = vmatpush1.bf16.msra.mxu0 0
      %2556 = vmatprep.subr.bf16.mxu0 0
      %2557 = vmatpush1.bf16.msra.mxu0 0
      %2558 = vmatprep.subr.bf16.mxu0 0
      %2559 = vmatpush1.bf16.msra.mxu0 0
      %2560 = vmatprep.subr.bf16.mxu0 0
      %2561 = vmatpush1.bf16.msra.mxu0 0
      %2562 = vmatprep.subr.bf16.mxu0 0
      %2563 = vmatpush1.bf16.msra.mxu0 0
      %2564 = vmatprep.subr.bf16.mxu0 0
      %2565 = vmatpush1.bf16.msra.mxu0 0
      %2566 = vmatprep.subr.bf16.mxu0 0
      %2567 = vmatpush1.bf16.msra.mxu0 0
      %2568 = vmatprep.subr.bf16.mxu0 0
      %2569 = vmatpush1.bf16.msra.mxu0 0
      %2570 = vmatprep.subr.bf16.mxu0 0
      %2571 = vmatpush1.bf16.msra.mxu0 0
      %2572 = vmatprep.subr.bf16.mxu0 0
      %2573 = vmatpush1.bf16.msra.mxu0 0
      %2574 = vmatprep.mubr.bf16.mxu0 0
      %2575 = vmatmul.mubr.bf16.gmra.mrb[0].mxu0 %v2525
      %v2576 = vpop.f32.mrb[0].mxu0
      %v2577 = vadd.f32 0.0, %v2576
      %v2578 = vpop.f32.mrb[0].mxu0
      %v2579 = vpop.f32.mrb[0].mxu0
      %v2580 = vadd.f32 0.0, %v2579
      %v2581 = vpop.f32.mrb[0].mxu0
      %2582 = vmatprep.mubr.bf16.mxu0 0
      %2583 = vmatmul.mubr.bf16.gmra.mrb[0].mxu0 %v2528
      %v2584 = vpop.f32.mrb[0].mxu0
      %v2585 = vadd.f32 0.0, %v2584
      %v2586 = vpop.f32.mrb[0].mxu0
      %v2587 = vpop.f32.mrb[0].mxu0
      %v2588 = vadd.f32 0.0, %v2587
      %v2589 = vpop.f32.mrb[0].mxu0
      %2590 = vmatprep.mubr.bf16.mxu0 0
      %2591 = vmatmul.mubr.bf16.gmra.mrb[0].mxu0 %v2531
      %v2592 = vpop.f32.mrb[0].mxu0
      %v2593 = vadd.f32 0.0, %v2592
      %v2594 = vpop.f32.mrb[0].mxu0
      %v2595 = vpop.f32.mrb[0].mxu0
      %v2596 = vadd.f32 0.0, %v2595
      %v2597 = vpop.f32.mrb[0].mxu0
      %2598 = vmatprep.mubr.bf16.mxu0 0
      %2599 = vmatmul.mubr.bf16.gmra.mrb[0].mxu0 %v2534
      %v2600 = vpop.f32.mrb[0].mxu0
      %v2601 = vadd.f32 0.0, %v2600
      %v2602 = vpop.f32.mrb[0].mxu0
      %v2603 = vpop.f32.mrb[0].mxu0
      %v2604 = vadd.f32 0.0, %v2603
      %v2605 = vpop.f32.mrb[0].mxu0
      %2606 = vmatprep.mubr.bf16.mxu0 0
      %2607 = vmatmul.mubr.bf16.gmra.mrb[0].mxu0 %v2537
      %v2608 = vpop.f32.mrb[0].mxu0
      %v2609 = vadd.f32 0.0, %v2608
      %v2610 = vpop.f32.mrb[0].mxu0
      %v2611 = vpop.f32.mrb[0].mxu0
      %v2612 = vpop.f32.mrb[0].mxu0
      %2613 = vdwg.mxu0
      %v2614 = vadd.f32 %v2500, %v2577
      %v2615 = vadd.f32 %v2501, %v2580
      %v2616 = vadd.f32 %v2502, %v2585
      %v2617 = vadd.f32 %v2503, %v2588
      %v2618 = vadd.f32 %v2504, %v2593
      %v2619 = vadd.f32 %v2505, %v2596
      %v2620 = vadd.f32 %v2506, %v2601
      %v2621 = vadd.f32 %v2507, %v2604
      %v2622 = vadd.f32 %v2508, %v2609
      %v2623 = vld [vmem:[%s2] sm:$0xff]
      %v2624 = vld [vmem:[%s2 + $0x8] sm:$0xff]
      %v2625 = vld [vmem:[%s2 + $0x10] sm:$0xff]
      %v2626 = vld [vmem:[%s2 + $0x18] sm:$0xff]
      %v2627 = vld [vmem:[%s2 + $0x20] sm:$0xff]
      %v2628 = vld [vmem:[%s2 + $0x28] sm:$0xff]
      %v2629 = vld [vmem:[%s2 + $0x30] sm:$0xff]
      %v2630 = vld [vmem:[%s2 + $0x38] sm:$0xff]
      %v2631 = vld [vmem:[%s2 + $0x40] sm:$0xff]
      %2633 = vset.pattern.permute.xlu0 0
      %2634 = vperm.xlu0 %2633, %v2623
      %v2635 = vpop.permute.xlu0 %2634
      %2638 = vset.pattern.permute.xlu0 0
      %2639 = vperm.xlu0 %2638, %v2624
      %v2640 = vpop.permute.xlu0 %2639
      %2643 = vset.pattern.permute.xlu0 0
      %2644 = vperm.xlu0 %2643, %v2625
      %v2645 = vpop.permute.xlu0 %2644
      %2648 = vset.pattern.permute.xlu0 0
      %2649 = vperm.xlu0 %2648, %v2626
      %v2650 = vpop.permute.xlu0 %2649
      %2653 = vset.pattern.permute.xlu0 0
      %2654 = vperm.xlu0 %2653, %v2627
      %v2655 = vpop.permute.xlu0 %2654
      %2658 = vset.pattern.permute.xlu0 0
      %2659 = vperm.xlu0 %2658, %v2628
      %v2660 = vpop.permute.xlu0 %2659
      %2663 = vset.pattern.permute.xlu0 0
      %2664 = vperm.xlu0 %2663, %v2629
      %v2665 = vpop.permute.xlu0 %2664
      %2668 = vset.pattern.permute.xlu0 0
      %2669 = vperm.xlu0 %2668, %v2630
      %v2670 = vpop.permute.xlu0 %2669
      %2673 = vset.pattern.permute.xlu0 0
      %2674 = vperm.xlu0 %2673, %v2631
      %v2675 = vpop.permute.xlu0 %2674
      %v2677 = vmul.f32 %v2614, %v2635
      %v2678 = vmul.f32 %v2615, %v2640
      %v2679 = vmul.f32 %v2616, %v2645
      %v2680 = vmul.f32 %v2617, %v2650
      %v2681 = vmul.f32 %v2618, %v2655
      %v2682 = vmul.f32 %v2619, %v2660
      %v2683 = vmul.f32 %v2620, %v2665
      %v2684 = vmul.f32 %v2621, %v2670
      %v2685 = vmul.f32 %v2622, %v2675
      %v2686 = vpack.c.bf16 %v2678, %v2677
      %v2687 = vpack.c.bf16 %v2680, %v2679
      %v2688 = vpack.c.bf16 %v2682, %v2681
      %v2689 = vpack.c.bf16 %v2684, %v2683
      %v2690 = vpack.c.bf16 %v2685, %v2685
      %v2696 = vunpack.c.l.b16 %v2686
      %v2697 = vunpack.c.h.b16 %v2686
      %v2698 = vunpack.c.l.b16 %v2687
      %v2699 = vunpack.c.h.b16 %v2687
      %v2700 = vunpack.c.l.b16 %v2688
      %v2701 = vunpack.c.h.b16 %v2688
      %v2702 = vunpack.c.l.b16 %v2689
      %v2703 = vunpack.c.h.b16 %v2689
      %v2704 = vunpack.c.l.b16 %v2690
      %v2705 = vpack.c.b16 %v2696, %v2696
      %v2706 = vpack.c.b16 %v2697, %v2697
      %v2707 = vpack.c.b16 %v2698, %v2698
      %v2708 = vpack.c.b16 %v2699, %v2699
      %v2709 = vpack.c.b16 %v2700, %v2700
      %v2710 = vpack.c.b16 %v2701, %v2701
      %v2711 = vpack.c.b16 %v2702, %v2702
      %v2712 = vpack.c.b16 %v2703, %v2703
      %v2713 = vpack.c.b16 %v2704, %v2704
      %2723 = vst [vmem:[%s237] sm:$0xf] %v2705
      %2724 = vst [vmem:[%s237 + $0x4] sm:$0xf] %v2706
      %2725 = vst [vmem:[%s237 + $0x8] sm:$0xf] %v2707
      %2726 = vst [vmem:[%s237 + $0xc] sm:$0xf] %v2708
      %2727 = vst [vmem:[%s237 + $0x10] sm:$0xf] %v2709
      %2728 = vst [vmem:[%s237 + $0x14] sm:$0xf] %v2710
      %2729 = vst [vmem:[%s237 + $0x18] sm:$0xf] %v2711
      %2730 = vst [vmem:[%s237 + $0x1c] sm:$0xf] %v2712
      %2731 = vst [vmem:[%s237 + $0x20] sm:$0xf] %v2713
      %v2732 = vadd.f32 %v2677, %v2678
      %v2733 = vadd.f32 %v2732, %v2679
      %v2734 = vadd.f32 %v2733, %v2680
      %v2735 = vadd.f32 %v2734, %v2681
      %v2736 = vadd.f32 %v2735, %v2682
      %v2737 = vadd.f32 %v2736, %v2683
      %v2738 = vadd.f32 %v2737, %v2684
      %v2739 = vadd.f32 %v2738, %v2685
      %v2740 = vrot.slane %v2739, 4
      %v2741 = vadd.f32 %v2739, %v2740
      %v2742 = vrot.slane %v2741, 2
      %v2743 = vadd.f32 %v2741, %v2742
      %v2744 = vrot.slane %v2743, 1
      %v2745 = vadd.f32 %v2743, %v2744
      %v2746 = vmul.f32 %v2677, %v2677
      %v2747 = vmul.f32 %v2678, %v2678
      %v2748 = vmul.f32 %v2679, %v2679
      %v2749 = vmul.f32 %v2680, %v2680
      %v2750 = vmul.f32 %v2681, %v2681
      %v2751 = vmul.f32 %v2682, %v2682
      %v2752 = vmul.f32 %v2683, %v2683
      %v2753 = vmul.f32 %v2684, %v2684
      %v2754 = vmul.f32 %v2685, %v2685
      %v2755 = vadd.f32 %v2746, %v2747
      %v2756 = vadd.f32 %v2755, %v2748
      %v2757 = vadd.f32 %v2756, %v2749
      %v2758 = vadd.f32 %v2757, %v2750
      %v2759 = vadd.f32 %v2758, %v2751
      %v2760 = vadd.f32 %v2759, %v2752
      %v2761 = vadd.f32 %v2760, %v2753
      %v2762 = vadd.f32 %v2761, %v2754
      %v2763 = vrot.slane %v2762, 4
      %v2764 = vadd.f32 %v2762, %v2763
      %v2765 = vrot.slane %v2764, 2
      %v2766 = vadd.f32 %v2764, %v2765
      %v2767 = vrot.slane %v2766, 1
      %v2768 = vadd.f32 %v2766, %v2767
      %2769 = vst [vmem:[%s241] sm:$0xff] %v2745
      %2770 = vst [vmem:[%s245] sm:$0xff] %v2768
      %p2771 = scmp.lt.s32.totalorder %s17, 1
      %s2772 = scalar_select %p2771, %s17, 1
      %s2773 = smul.addr %s2772, 9
      %s2774 = smul.addr %s2773, 4
      %s2775 = scalar_lea.vmem %s3, %s2774
      %p2776 = scmp.lt.s32.totalorder %s17, 1
      %s2777 = scalar_select %p2776, %s17, 1
      %s2778 = smul.addr %s2777, 8
      %s2779 = scalar_lea.vmem %s4, %s2778
      %p2780 = scmp.lt.s32.totalorder %s17, 1
      %s2781 = scalar_select %p2780, %s17, 1
      %s2782 = smul.addr %s2781, 8
      %s2783 = scalar_lea.vmem %s5, %s2782
      // Predicated region
      $region33: #{dcgan_conv_forward.2} parent=31 // pred_check
        %p2784 = pneg %p103
      $region34: #{dcgan_conv_forward.2} parent=31 // pred_check_branch
        %2786 = sbr.rel (%p2784) target = $region36
      $region35: #{dcgan_conv_forward.2} parent=31 // pred_region
        _
      $region36: #{dcgan_conv_forward.2} parent=31 // pred_fallthru
        _
      // Predicated region
      $region37: #{dcgan_conv_forward.2} parent=31 // pred_check
        %p2787 = pneg %p129
      $region38: #{dcgan_conv_forward.2} parent=31 // pred_check_branch
        %2789 = sbr.rel (%p2787) target = $region40
      $region39: #{dcgan_conv_forward.2} parent=31 // pred_region
        _
      $region40: #{dcgan_conv_forward.2} parent=31 // pred_fallthru
        _
      // Predicated region
      $region41: #{dcgan_conv_forward.2} parent=31 // pred_check
        %p2790 = pneg %p155
      $region42: #{dcgan_conv_forward.2} parent=31 // pred_check_branch
        %2792 = sbr.rel (%p2790) target = $region44
      $region43: #{dcgan_conv_forward.2} parent=31 // pred_region
        _
      $region44: #{dcgan_conv_forward.2} parent=31 // pred_fallthru
        _
    $region32: #{dcgan_conv_forward.2} parent=5 // pred_fallthru
      _
    %p2793 = scmp.le.s32.totalorder 2, %s12
    // Predicated region
    $region45: #{dcgan_conv_forward.2} parent=5 // pred_check
      %p2794 = pneg %p2793
    $region46: #{dcgan_conv_forward.2} parent=5 // pred_check_branch
      %2796 = sbr.rel (%p2794) target = $region48
    $region47: #{dcgan_conv_forward.2} parent=5 // pred_region
      %s2797 = ssub.s32 %s12, 2
      // Predicated region
      $region49: #{dcgan_conv_forward.2} parent=47 // pred_check
        %p2798 = pneg %p109
      $region50: #{dcgan_conv_forward.2} parent=47 // pred_check_branch
        %2800 = sbr.rel (%p2798) target = $region52
      $region51: #{dcgan_conv_forward.2} parent=47 // pred_region
        %p2801 = scmp.lt.s32.totalorder %s18, 1
        %s2802 = scalar_select %p2801, %s18, 1
        %s2803 = smul.addr %s2802, 9
        %s2804 = smul.addr %s2803, 4
        %s2805 = scalar_lea.vmem %s3, %s2804
      $region52: #{dcgan_conv_forward.2} parent=47 // pred_fallthru
        _
      // Predicated region
      $region53: #{dcgan_conv_forward.2} parent=47 // pred_check
        %p2806 = pneg %p135
      $region54: #{dcgan_conv_forward.2} parent=47 // pred_check_branch
        %2808 = sbr.rel (%p2806) target = $region56
      $region55: #{dcgan_conv_forward.2} parent=47 // pred_region
        %p2809 = scmp.lt.s32.totalorder %s18, 1
        %s2810 = scalar_select %p2809, %s18, 1
        %s2811 = smul.addr %s2810, 8
        %s2812 = scalar_lea.vmem %s4, %s2811
      $region56: #{dcgan_conv_forward.2} parent=47 // pred_fallthru
        _
      // Predicated region
      $region57: #{dcgan_conv_forward.2} parent=47 // pred_check
        %p2813 = pneg %p161
      $region58: #{dcgan_conv_forward.2} parent=47 // pred_check_branch
        %2815 = sbr.rel (%p2813) target = $region60
      $region59: #{dcgan_conv_forward.2} parent=47 // pred_region
        %p2816 = scmp.lt.s32.totalorder %s18, 1
        %s2817 = scalar_select %p2816, %s18, 1
        %s2818 = smul.addr %s2817, 8
        %s2819 = scalar_lea.vmem %s5, %s2818
      $region60: #{dcgan_conv_forward.2} parent=47 // pred_fallthru
        _
    $region48: #{dcgan_conv_forward.2} parent=5 // pred_fallthru
      _
  $region6: #{dcgan_conv_forward.2} parent=0 // loop_footer
    %s16 = sadd.s32 1, %s12
  $region7: #{dcgan_conv_forward.2} parent=0 // loop_footer_branch
    %11 = sbr.rel target = $region3
  $region8: #{dcgan_conv_forward.2} parent=0 // loop_exit
    _

</llo_original>
